<compile_context>
chip_gen: v5e
topology: v5e:2x2
jax: 0.10.0
libtpu: 0.0.40
codegen_flags: <defaults>
</compile_context>

<pallas_src>
import functools

import jax
import jax.numpy as jnp
from jax import lax
from jax.experimental import pallas as pl
from jax.experimental.pallas import tpu as pltpu


def _round_up(x, m):
    return (x + m - 1) // m * m


# ---------------------------------------------------------------------------
# Fused kernel: conv (as KH*KW shifted matmuls) + batch stats + BN + activation
# ---------------------------------------------------------------------------
def _fused_conv_bn_act_kernel(x_ref, w_ref, g_ref, b_ref, m_ref, o_ref, *,
                              KH, KW, Wp, HpWp, stride, dilation,
                              TP, num_t, inv_count, eps, sigmoid):
    # x_ref : (Rx, CinP)           flattened zero-padded NHWC input (resident)
    # w_ref : (KH*KW, CinP, CoutP) per-tap weights (resident)
    # g_ref : (1, CoutP)           BN gamma, zero-padded
    # b_ref : (1, CoutP)           BN beta,  zero-padded
    # m_ref : (N*PT, 1)            1.0 for valid output positions, else 0.0
    # o_ref : (N*PT, CoutP)        resident output block, written to HBM once
    n = pl.program_id(0)
    t = pl.program_id(1)
    cout_p = o_ref.shape[1]

    base = n * HpWp + t * TP * stride
    acc = jnp.zeros((TP, cout_p), jnp.float32)
    for kh in range(KH):
        for kw in range(KW):
            off = base + kh * dilation * Wp + kw * dilation
            if stride == 1:
                a = x_ref[pl.ds(off, TP), :]                      # (TP, CinP)
            else:
                # TODO(synk): stride>1 uses a strided sublane read; untested.
                a = x_ref[pl.ds(off, TP, stride=stride), :]
            acc = acc + jnp.dot(a, w_ref[kh * KW + kw],
                                preferred_element_type=jnp.float32)

    row0 = pl.multiple_of((n * num_t + t) * TP, 8)
    o_ref[pl.ds(row0, TP), :] = acc

    # Finalize on the very last grid step: batch statistics over the valid
    # positions of the resident conv output, then BN affine + activation.
    is_last = jnp.logical_and(n == pl.num_programs(0) - 1,
                              t == pl.num_programs(1) - 1)

    @pl.when(is_last)
    def _():
        y = o_ref[...]                                   # (N*PT, CoutP) f32
        m = m_ref[...]                                   # (N*PT, 1)
        mean = jnp.sum(y * m, axis=0, keepdims=True) * inv_count
        d = (y - mean) * m
        var = jnp.sum(d * d, axis=0, keepdims=True) * inv_count
        inv = lax.rsqrt(var + eps)
        scale = g_ref[...] * inv
        shift = b_ref[...] - mean * scale
        z = y * scale + shift
        if sigmoid:
            o_ref[...] = jax.nn.sigmoid(z)
        else:
            o_ref[...] = jnp.maximum(z, 0.0)


def conv_bn_relu_pallas(x_nhwc, weight, bias, gamma, beta, *, stride, padding,
                        dilation=1, sigmoid=False, eps=1e-5, tile_rows=1024):
    """x_nhwc: (N,H,W,Cin) f32.  weight: (Cout,Cin,KH,KW) (PyTorch layout).
    Returns NHWC output (N, OH, OW, Cout)."""
    N, H, W, Cin = x_nhwc.shape
    Cout, Cin_w, KH, KW = weight.shape
    assert Cin == Cin_w
    assert stride >= 1 and dilation >= 1 and padding >= 0
    # Conv bias cancels exactly under training-mode BatchNorm (mean subtraction),
    # so it is dropped from the kernel (saves an add and an input DMA).
    del bias

    OH = (H + 2 * padding - dilation * (KH - 1) - 1) // stride + 1
    OW = (W + 2 * padding - dilation * (KW - 1) - 1) // stride + 1
    Hp, Wp = H + 2 * padding, W + 2 * padding

    CinP = _round_up(Cin, 8)         # sublane-aligned contraction per tap
    CoutP = _round_up(Cout, 128)     # lane-dense output / MXU width

    # Flat output positions per image: p = oh*Wp + ow (ow in [0, Wp)).  The
    # KW-1 extra columns per row are "garbage" positions that are masked out
    # of the BN statistics and sliced away at the end (1D-conv flattening).
    Pimg = OH * Wp
    TP = min(_round_up(tile_rows, 8), _round_up(Pimg, 8))
    num_t = -(-Pimg // TP)
    PT = num_t * TP
    NPT = N * PT

    # ---- wrapper glue: cheap pads / reshapes only (no im2col blow-up) ----
    xp = jnp.pad(x_nhwc.astype(jnp.float32),
                 ((0, 0), (padding, padding), (padding, padding),
                  (0, CinP - Cin)))                       # (N, Hp, Wp, CinP)
    xflat = xp.reshape(N * Hp * Wp, CinP)
    rows_needed = ((N - 1) * Hp * Wp + stride * (PT - 1)
                   + (KH - 1) * dilation * Wp + (KW - 1) * dilation + 1)
    Rx = _round_up(max(rows_needed, N * Hp * Wp), 8)
    xflat = jnp.pad(xflat, ((0, Rx - N * Hp * Wp), (0, 0)))

    wk = jnp.transpose(weight.astype(jnp.float32), (2, 3, 1, 0))  # (KH,KW,Cin,Cout)
    wk = wk.reshape(KH * KW, Cin, Cout)
    wk = jnp.pad(wk, ((0, 0), (0, CinP - Cin), (0, CoutP - Cout)))

    g = jnp.pad(gamma.astype(jnp.float32), (0, CoutP - Cout)).reshape(1, CoutP)
    b = jnp.pad(beta.astype(jnp.float32), (0, CoutP - Cout)).reshape(1, CoutP)

    p_idx = jnp.arange(PT)
    valid = (p_idx < Pimg) & ((p_idx % Wp) < OW)
    mask = jnp.tile(valid.astype(jnp.float32), N).reshape(NPT, 1)

    count = N * OH * OW
    kernel = functools.partial(
        _fused_conv_bn_act_kernel,
        KH=KH, KW=KW, Wp=Wp, HpWp=Hp * Wp, stride=stride, dilation=dilation,
        TP=TP, num_t=num_t, inv_count=1.0 / count, eps=eps, sigmoid=sigmoid)

    out = pl.pallas_call(
        kernel,
        out_shape=jax.ShapeDtypeStruct((NPT, CoutP), jnp.float32),
        grid=(N, num_t),
        in_specs=[
            pl.BlockSpec((Rx, CinP), lambda n, t: (0, 0)),
            pl.BlockSpec((KH * KW, CinP, CoutP), lambda n, t: (0, 0, 0)),
            pl.BlockSpec((1, CoutP), lambda n, t: (0, 0)),
            pl.BlockSpec((1, CoutP), lambda n, t: (0, 0)),
            pl.BlockSpec((NPT, 1), lambda n, t: (0, 0)),
        ],
        out_specs=pl.BlockSpec((NPT, CoutP), lambda n, t: (0, 0)),
        compiler_params=pltpu.CompilerParams(
            dimension_semantics=("arbitrary", "arbitrary")),
    )(xflat, wk, g, b, mask)

    # Strip garbage columns / tail positions and the channel padding.
    out = out.reshape(N, PT, CoutP)[:, :Pimg, :].reshape(N, OH, Wp, CoutP)
    return out[:, :, :OW, :Cout]


# ---------------------------------------------------------------------------
# Pure-JAX reference (same semantics, bias included) for correctness checking
# ---------------------------------------------------------------------------
def conv_bn_relu_ref(x_nhwc, weight, bias, gamma, beta, *, stride, padding,
                     dilation=1, sigmoid=False, eps=1e-5):
    w_hwio = jnp.transpose(weight, (2, 3, 1, 0)).astype(jnp.float32)
    y = lax.conv_general_dilated(
        x_nhwc.astype(jnp.float32), w_hwio,
        window_strides=(stride, stride),
        padding=[(padding, padding), (padding, padding)],
        rhs_dilation=(dilation, dilation),
        dimension_numbers=("NHWC", "HWIO", "NHWC"))
    y = y + bias.reshape(1, 1, 1, -1)
    mean = jnp.mean(y, axis=(0, 1, 2))
    var = jnp.mean((y - mean) ** 2, axis=(0, 1, 2))
    yhat = (y - mean) * lax.rsqrt(var + eps) * gamma + beta
    return jax.nn.sigmoid(yhat) if sigmoid else jnp.maximum(yhat, 0.0)


if __name__ == "__main__":
    # module config: _conv_bn_relu(in_channels=4, out_channels=8,
    #                              kernel_size=3, stride=1, padding=1)
    N, Cin, H, W = 2, 4, 16, 16
    Cout, KS, STRIDE, PAD = 8, 3, 1, 1

    key = jax.random.PRNGKey(0)
    kx, kw_, kb = jax.random.split(key, 3)

    # Deterministic parameter init (shapes match nn.Conv2d / nn.BatchNorm2d).
    fan_in = Cin * KS * KS
    bound = 1.0 / (fan_in ** 0.5)
    weight = jax.random.uniform(kw_, (Cout, Cin, KS, KS),
                                minval=-bound, maxval=bound, dtype=jnp.float32)
    bias = jax.random.uniform(kb, (Cout,), minval=-bound, maxval=bound,
                              dtype=jnp.float32)
    gamma = jnp.ones((Cout,), jnp.float32)    # BatchNorm2d default weight
    beta = jnp.zeros((Cout,), jnp.float32)    # BatchNorm2d default bias

    x_nchw = jax.random.normal(kx, (N, Cin, H, W), dtype=jnp.float32)
    x_nhwc = jnp.transpose(x_nchw, (0, 2, 3, 1))

    out_nhwc = conv_bn_relu_pallas(x_nhwc, weight, bias, gamma, beta,
                                   stride=STRIDE, padding=PAD, dilation=1,
                                   sigmoid=False)
    out_nhwc = jax.block_until_ready(out_nhwc)
    out_nchw = jnp.transpose(out_nhwc, (0, 3, 1, 2))   # back to PyTorch layout

    ref = conv_bn_relu_ref(x_nhwc, weight, bias, gamma, beta,
                           stride=STRIDE, padding=PAD, dilation=1, sigmoid=False)
    assert out_nchw.shape == (N, Cout, H, W)
    err = float(jnp.max(jnp.abs(out_nhwc - ref)))
    assert err < 2e-4, f"mismatch vs reference: max abs err = {err}"

    print("KERNEL_OK")
</pallas_src>

<mosaic_0001>
module attributes {stable_mosaic.version = 11 : i64} {
  func.func @_fused_conv_bn_act_kernel(%arg0: i32, %arg1: i32, %arg2: memref<656x8xf32, #tpu.memory_space<vmem>>, %arg3: memref<9x8x128xf32, #tpu.memory_space<vmem>>, %arg4: memref<1x128xf32, #tpu.memory_space<vmem>>, %arg5: memref<1x128xf32, #tpu.memory_space<vmem>>, %arg6: memref<576x1xf32, #tpu.memory_space<vmem>>, %arg7: memref<576x128xf32, #tpu.memory_space<vmem>>) attributes {dimension_semantics = [#tpu.dimension_semantics<arbitrary>, #tpu.dimension_semantics<arbitrary>], iteration_bounds = array<i64: 2, 1>, scalar_prefetch = 0 : i64, scratch_operands = 0 : i64, tpu.core_type = #tpu.core_type<tc>, window_params = [{pipeline_mode = #tpu.pipeline_mode<synchronous>, transform_indices = @transform_0, window_bounds = array<i64: 656, 8>}, {pipeline_mode = #tpu.pipeline_mode<synchronous>, transform_indices = @transform_1, window_bounds = array<i64: 9, 8, 128>}, {pipeline_mode = #tpu.pipeline_mode<synchronous>, transform_indices = @transform_2, window_bounds = array<i64: 1, 128>}, {pipeline_mode = #tpu.pipeline_mode<synchronous>, transform_indices = @transform_3, window_bounds = array<i64: 1, 128>}, {pipeline_mode = #tpu.pipeline_mode<synchronous>, transform_indices = @transform_4, window_bounds = array<i64: 576, 1>}, {pipeline_mode = #tpu.pipeline_mode<synchronous>, transform_indices = @transform_5, window_bounds = array<i64: 576, 128>}]} {
    %c324_i32 = arith.constant 324 : i32
    %0 = arith.muli %arg0, %c324_i32 : i32
    %c288_i32 = arith.constant 288 : i32
    %1 = arith.muli %arg1, %c288_i32 : i32
    %c1_i32 = arith.constant 1 : i32
    %2 = arith.muli %1, %c1_i32 : i32
    %3 = arith.addi %0, %2 : i32
    %cst = arith.constant 0.000000e+00 : f32
    %4 = vector.broadcast %cst : f32 to vector<288x128xf32>
    %c0_i32 = arith.constant 0 : i32
    %5 = arith.addi %3, %c0_i32 : i32
    %c0_i32_0 = arith.constant 0 : i32
    %6 = arith.addi %5, %c0_i32_0 : i32
    %7 = arith.index_cast %6 : i32 to index
    %c0 = arith.constant 0 : index
    %8 = vector.load %arg2[%7, %c0] : memref<656x8xf32, #tpu.memory_space<vmem>>, vector<288x8xf32>
    %c0_1 = arith.constant 0 : index
    %c0_2 = arith.constant 0 : index
    %c0_3 = arith.constant 0 : index
    %9 = vector.load %arg3[%c0_1, %c0_2, %c0_3] : memref<9x8x128xf32, #tpu.memory_space<vmem>>, vector<1x8x128xf32>
    %10 = vector.shape_cast %9 : vector<1x8x128xf32> to vector<8x128xf32>
    %cst_4 = arith.constant dense<0.000000e+00> : vector<288x128xf32>
    %11 = tpu.matmul %8, %10, %cst_4 {dimension_numbers = #tpu.dot_dimension_numbers<[1], [0], [0], [1], [0, 0, 1, 1], [], []>} : vector<288x8xf32>, vector<8x128xf32>, vector<288x128xf32> -> vector<288x128xf32>
    %12 = arith.addf %4, %11 : vector<288x128xf32>
    %c0_i32_5 = arith.constant 0 : i32
    %13 = arith.addi %3, %c0_i32_5 : i32
    %c1_i32_6 = arith.constant 1 : i32
    %14 = arith.addi %13, %c1_i32_6 : i32
    %15 = arith.index_cast %14 : i32 to index
    %c0_7 = arith.constant 0 : index
    %16 = vector.load %arg2[%15, %c0_7] : memref<656x8xf32, #tpu.memory_space<vmem>>, vector<288x8xf32>
    %c1 = arith.constant 1 : index
    %c0_8 = arith.constant 0 : index
    %c0_9 = arith.constant 0 : index
    %17 = vector.load %arg3[%c1, %c0_8, %c0_9] : memref<9x8x128xf32, #tpu.memory_space<vmem>>, vector<1x8x128xf32>
    %18 = vector.shape_cast %17 : vector<1x8x128xf32> to vector<8x128xf32>
    %cst_10 = arith.constant dense<0.000000e+00> : vector<288x128xf32>
    %19 = tpu.matmul %16, %18, %cst_10 {dimension_numbers = #tpu.dot_dimension_numbers<[1], [0], [0], [1], [0, 0, 1, 1], [], []>} : vector<288x8xf32>, vector<8x128xf32>, vector<288x128xf32> -> vector<288x128xf32>
    %20 = arith.addf %12, %19 : vector<288x128xf32>
    %c0_i32_11 = arith.constant 0 : i32
    %21 = arith.addi %3, %c0_i32_11 : i32
    %c2_i32 = arith.constant 2 : i32
    %22 = arith.addi %21, %c2_i32 : i32
    %23 = arith.index_cast %22 : i32 to index
    %c0_12 = arith.constant 0 : index
    %24 = vector.load %arg2[%23, %c0_12] : memref<656x8xf32, #tpu.memory_space<vmem>>, vector<288x8xf32>
    %c2 = arith.constant 2 : index
    %c0_13 = arith.constant 0 : index
    %c0_14 = arith.constant 0 : index
    %25 = vector.load %arg3[%c2, %c0_13, %c0_14] : memref<9x8x128xf32, #tpu.memory_space<vmem>>, vector<1x8x128xf32>
    %26 = vector.shape_cast %25 : vector<1x8x128xf32> to vector<8x128xf32>
    %cst_15 = arith.constant dense<0.000000e+00> : vector<288x128xf32>
    %27 = tpu.matmul %24, %26, %cst_15 {dimension_numbers = #tpu.dot_dimension_numbers<[1], [0], [0], [1], [0, 0, 1, 1], [], []>} : vector<288x8xf32>, vector<8x128xf32>, vector<288x128xf32> -> vector<288x128xf32>
    %28 = arith.addf %20, %27 : vector<288x128xf32>
    %c18_i32 = arith.constant 18 : i32
    %29 = arith.addi %3, %c18_i32 : i32
    %c0_i32_16 = arith.constant 0 : i32
    %30 = arith.addi %29, %c0_i32_16 : i32
    %31 = arith.index_cast %30 : i32 to index
    %c0_17 = arith.constant 0 : index
    %32 = vector.load %arg2[%31, %c0_17] : memref<656x8xf32, #tpu.memory_space<vmem>>, vector<288x8xf32>
    %c3 = arith.constant 3 : index
    %c0_18 = arith.constant 0 : index
    %c0_19 = arith.constant 0 : index
    %33 = vector.load %arg3[%c3, %c0_18, %c0_19] : memref<9x8x128xf32, #tpu.memory_space<vmem>>, vector<1x8x128xf32>
    %34 = vector.shape_cast %33 : vector<1x8x128xf32> to vector<8x128xf32>
    %cst_20 = arith.constant dense<0.000000e+00> : vector<288x128xf32>
    %35 = tpu.matmul %32, %34, %cst_20 {dimension_numbers = #tpu.dot_dimension_numbers<[1], [0], [0], [1], [0, 0, 1, 1], [], []>} : vector<288x8xf32>, vector<8x128xf32>, vector<288x128xf32> -> vector<288x128xf32>
    %36 = arith.addf %28, %35 : vector<288x128xf32>
    %c18_i32_21 = arith.constant 18 : i32
    %37 = arith.addi %3, %c18_i32_21 : i32
    %c1_i32_22 = arith.constant 1 : i32
    %38 = arith.addi %37, %c1_i32_22 : i32
    %39 = arith.index_cast %38 : i32 to index
    %c0_23 = arith.constant 0 : index
    %40 = vector.load %arg2[%39, %c0_23] : memref<656x8xf32, #tpu.memory_space<vmem>>, vector<288x8xf32>
    %c4 = arith.constant 4 : index
    %c0_24 = arith.constant 0 : index
    %c0_25 = arith.constant 0 : index
    %41 = vector.load %arg3[%c4, %c0_24, %c0_25] : memref<9x8x128xf32, #tpu.memory_space<vmem>>, vector<1x8x128xf32>
    %42 = vector.shape_cast %41 : vector<1x8x128xf32> to vector<8x128xf32>
    %cst_26 = arith.constant dense<0.000000e+00> : vector<288x128xf32>
    %43 = tpu.matmul %40, %42, %cst_26 {dimension_numbers = #tpu.dot_dimension_numbers<[1], [0], [0], [1], [0, 0, 1, 1], [], []>} : vector<288x8xf32>, vector<8x128xf32>, vector<288x128xf32> -> vector<288x128xf32>
    %44 = arith.addf %36, %43 : vector<288x128xf32>
    %c18_i32_27 = arith.constant 18 : i32
    %45 = arith.addi %3, %c18_i32_27 : i32
    %c2_i32_28 = arith.constant 2 : i32
    %46 = arith.addi %45, %c2_i32_28 : i32
    %47 = arith.index_cast %46 : i32 to index
    %c0_29 = arith.constant 0 : index
    %48 = vector.load %arg2[%47, %c0_29] : memref<656x8xf32, #tpu.memory_space<vmem>>, vector<288x8xf32>
    %c5 = arith.constant 5 : index
    %c0_30 = arith.constant 0 : index
    %c0_31 = arith.constant 0 : index
    %49 = vector.load %arg3[%c5, %c0_30, %c0_31] : memref<9x8x128xf32, #tpu.memory_space<vmem>>, vector<1x8x128xf32>
    %50 = vector.shape_cast %49 : vector<1x8x128xf32> to vector<8x128xf32>
    %cst_32 = arith.constant dense<0.000000e+00> : vector<288x128xf32>
    %51 = tpu.matmul %48, %50, %cst_32 {dimension_numbers = #tpu.dot_dimension_numbers<[1], [0], [0], [1], [0, 0, 1, 1], [], []>} : vector<288x8xf32>, vector<8x128xf32>, vector<288x128xf32> -> vector<288x128xf32>
    %52 = arith.addf %44, %51 : vector<288x128xf32>
    %c36_i32 = arith.constant 36 : i32
    %53 = arith.addi %3, %c36_i32 : i32
    %c0_i32_33 = arith.constant 0 : i32
    %54 = arith.addi %53, %c0_i32_33 : i32
    %55 = arith.index_cast %54 : i32 to index
    %c0_34 = arith.constant 0 : index
    %56 = vector.load %arg2[%55, %c0_34] : memref<656x8xf32, #tpu.memory_space<vmem>>, vector<288x8xf32>
    %c6 = arith.constant 6 : index
    %c0_35 = arith.constant 0 : index
    %c0_36 = arith.constant 0 : index
    %57 = vector.load %arg3[%c6, %c0_35, %c0_36] : memref<9x8x128xf32, #tpu.memory_space<vmem>>, vector<1x8x128xf32>
    %58 = vector.shape_cast %57 : vector<1x8x128xf32> to vector<8x128xf32>
    %cst_37 = arith.constant dense<0.000000e+00> : vector<288x128xf32>
    %59 = tpu.matmul %56, %58, %cst_37 {dimension_numbers = #tpu.dot_dimension_numbers<[1], [0], [0], [1], [0, 0, 1, 1], [], []>} : vector<288x8xf32>, vector<8x128xf32>, vector<288x128xf32> -> vector<288x128xf32>
    %60 = arith.addf %52, %59 : vector<288x128xf32>
    %c36_i32_38 = arith.constant 36 : i32
    %61 = arith.addi %3, %c36_i32_38 : i32
    %c1_i32_39 = arith.constant 1 : i32
    %62 = arith.addi %61, %c1_i32_39 : i32
    %63 = arith.index_cast %62 : i32 to index
    %c0_40 = arith.constant 0 : index
    %64 = vector.load %arg2[%63, %c0_40] : memref<656x8xf32, #tpu.memory_space<vmem>>, vector<288x8xf32>
    %c7 = arith.constant 7 : index
    %c0_41 = arith.constant 0 : index
    %c0_42 = arith.constant 0 : index
    %65 = vector.load %arg3[%c7, %c0_41, %c0_42] : memref<9x8x128xf32, #tpu.memory_space<vmem>>, vector<1x8x128xf32>
    %66 = vector.shape_cast %65 : vector<1x8x128xf32> to vector<8x128xf32>
    %cst_43 = arith.constant dense<0.000000e+00> : vector<288x128xf32>
    %67 = tpu.matmul %64, %66, %cst_43 {dimension_numbers = #tpu.dot_dimension_numbers<[1], [0], [0], [1], [0, 0, 1, 1], [], []>} : vector<288x8xf32>, vector<8x128xf32>, vector<288x128xf32> -> vector<288x128xf32>
    %68 = arith.addf %60, %67 : vector<288x128xf32>
    %c36_i32_44 = arith.constant 36 : i32
    %69 = arith.addi %3, %c36_i32_44 : i32
    %c2_i32_45 = arith.constant 2 : i32
    %70 = arith.addi %69, %c2_i32_45 : i32
    %71 = arith.index_cast %70 : i32 to index
    %c0_46 = arith.constant 0 : index
    %72 = vector.load %arg2[%71, %c0_46] : memref<656x8xf32, #tpu.memory_space<vmem>>, vector<288x8xf32>
    %c8 = arith.constant 8 : index
    %c0_47 = arith.constant 0 : index
    %c0_48 = arith.constant 0 : index
    %73 = vector.load %arg3[%c8, %c0_47, %c0_48] : memref<9x8x128xf32, #tpu.memory_space<vmem>>, vector<1x8x128xf32>
    %74 = vector.shape_cast %73 : vector<1x8x128xf32> to vector<8x128xf32>
    %cst_49 = arith.constant dense<0.000000e+00> : vector<288x128xf32>
    %75 = tpu.matmul %72, %74, %cst_49 {dimension_numbers = #tpu.dot_dimension_numbers<[1], [0], [0], [1], [0, 0, 1, 1], [], []>} : vector<288x8xf32>, vector<8x128xf32>, vector<288x128xf32> -> vector<288x128xf32>
    %76 = arith.addf %68, %75 : vector<288x128xf32>
    %c1_i32_50 = arith.constant 1 : i32
    %77 = arith.muli %arg0, %c1_i32_50 : i32
    %78 = arith.addi %77, %arg1 : i32
    %c288_i32_51 = arith.constant 288 : i32
    %79 = arith.muli %78, %c288_i32_51 : i32
    %80 = tpu.assume_multiple %79, 8 : i32
    %81 = arith.index_cast %80 : i32 to index
    %c0_52 = arith.constant 0 : index
    %82 = vector.load %arg7[%81, %c0_52] : memref<576x128xf32, #tpu.memory_space<vmem>>, vector<288x128xf32>
    tpu.vector_store %arg7[%81, %c0_52], %76 {strides = array<i32>} : memref<576x128xf32, #tpu.memory_space<vmem>>, vector<288x128xf32>,
    %c1_i32_53 = arith.constant 1 : i32
    %83 = arith.cmpi eq, %arg0, %c1_i32_53 : i32
    %c0_i32_54 = arith.constant 0 : i32
    %84 = arith.cmpi eq, %arg1, %c0_i32_54 : i32
    %85 = arith.andi %83, %84 : i1
    %86 = arith.extui %85 : i1 to i32
    %c0_i32_55 = arith.constant 0 : i32
    %87 = arith.cmpi ne, %86, %c0_i32_55 : i32
    scf.if %87 {
      %c0_56 = arith.constant 0 : index
      %c0_57 = arith.constant 0 : index
      %88 = vector.load %arg7[%c0_56, %c0_57] : memref<576x128xf32, #tpu.memory_space<vmem>>, vector<576x128xf32>
      %c0_58 = arith.constant 0 : index
      %c0_59 = arith.constant 0 : index
      %89 = vector.load %arg6[%c0_58, %c0_59] : memref<576x1xf32, #tpu.memory_space<vmem>>, vector<576x1xf32>
      %90 = vector.broadcast %89 : vector<576x1xf32> to vector<576x128xf32>
      %91 = arith.mulf %88, %90 : vector<576x128xf32>
      %cst_60 = arith.constant dense<0.000000e+00> : vector<128xf32>
      %92 = vector.multi_reduction <add>, %91, %cst_60 [0] : vector<576x128xf32> to vector<128xf32>
      %93 = vector.shape_cast %92 : vector<128xf32> to vector<1x128xf32>
      %cst_61 = arith.constant 0.001953125 : f32
      %94 = vector.broadcast %cst_61 : f32 to vector<1x128xf32>
      %95 = arith.mulf %93, %94 : vector<1x128xf32>
      %96 = vector.broadcast %95 : vector<1x128xf32> to vector<576x128xf32>
      %97 = arith.subf %88, %96 : vector<576x128xf32>
      %98 = vector.broadcast %89 : vector<576x1xf32> to vector<576x128xf32>
      %99 = arith.mulf %97, %98 : vector<576x128xf32>
      %100 = arith.mulf %99, %99 : vector<576x128xf32>
      %cst_62 = arith.constant dense<0.000000e+00> : vector<128xf32>
      %101 = vector.multi_reduction <add>, %100, %cst_62 [0] : vector<576x128xf32> to vector<128xf32>
      %102 = vector.shape_cast %101 : vector<128xf32> to vector<1x128xf32>
      %cst_63 = arith.constant 0.001953125 : f32
      %103 = vector.broadcast %cst_63 : f32 to vector<1x128xf32>
      %104 = arith.mulf %102, %103 : vector<1x128xf32>
      %cst_64 = arith.constant 9.99999974E-6 : f32
      %105 = vector.broadcast %cst_64 : f32 to vector<1x128xf32>
      %106 = arith.addf %104, %105 : vector<1x128xf32>
      %107 = math.rsqrt %106 : vector<1x128xf32>
      %c0_65 = arith.constant 0 : index
      %c0_66 = arith.constant 0 : index
      %108 = vector.load %arg4[%c0_65, %c0_66] : memref<1x128xf32, #tpu.memory_space<vmem>>, vector<1x128xf32>
      %109 = arith.mulf %108, %107 : vector<1x128xf32>
      %c0_67 = arith.constant 0 : index
      %c0_68 = arith.constant 0 : index
      %110 = vector.load %arg5[%c0_67, %c0_68] : memref<1x128xf32, #tpu.memory_space<vmem>>, vector<1x128xf32>
      %111 = arith.mulf %95, %109 : vector<1x128xf32>
      %112 = arith.subf %110, %111 : vector<1x128xf32>
      %113 = vector.broadcast %109 : vector<1x128xf32> to vector<576x128xf32>
      %114 = arith.mulf %88, %113 : vector<576x128xf32>
      %115 = vector.broadcast %112 : vector<1x128xf32> to vector<576x128xf32>
      %116 = arith.addf %114, %115 : vector<576x128xf32>
      %cst_69 = arith.constant 0.000000e+00 : f32
      %117 = vector.broadcast %cst_69 : f32 to vector<576x128xf32>
      %118 = arith.maximumf %116, %117 : vector<576x128xf32>
      %c0_70 = arith.constant 0 : index
      %c0_71 = arith.constant 0 : index
      %119 = vector.load %arg7[%c0_70, %c0_71] : memref<576x128xf32, #tpu.memory_space<vmem>>, vector<576x128xf32>
      tpu.vector_store %arg7[%c0_70, %c0_71], %118 {strides = array<i32>} : memref<576x128xf32, #tpu.memory_space<vmem>>, vector<576x128xf32>,
    } else {
    }
    return
  }
  func.func @transform_0(%arg0: i32, %arg1: i32) -> (i32, i32) {
    %c0_i32 = arith.constant 0 : i32
    %c0_i32_0 = arith.constant 0 : i32
    %c0_i32_1 = arith.constant 0 : i32
    return %c0_i32, %c0_i32_0 : i32, i32
  }
  func.func @transform_1(%arg0: i32, %arg1: i32) -> (i32, i32, i32) {
    %c0_i32 = arith.constant 0 : i32
    %c0_i32_0 = arith.constant 0 : i32
    %c0_i32_1 = arith.constant 0 : i32
    %c0_i32_2 = arith.constant 0 : i32
    return %c0_i32, %c0_i32_0, %c0_i32_1 : i32, i32, i32
  }
  func.func @transform_2(%arg0: i32, %arg1: i32) -> (i32, i32) {
    %c0_i32 = arith.constant 0 : i32
    %c0_i32_0 = arith.constant 0 : i32
    %c0_i32_1 = arith.constant 0 : i32
    return %c0_i32, %c0_i32_0 : i32, i32
  }
  func.func @transform_3(%arg0: i32, %arg1: i32) -> (i32, i32) {
    %c0_i32 = arith.constant 0 : i32
    %c0_i32_0 = arith.constant 0 : i32
    %c0_i32_1 = arith.constant 0 : i32
    return %c0_i32, %c0_i32_0 : i32, i32
  }
  func.func @transform_4(%arg0: i32, %arg1: i32) -> (i32, i32) {
    %c0_i32 = arith.constant 0 : i32
    %c0_i32_0 = arith.constant 0 : i32
    %c0_i32_1 = arith.constant 0 : i32
    return %c0_i32, %c0_i32_0 : i32, i32
  }
  func.func @transform_5(%arg0: i32, %arg1: i32) -> (i32, i32) {
    %c0_i32 = arith.constant 0 : i32
    %c0_i32_0 = arith.constant 0 : i32
    %c0_i32_1 = arith.constant 0 : i32
    return %c0_i32, %c0_i32_0 : i32, i32
  }
}

</mosaic_0001>

<llo_original>
// kernel: tpu_custom_call.1
$region0: #{tpu_custom_call.1}
  #allocation0 [shape = 'u32[]', space=smem, size = 0x4, offset = 0x4, fixed_abs, tag = 'smem constant byte address 0x4 - core index']
  #allocation1 [shape = 'u32[72,128]{1,0:T(1,128)}', space=vmem, size = 0x9000, scoped, tag = 'internal scratch']
  %s0 = inlined_call_operand.vmem [shape: f32[656,8], index: 0, kind: input, shape index: {}]
  %s1 = inlined_call_operand.vmem [shape: f32[9,8,128], index: 1, kind: input, shape index: {}]
  %s2 = inlined_call_operand.vmem [shape: f32[1,128], index: 2, kind: input, shape index: {}]
  %s3 = inlined_call_operand.vmem [shape: f32[1,128], index: 3, kind: input, shape index: {}]
  %s4 = inlined_call_operand.vmem [shape: f32[576,1], index: 4, kind: input, shape index: {}]
  %s5 = inlined_call_operand.hbm [shape: f32[576,128], index: 5, kind: output, shape index: {}]
  %s6 = sld [smem:[#allocation0]]
  $region57: #{tpu_custom_call.1} parent=0
    _
  %s8 = ssub.s32 1, %s6
  %s9 = scalar_select 0, %s8, %s6
  $region1: #{tpu_custom_call.1} parent=0
    #allocation2 [shape = 'u8[294912]{0}', space=vmem, size = 0x48000, scoped, tag = 'output window, operand 0, single buffered']
    #allocation3 [shape = 's32[2]{0}', space=sflag, size = 0x8, scoped, tag = 'scoped memory for tpu_custom_call.1']
    %10 = vsyncpa [#allocation3], 0
    loop: start=0, step=1, limit=4
    $region2: #{tpu_custom_call.1} parent=1 // loop_pre_header
      _
    $region3: #{tpu_custom_call.1} parent=1 // loop_header
      %s12 = sphi 0, %s16
      %p13 = scmp.ge.s32.totalorder %s12, 4
      %s19 = sphi 0, %s31
      %s20 = sphi 0, %s27
      %s21 = sphi 0, %s19
      %s22 = sphi 0, %s20
      %s23 = sphi 0, %s21
      %s24 = sphi 0, %s22
      %s32 = sphi 0, %s32
      %s34 = sphi 0, %s32
      %s35 = sphi 0, %s34
      %s49 = sphi 0, %s35
      %s53 = sphi 0, %s53
      %s55 = sphi 0, %s53
      %s56 = sphi 0, %s55
      %s70 = sphi 0, %s56
      %s74 = sphi 0, %s74
      %s76 = sphi 0, %s74
      %s77 = sphi 0, %s76
      %s91 = sphi 0, %s77
      %s95 = sphi 0, %s95
      %s97 = sphi 0, %s95
      %s98 = sphi 0, %s97
      %s112 = sphi 0, %s98
      %s116 = sphi 0, %s116
      %s118 = sphi 0, %s116
      %s119 = sphi 0, %s118
      %s133 = sphi 0, %s119
      %s137 = sphi 0, %s137
      %s139 = sphi 0, %s137
      %s140 = sphi 0, %s139
      %s154 = sphi 0, %s140
    $region4: #{tpu_custom_call.1} parent=1 // loop_header_branch
      %15 = sbr.rel (%p13) target = $region8
    $region5: #{tpu_custom_call.1} parent=1 // loop_body
      %s17 = ssub.s32 %s12, 1
      %s18 = ssub.s32 %s12, 2
      %s25 = sadd.s32 1, %s20
      %p26 = scmp.ge.s32.totalorder %s25, 1
      %s27 = scalar_select %p26, 0, %s25
      %s28 = sadd.s32 1, %s19
      %s29 = scalar_select %p26, %s28, %s19
      %p30 = scmp.ge.s32.totalorder %s29, 2
      %s31 = scalar_select %p30, 0, %s29
      %s33 = sadd.s32 %s32, 1
      %p36 = scmp.eq.s32.totalorder %s12, 1
      %p37 = scmp.ne.s32.totalorder %s32, %s34
      %p38 = scmp.eq.s32.totalorder %s12, 0
      %p39 = por %p37, %p38
      %p40 = scmp.ne.s32.totalorder %s32, %s34
      %p41 = scmp.eq.s32.totalorder %s17, 1
      %p42 = por %p40, %p41
      %p43 = scmp.ne.s32.totalorder %s34, %s35
      %p44 = scmp.eq.s32.totalorder %s17, 0
      %p45 = por %p43, %p44
      %p46 = scmp.ne.s32.totalorder %s34, %s35
      %p47 = scmp.eq.s32.totalorder %s18, 1
      %p48 = por %p46, %p47
      %p50 = scmp.ne.s32.totalorder %s35, %s49
      %p51 = scmp.eq.s32.totalorder %s18, 0
      %p52 = por %p50, %p51
      %s54 = sadd.s32 %s53, 1
      %p57 = scmp.eq.s32.totalorder %s12, 1
      %p58 = scmp.ne.s32.totalorder %s53, %s55
      %p59 = scmp.eq.s32.totalorder %s12, 0
      %p60 = por %p58, %p59
      %p61 = scmp.ne.s32.totalorder %s53, %s55
      %p62 = scmp.eq.s32.totalorder %s17, 1
      %p63 = por %p61, %p62
      %p64 = scmp.ne.s32.totalorder %s55, %s56
      %p65 = scmp.eq.s32.totalorder %s17, 0
      %p66 = por %p64, %p65
      %p67 = scmp.ne.s32.totalorder %s55, %s56
      %p68 = scmp.eq.s32.totalorder %s18, 1
      %p69 = por %p67, %p68
      %p71 = scmp.ne.s32.totalorder %s56, %s70
      %p72 = scmp.eq.s32.totalorder %s18, 0
      %p73 = por %p71, %p72
      %s75 = sadd.s32 %s74, 1
      %p78 = scmp.eq.s32.totalorder %s12, 1
      %p79 = scmp.ne.s32.totalorder %s74, %s76
      %p80 = scmp.eq.s32.totalorder %s12, 0
      %p81 = por %p79, %p80
      %p82 = scmp.ne.s32.totalorder %s74, %s76
      %p83 = scmp.eq.s32.totalorder %s17, 1
      %p84 = por %p82, %p83
      %p85 = scmp.ne.s32.totalorder %s76, %s77
      %p86 = scmp.eq.s32.totalorder %s17, 0
      %p87 = por %p85, %p86
      %p88 = scmp.ne.s32.totalorder %s76, %s77
      %p89 = scmp.eq.s32.totalorder %s18, 1
      %p90 = por %p88, %p89
      %p92 = scmp.ne.s32.totalorder %s77, %s91
      %p93 = scmp.eq.s32.totalorder %s18, 0
      %p94 = por %p92, %p93
      %s96 = sadd.s32 %s95, 1
      %p99 = scmp.eq.s32.totalorder %s12, 1
      %p100 = scmp.ne.s32.totalorder %s95, %s97
      %p101 = scmp.eq.s32.totalorder %s12, 0
      %p102 = por %p100, %p101
      %p103 = scmp.ne.s32.totalorder %s95, %s97
      %p104 = scmp.eq.s32.totalorder %s17, 1
      %p105 = por %p103, %p104
      %p106 = scmp.ne.s32.totalorder %s97, %s98
      %p107 = scmp.eq.s32.totalorder %s17, 0
      %p108 = por %p106, %p107
      %p109 = scmp.ne.s32.totalorder %s97, %s98
      %p110 = scmp.eq.s32.totalorder %s18, 1
      %p111 = por %p109, %p110
      %p113 = scmp.ne.s32.totalorder %s98, %s112
      %p114 = scmp.eq.s32.totalorder %s18, 0
      %p115 = por %p113, %p114
      %s117 = sadd.s32 %s116, 1
      %p120 = scmp.eq.s32.totalorder %s12, 1
      %p121 = scmp.ne.s32.totalorder %s116, %s118
      %p122 = scmp.eq.s32.totalorder %s12, 0
      %p123 = por %p121, %p122
      %p124 = scmp.ne.s32.totalorder %s116, %s118
      %p125 = scmp.eq.s32.totalorder %s17, 1
      %p126 = por %p124, %p125
      %p127 = scmp.ne.s32.totalorder %s118, %s119
      %p128 = scmp.eq.s32.totalorder %s17, 0
      %p129 = por %p127, %p128
      %p130 = scmp.ne.s32.totalorder %s118, %s119
      %p131 = scmp.eq.s32.totalorder %s18, 1
      %p132 = por %p130, %p131
      %p134 = scmp.ne.s32.totalorder %s119, %s133
      %p135 = scmp.eq.s32.totalorder %s18, 0
      %p136 = por %p134, %p135
      %s138 = sadd.s32 %s137, 1
      %p141 = scmp.eq.s32.totalorder %s12, 1
      %p142 = scmp.ne.s32.totalorder %s137, %s139
      %p143 = scmp.eq.s32.totalorder %s12, 0
      %p144 = por %p142, %p143
      %p145 = scmp.ne.s32.totalorder %s137, %s139
      %p146 = scmp.eq.s32.totalorder %s17, 1
      %p147 = por %p145, %p146
      %p148 = scmp.ne.s32.totalorder %s139, %s140
      %p149 = scmp.eq.s32.totalorder %s17, 0
      %p150 = por %p148, %p149
      %p151 = scmp.ne.s32.totalorder %s139, %s140
      %p152 = scmp.eq.s32.totalorder %s18, 1
      %p153 = por %p151, %p152
      %p155 = scmp.ne.s32.totalorder %s140, %s154
      %p156 = scmp.eq.s32.totalorder %s18, 0
      %p157 = por %p155, %p156
      %p158 = scmp.le.s32.totalorder 1, %s12
      %p159 = scmp.lt.s32.totalorder %s12, 3
      %p160 = pnand %p158, %p159
      %p161 = pneg %p160
      // Predicated region
      $region9: #{tpu_custom_call.1} parent=5 // pred_check
        _
      $region10: #{tpu_custom_call.1} parent=5 // pred_check_branch
        %163 = sbr.rel (%p160) target = $region12
      $region11: #{tpu_custom_call.1} parent=5 // pred_region
        %s164 = ssub.s32 %s12, 1
        // Predicated region
        $region13: #{tpu_custom_call.1} parent=11 // pred_check
          %p165 = pneg %p45
        $region14: #{tpu_custom_call.1} parent=11 // pred_check_branch
          %167 = sbr.rel (%p165) target = $region16
        $region15: #{tpu_custom_call.1} parent=11 // pred_region
          _
        $region16: #{tpu_custom_call.1} parent=11 // pred_fallthru
          _
        // Predicated region
        $region17: #{tpu_custom_call.1} parent=11 // pred_check
          %p168 = pneg %p66
        $region18: #{tpu_custom_call.1} parent=11 // pred_check_branch
          %170 = sbr.rel (%p168) target = $region20
        $region19: #{tpu_custom_call.1} parent=11 // pred_region
          _
        $region20: #{tpu_custom_call.1} parent=11 // pred_fallthru
          _
        // Predicated region
        $region21: #{tpu_custom_call.1} parent=11 // pred_check
          %p171 = pneg %p87
        $region22: #{tpu_custom_call.1} parent=11 // pred_check_branch
          %173 = sbr.rel (%p171) target = $region24
        $region23: #{tpu_custom_call.1} parent=11 // pred_region
          _
        $region24: #{tpu_custom_call.1} parent=11 // pred_fallthru
          _
        // Predicated region
        $region25: #{tpu_custom_call.1} parent=11 // pred_check
          %p174 = pneg %p108
        $region26: #{tpu_custom_call.1} parent=11 // pred_check_branch
          %176 = sbr.rel (%p174) target = $region28
        $region27: #{tpu_custom_call.1} parent=11 // pred_region
          _
        $region28: #{tpu_custom_call.1} parent=11 // pred_fallthru
          _
        // Predicated region
        $region29: #{tpu_custom_call.1} parent=11 // pred_check
          %p177 = pneg %p129
        $region30: #{tpu_custom_call.1} parent=11 // pred_check_branch
          %179 = sbr.rel (%p177) target = $region32
        $region31: #{tpu_custom_call.1} parent=11 // pred_region
          _
        $region32: #{tpu_custom_call.1} parent=11 // pred_fallthru
          _
      $region12: #{tpu_custom_call.1} parent=5 // pred_fallthru
        _
      %p180 = scmp.lt.s32.totalorder %s12, 2
      // Predicated region
      $region33: #{tpu_custom_call.1} parent=5 // pred_check
        %p181 = pneg %p180
      $region34: #{tpu_custom_call.1} parent=5 // pred_check_branch
        %183 = sbr.rel (%p181) target = $region36
      $region35: #{tpu_custom_call.1} parent=5 // pred_region
        _
      $region36: #{tpu_custom_call.1} parent=5 // pred_fallthru
        _
      %p184 = scmp.le.s32.totalorder 1, %s12
      %p185 = scmp.lt.s32.totalorder %s12, 3
      %p186 = pnand %p184, %p185
      %p187 = pneg %p186
      // Predicated region
      $region37: #{tpu_custom_call.1} parent=5 // pred_check
        _
      $region38: #{tpu_custom_call.1} parent=5 // pred_check_branch
        %189 = sbr.rel (%p186) target = $region40
      $region39: #{tpu_custom_call.1} parent=5 // pred_region
        %s190 = ssub.s32 %s12, 1
        %p191 = pneg %p45
        %p192 = pneg %p42
        %p193 = pneg %p66
        %p194 = pneg %p63
        %p195 = pneg %p87
        %p196 = pneg %p84
        %p197 = pneg %p108
        %p198 = pneg %p105
        %p199 = pneg %p129
        %p200 = pneg %p126
        %p201 = pneg %p150
        %p202 = pneg %p147
        %s203 = smul.u32 %s21, 324
        %s204 = smul.u32 %s22, 288
        %s205 = sadd.s32 %s203, %s204
        %s206 = scalar_lea.vmem %s0, %s205
        %v207 = vld [vmem:[%s206] sm:$0xff]
        %v208 = vld [vmem:[%s206 + $0x8] sm:$0xff]
        %v209 = vld [vmem:[%s206 + $0x10] sm:$0xff]
        %v210 = vld [vmem:[%s206 + $0x18] sm:$0xff]
        %v211 = vld [vmem:[%s206 + $0x20] sm:$0xff]
        %v212 = vld [vmem:[%s206 + $0x28] sm:$0xff]
        %v213 = vld [vmem:[%s206 + $0x30] sm:$0xff]
        %v214 = vld [vmem:[%s206 + $0x38] sm:$0xff]
        %v215 = vld [vmem:[%s206 + $0x40] sm:$0xff]
        %v216 = vld [vmem:[%s206 + $0x48] sm:$0xff]
        %v217 = vld [vmem:[%s206 + $0x50] sm:$0xff]
        %v218 = vld [vmem:[%s206 + $0x58] sm:$0xff]
        %v219 = vld [vmem:[%s206 + $0x60] sm:$0xff]
        %v220 = vld [vmem:[%s206 + $0x68] sm:$0xff]
        %v221 = vld [vmem:[%s206 + $0x70] sm:$0xff]
        %v222 = vld [vmem:[%s206 + $0x78] sm:$0xff]
        %v223 = vld [vmem:[%s206 + $0x80] sm:$0xff]
        %v224 = vld [vmem:[%s206 + $0x88] sm:$0xff]
        %v225 = vld [vmem:[%s206 + $0x90] sm:$0xff]
        %v226 = vld [vmem:[%s206 + $0x98] sm:$0xff]
        %v227 = vld [vmem:[%s206 + $0xa0] sm:$0xff]
        %v228 = vld [vmem:[%s206 + $0xa8] sm:$0xff]
        %v229 = vld [vmem:[%s206 + $0xb0] sm:$0xff]
        %v230 = vld [vmem:[%s206 + $0xb8] sm:$0xff]
        %v231 = vld [vmem:[%s206 + $0xc0] sm:$0xff]
        %v232 = vld [vmem:[%s206 + $0xc8] sm:$0xff]
        %v233 = vld [vmem:[%s206 + $0xd0] sm:$0xff]
        %v234 = vld [vmem:[%s206 + $0xd8] sm:$0xff]
        %v235 = vld [vmem:[%s206 + $0xe0] sm:$0xff]
        %v236 = vld [vmem:[%s206 + $0xe8] sm:$0xff]
        %v237 = vld [vmem:[%s206 + $0xf0] sm:$0xff]
        %v238 = vld [vmem:[%s206 + $0xf8] sm:$0xff]
        %v239 = vld [vmem:[%s206 + $0x100] sm:$0xff]
        %v240 = vld [vmem:[%s206 + $0x108] sm:$0xff]
        %v241 = vld [vmem:[%s206 + $0x110] sm:$0xff]
        %v242 = vld [vmem:[%s206 + $0x118] sm:$0xff]
        %v243 = vld [vmem:[%s1] sm:$0xff]
        %s244 = sadd.s32 %s205, 1
        %s245 = scalar_lea.vmem %s0, %s244
        %v246 = vld [vmem:[%s245] sm:$0xff]
        %v247 = vld [vmem:[%s245 + $0x8] sm:$0xff]
        %v248 = vld [vmem:[%s245 + $0x10] sm:$0xff]
        %v249 = vld [vmem:[%s245 + $0x18] sm:$0xff]
        %v250 = vld [vmem:[%s245 + $0x20] sm:$0xff]
        %v251 = vld [vmem:[%s245 + $0x28] sm:$0xff]
        %v252 = vld [vmem:[%s245 + $0x30] sm:$0xff]
        %v253 = vld [vmem:[%s245 + $0x38] sm:$0xff]
        %v254 = vld [vmem:[%s245 + $0x40] sm:$0xff]
        %v255 = vld [vmem:[%s245 + $0x48] sm:$0xff]
        %v256 = vld [vmem:[%s245 + $0x50] sm:$0xff]
        %v257 = vld [vmem:[%s245 + $0x58] sm:$0xff]
        %v258 = vld [vmem:[%s245 + $0x60] sm:$0xff]
        %v259 = vld [vmem:[%s245 + $0x68] sm:$0xff]
        %v260 = vld [vmem:[%s245 + $0x70] sm:$0xff]
        %v261 = vld [vmem:[%s245 + $0x78] sm:$0xff]
        %v262 = vld [vmem:[%s245 + $0x80] sm:$0xff]
        %v263 = vld [vmem:[%s245 + $0x88] sm:$0xff]
        %v264 = vld [vmem:[%s245 + $0x90] sm:$0xff]
        %v265 = vld [vmem:[%s245 + $0x98] sm:$0xff]
        %v266 = vld [vmem:[%s245 + $0xa0] sm:$0xff]
        %v267 = vld [vmem:[%s245 + $0xa8] sm:$0xff]
        %v268 = vld [vmem:[%s245 + $0xb0] sm:$0xff]
        %v269 = vld [vmem:[%s245 + $0xb8] sm:$0xff]
        %v270 = vld [vmem:[%s245 + $0xc0] sm:$0xff]
        %v271 = vld [vmem:[%s245 + $0xc8] sm:$0xff]
        %v272 = vld [vmem:[%s245 + $0xd0] sm:$0xff]
        %v273 = vld [vmem:[%s245 + $0xd8] sm:$0xff]
        %v274 = vld [vmem:[%s245 + $0xe0] sm:$0xff]
        %v275 = vld [vmem:[%s245 + $0xe8] sm:$0xff]
        %v276 = vld [vmem:[%s245 + $0xf0] sm:$0xff]
        %v277 = vld [vmem:[%s245 + $0xf8] sm:$0xff]
        %v278 = vld [vmem:[%s245 + $0x100] sm:$0xff]
        %v279 = vld [vmem:[%s245 + $0x108] sm:$0xff]
        %v280 = vld [vmem:[%s245 + $0x110] sm:$0xff]
        %v281 = vld [vmem:[%s245 + $0x118] sm:$0xff]
        %s282 = scalar_lea.vmem %s1, 8
        %v283 = vld [vmem:[%s282] sm:$0xff]
        %vm284 = vcmask 64512
        %v286 = vsel %vm284, %v246, 0
        %v289 = vsel %vm284, %v247, 0
        %v292 = vsel %vm284, %v248, 0
        %v295 = vsel %vm284, %v249, 0
        %v298 = vsel %vm284, %v250, 0
        %v301 = vsel %vm284, %v251, 0
        %v304 = vsel %vm284, %v252, 0
        %v307 = vsel %vm284, %v253, 0
        %v310 = vsel %vm284, %v254, 0
        %v313 = vsel %vm284, %v255, 0
        %v316 = vsel %vm284, %v256, 0
        %v319 = vsel %vm284, %v257, 0
        %v322 = vsel %vm284, %v258, 0
        %v325 = vsel %vm284, %v259, 0
        %v328 = vsel %vm284, %v260, 0
        %v331 = vsel %vm284, %v261, 0
        %v334 = vsel %vm284, %v262, 0
        %v337 = vsel %vm284, %v263, 0
        %v340 = vsel %vm284, %v264, 0
        %v343 = vsel %vm284, %v265, 0
        %v346 = vsel %vm284, %v266, 0
        %v349 = vsel %vm284, %v267, 0
        %v352 = vsel %vm284, %v268, 0
        %v355 = vsel %vm284, %v269, 0
        %v358 = vsel %vm284, %v270, 0
        %v361 = vsel %vm284, %v271, 0
        %v364 = vsel %vm284, %v272, 0
        %v367 = vsel %vm284, %v273, 0
        %v370 = vsel %vm284, %v274, 0
        %v373 = vsel %vm284, %v275, 0
        %v376 = vsel %vm284, %v276, 0
        %v379 = vsel %vm284, %v277, 0
        %v382 = vsel %vm284, %v278, 0
        %v385 = vsel %vm284, %v279, 0
        %v388 = vsel %vm284, %v280, 0
        %v391 = vsel %vm284, %v281, 0
        %393 = vmatpush.msra.mxu0 0.0
        %394 = vmatpush.msra.mxu0 0.0
        %395 = vmatpush.msra.mxu0 0.0
        %396 = vmatpush.msra.mxu0 0.0
        %397 = vmatpush.msra.mxu0 0.0
        %398 = vmatpush.msra.mxu0 0.0
        %399 = vmatpush.msra.mxu0 0.0
        %400 = vmatpush.msra.mxu0 0.0
        %401 = vmatpush.msra.mxu0 0.0
        %402 = vmatpush.msra.mxu0 0.0
        %403 = vmatpush.msra.mxu0 0.0
        %404 = vmatpush.msra.mxu0 0.0
        %405 = vmatpush.msra.mxu0 0.0
        %406 = vmatpush.msra.mxu0 0.0
        %407 = vmatpush.msra.mxu0 0.0
        %408 = vmatpush.msra.mxu0 %v283
        %409 = vmatmul.f32.gmra.mxu0 %v286
        %v410 = vpop.f32.mrf.mxu0
        %v411 = vadd.f32 0.0, %v410
        %412 = vmatmul.f32.gmra.mxu0 %v289
        %v413 = vpop.f32.mrf.mxu0
        %v414 = vadd.f32 0.0, %v413
        %415 = vmatmul.f32.gmra.mxu0 %v292
        %v416 = vpop.f32.mrf.mxu0
        %v417 = vadd.f32 0.0, %v416
        %418 = vmatmul.f32.gmra.mxu0 %v295
        %v419 = vpop.f32.mrf.mxu0
        %v420 = vadd.f32 0.0, %v419
        %421 = vmatmul.f32.gmra.mxu0 %v298
        %v422 = vpop.f32.mrf.mxu0
        %v423 = vadd.f32 0.0, %v422
        %424 = vmatmul.f32.gmra.mxu0 %v301
        %v425 = vpop.f32.mrf.mxu0
        %v426 = vadd.f32 0.0, %v425
        %427 = vmatmul.f32.gmra.mxu0 %v304
        %v428 = vpop.f32.mrf.mxu0
        %v429 = vadd.f32 0.0, %v428
        %430 = vmatmul.f32.gmra.mxu0 %v307
        %v431 = vpop.f32.mrf.mxu0
        %v432 = vadd.f32 0.0, %v431
        %433 = vmatmul.f32.gmra.mxu0 %v310
        %v434 = vpop.f32.mrf.mxu0
        %v435 = vadd.f32 0.0, %v434
        %436 = vmatmul.f32.gmra.mxu0 %v313
        %v437 = vpop.f32.mrf.mxu0
        %v438 = vadd.f32 0.0, %v437
        %439 = vmatmul.f32.gmra.mxu0 %v316
        %v440 = vpop.f32.mrf.mxu0
        %v441 = vadd.f32 0.0, %v440
        %442 = vmatmul.f32.gmra.mxu0 %v319
        %v443 = vpop.f32.mrf.mxu0
        %v444 = vadd.f32 0.0, %v443
        %445 = vmatmul.f32.gmra.mxu0 %v322
        %v446 = vpop.f32.mrf.mxu0
        %v447 = vadd.f32 0.0, %v446
        %448 = vmatmul.f32.gmra.mxu0 %v325
        %v449 = vpop.f32.mrf.mxu0
        %v450 = vadd.f32 0.0, %v449
        %451 = vmatmul.f32.gmra.mxu0 %v328
        %v452 = vpop.f32.mrf.mxu0
        %v453 = vadd.f32 0.0, %v452
        %454 = vmatmul.f32.gmra.mxu0 %v331
        %v455 = vpop.f32.mrf.mxu0
        %v456 = vadd.f32 0.0, %v455
        %457 = vmatmul.f32.gmra.mxu0 %v334
        %v458 = vpop.f32.mrf.mxu0
        %v459 = vadd.f32 0.0, %v458
        %460 = vmatmul.f32.gmra.mxu0 %v337
        %v461 = vpop.f32.mrf.mxu0
        %v462 = vadd.f32 0.0, %v461
        %463 = vmatmul.f32.gmra.mxu0 %v340
        %v464 = vpop.f32.mrf.mxu0
        %v465 = vadd.f32 0.0, %v464
        %466 = vmatmul.f32.gmra.mxu0 %v343
        %v467 = vpop.f32.mrf.mxu0
        %v468 = vadd.f32 0.0, %v467
        %469 = vmatmul.f32.gmra.mxu0 %v346
        %v470 = vpop.f32.mrf.mxu0
        %v471 = vadd.f32 0.0, %v470
        %472 = vmatmul.f32.gmra.mxu0 %v349
        %v473 = vpop.f32.mrf.mxu0
        %v474 = vadd.f32 0.0, %v473
        %475 = vmatmul.f32.gmra.mxu0 %v352
        %v476 = vpop.f32.mrf.mxu0
        %v477 = vadd.f32 0.0, %v476
        %478 = vmatmul.f32.gmra.mxu0 %v355
        %v479 = vpop.f32.mrf.mxu0
        %v480 = vadd.f32 0.0, %v479
        %481 = vmatmul.f32.gmra.mxu0 %v358
        %v482 = vpop.f32.mrf.mxu0
        %v483 = vadd.f32 0.0, %v482
        %484 = vmatmul.f32.gmra.mxu0 %v361
        %v485 = vpop.f32.mrf.mxu0
        %v486 = vadd.f32 0.0, %v485
        %487 = vmatmul.f32.gmra.mxu0 %v364
        %v488 = vpop.f32.mrf.mxu0
        %v489 = vadd.f32 0.0, %v488
        %490 = vmatmul.f32.gmra.mxu0 %v367
        %v491 = vpop.f32.mrf.mxu0
        %v492 = vadd.f32 0.0, %v491
        %493 = vmatmul.f32.gmra.mxu0 %v370
        %v494 = vpop.f32.mrf.mxu0
        %v495 = vadd.f32 0.0, %v494
        %496 = vmatmul.f32.gmra.mxu0 %v373
        %v497 = vpop.f32.mrf.mxu0
        %v498 = vadd.f32 0.0, %v497
        %499 = vmatmul.f32.gmra.mxu0 %v376
        %v500 = vpop.f32.mrf.mxu0
        %v501 = vadd.f32 0.0, %v500
        %502 = vmatmul.f32.gmra.mxu0 %v379
        %v503 = vpop.f32.mrf.mxu0
        %v504 = vadd.f32 0.0, %v503
        %505 = vmatmul.f32.gmra.mxu0 %v382
        %v506 = vpop.f32.mrf.mxu0
        %v507 = vadd.f32 0.0, %v506
        %508 = vmatmul.f32.gmra.mxu0 %v385
        %v509 = vpop.f32.mrf.mxu0
        %v510 = vadd.f32 0.0, %v509
        %511 = vmatmul.f32.gmra.mxu0 %v388
        %v512 = vpop.f32.mrf.mxu0
        %v513 = vadd.f32 0.0, %v512
        %514 = vmatmul.f32.gmra.mxu0 %v391
        %v515 = vpop.f32.mrf.mxu0
        %v516 = vadd.f32 0.0, %v515
        %517 = vdwg.mxu0
        %v519 = vsel %vm284, %v207, 0
        %v522 = vsel %vm284, %v208, 0
        %v525 = vsel %vm284, %v209, 0
        %v528 = vsel %vm284, %v210, 0
        %v531 = vsel %vm284, %v211, 0
        %v534 = vsel %vm284, %v212, 0
        %v537 = vsel %vm284, %v213, 0
        %v540 = vsel %vm284, %v214, 0
        %v543 = vsel %vm284, %v215, 0
        %v546 = vsel %vm284, %v216, 0
        %v549 = vsel %vm284, %v217, 0
        %v552 = vsel %vm284, %v218, 0
        %v555 = vsel %vm284, %v219, 0
        %v558 = vsel %vm284, %v220, 0
        %v561 = vsel %vm284, %v221, 0
        %v564 = vsel %vm284, %v222, 0
        %v567 = vsel %vm284, %v223, 0
        %v570 = vsel %vm284, %v224, 0
        %v573 = vsel %vm284, %v225, 0
        %v576 = vsel %vm284, %v226, 0
        %v579 = vsel %vm284, %v227, 0
        %v582 = vsel %vm284, %v228, 0
        %v585 = vsel %vm284, %v229, 0
        %v588 = vsel %vm284, %v230, 0
        %v591 = vsel %vm284, %v231, 0
        %v594 = vsel %vm284, %v232, 0
        %v597 = vsel %vm284, %v233, 0
        %v600 = vsel %vm284, %v234, 0
        %v603 = vsel %vm284, %v235, 0
        %v606 = vsel %vm284, %v236, 0
        %v609 = vsel %vm284, %v237, 0
        %v612 = vsel %vm284, %v238, 0
        %v615 = vsel %vm284, %v239, 0
        %v618 = vsel %vm284, %v240, 0
        %v621 = vsel %vm284, %v241, 0
        %v624 = vsel %vm284, %v242, 0
        %626 = vmatpush.msra.mxu0 0.0
        %627 = vmatpush.msra.mxu0 0.0
        %628 = vmatpush.msra.mxu0 0.0
        %629 = vmatpush.msra.mxu0 0.0
        %630 = vmatpush.msra.mxu0 0.0
        %631 = vmatpush.msra.mxu0 0.0
        %632 = vmatpush.msra.mxu0 0.0
        %633 = vmatpush.msra.mxu0 0.0
        %634 = vmatpush.msra.mxu0 0.0
        %635 = vmatpush.msra.mxu0 0.0
        %636 = vmatpush.msra.mxu0 0.0
        %637 = vmatpush.msra.mxu0 0.0
        %638 = vmatpush.msra.mxu0 0.0
        %639 = vmatpush.msra.mxu0 0.0
        %640 = vmatpush.msra.mxu0 0.0
        %641 = vmatpush.msra.mxu0 %v243
        %642 = vmatmul.f32.gmra.mxu0 %v519
        %v643 = vpop.f32.mrf.mxu0
        %v644 = vadd.f32 %v411, %v643
        %645 = vmatmul.f32.gmra.mxu0 %v522
        %v646 = vpop.f32.mrf.mxu0
        %v647 = vadd.f32 %v414, %v646
        %648 = vmatmul.f32.gmra.mxu0 %v525
        %v649 = vpop.f32.mrf.mxu0
        %v650 = vadd.f32 %v417, %v649
        %651 = vmatmul.f32.gmra.mxu0 %v528
        %v652 = vpop.f32.mrf.mxu0
        %v653 = vadd.f32 %v420, %v652
        %654 = vmatmul.f32.gmra.mxu0 %v531
        %v655 = vpop.f32.mrf.mxu0
        %v656 = vadd.f32 %v423, %v655
        %657 = vmatmul.f32.gmra.mxu0 %v534
        %v658 = vpop.f32.mrf.mxu0
        %v659 = vadd.f32 %v426, %v658
        %660 = vmatmul.f32.gmra.mxu0 %v537
        %v661 = vpop.f32.mrf.mxu0
        %v662 = vadd.f32 %v429, %v661
        %663 = vmatmul.f32.gmra.mxu0 %v540
        %v664 = vpop.f32.mrf.mxu0
        %v665 = vadd.f32 %v432, %v664
        %666 = vmatmul.f32.gmra.mxu0 %v543
        %v667 = vpop.f32.mrf.mxu0
        %v668 = vadd.f32 %v435, %v667
        %669 = vmatmul.f32.gmra.mxu0 %v546
        %v670 = vpop.f32.mrf.mxu0
        %v671 = vadd.f32 %v438, %v670
        %672 = vmatmul.f32.gmra.mxu0 %v549
        %v673 = vpop.f32.mrf.mxu0
        %v674 = vadd.f32 %v441, %v673
        %675 = vmatmul.f32.gmra.mxu0 %v552
        %v676 = vpop.f32.mrf.mxu0
        %v677 = vadd.f32 %v444, %v676
        %678 = vmatmul.f32.gmra.mxu0 %v555
        %v679 = vpop.f32.mrf.mxu0
        %v680 = vadd.f32 %v447, %v679
        %681 = vmatmul.f32.gmra.mxu0 %v558
        %v682 = vpop.f32.mrf.mxu0
        %v683 = vadd.f32 %v450, %v682
        %684 = vmatmul.f32.gmra.mxu0 %v561
        %v685 = vpop.f32.mrf.mxu0
        %v686 = vadd.f32 %v453, %v685
        %687 = vmatmul.f32.gmra.mxu0 %v564
        %v688 = vpop.f32.mrf.mxu0
        %v689 = vadd.f32 %v456, %v688
        %690 = vmatmul.f32.gmra.mxu0 %v567
        %v691 = vpop.f32.mrf.mxu0
        %v692 = vadd.f32 %v459, %v691
        %693 = vmatmul.f32.gmra.mxu0 %v570
        %v694 = vpop.f32.mrf.mxu0
        %v695 = vadd.f32 %v462, %v694
        %696 = vmatmul.f32.gmra.mxu0 %v573
        %v697 = vpop.f32.mrf.mxu0
        %v698 = vadd.f32 %v465, %v697
        %699 = vmatmul.f32.gmra.mxu0 %v576
        %v700 = vpop.f32.mrf.mxu0
        %v701 = vadd.f32 %v468, %v700
        %702 = vmatmul.f32.gmra.mxu0 %v579
        %v703 = vpop.f32.mrf.mxu0
        %v704 = vadd.f32 %v471, %v703
        %705 = vmatmul.f32.gmra.mxu0 %v582
        %v706 = vpop.f32.mrf.mxu0
        %v707 = vadd.f32 %v474, %v706
        %708 = vmatmul.f32.gmra.mxu0 %v585
        %v709 = vpop.f32.mrf.mxu0
        %v710 = vadd.f32 %v477, %v709
        %711 = vmatmul.f32.gmra.mxu0 %v588
        %v712 = vpop.f32.mrf.mxu0
        %v713 = vadd.f32 %v480, %v712
        %714 = vmatmul.f32.gmra.mxu0 %v591
        %v715 = vpop.f32.mrf.mxu0
        %v716 = vadd.f32 %v483, %v715
        %717 = vmatmul.f32.gmra.mxu0 %v594
        %v718 = vpop.f32.mrf.mxu0
        %v719 = vadd.f32 %v486, %v718
        %720 = vmatmul.f32.gmra.mxu0 %v597
        %v721 = vpop.f32.mrf.mxu0
        %v722 = vadd.f32 %v489, %v721
        %723 = vmatmul.f32.gmra.mxu0 %v600
        %v724 = vpop.f32.mrf.mxu0
        %v725 = vadd.f32 %v492, %v724
        %726 = vmatmul.f32.gmra.mxu0 %v603
        %v727 = vpop.f32.mrf.mxu0
        %v728 = vadd.f32 %v495, %v727
        %729 = vmatmul.f32.gmra.mxu0 %v606
        %v730 = vpop.f32.mrf.mxu0
        %v731 = vadd.f32 %v498, %v730
        %732 = vmatmul.f32.gmra.mxu0 %v609
        %v733 = vpop.f32.mrf.mxu0
        %v734 = vadd.f32 %v501, %v733
        %735 = vmatmul.f32.gmra.mxu0 %v612
        %v736 = vpop.f32.mrf.mxu0
        %v737 = vadd.f32 %v504, %v736
        %738 = vmatmul.f32.gmra.mxu0 %v615
        %v739 = vpop.f32.mrf.mxu0
        %v740 = vadd.f32 %v507, %v739
        %741 = vmatmul.f32.gmra.mxu0 %v618
        %v742 = vpop.f32.mrf.mxu0
        %v743 = vadd.f32 %v510, %v742
        %744 = vmatmul.f32.gmra.mxu0 %v621
        %v745 = vpop.f32.mrf.mxu0
        %v746 = vadd.f32 %v513, %v745
        %747 = vmatmul.f32.gmra.mxu0 %v624
        %v748 = vpop.f32.mrf.mxu0
        %v749 = vadd.f32 %v516, %v748
        %750 = vdwg.mxu0
        %s751 = sadd.s32 %s205, 2
        %s752 = scalar_lea.vmem %s0, %s751
        %v753 = vld [vmem:[%s752] sm:$0xff]
        %v754 = vld [vmem:[%s752 + $0x8] sm:$0xff]
        %v755 = vld [vmem:[%s752 + $0x10] sm:$0xff]
        %v756 = vld [vmem:[%s752 + $0x18] sm:$0xff]
        %v757 = vld [vmem:[%s752 + $0x20] sm:$0xff]
        %v758 = vld [vmem:[%s752 + $0x28] sm:$0xff]
        %v759 = vld [vmem:[%s752 + $0x30] sm:$0xff]
        %v760 = vld [vmem:[%s752 + $0x38] sm:$0xff]
        %v761 = vld [vmem:[%s752 + $0x40] sm:$0xff]
        %v762 = vld [vmem:[%s752 + $0x48] sm:$0xff]
        %v763 = vld [vmem:[%s752 + $0x50] sm:$0xff]
        %v764 = vld [vmem:[%s752 + $0x58] sm:$0xff]
        %v765 = vld [vmem:[%s752 + $0x60] sm:$0xff]
        %v766 = vld [vmem:[%s752 + $0x68] sm:$0xff]
        %v767 = vld [vmem:[%s752 + $0x70] sm:$0xff]
        %v768 = vld [vmem:[%s752 + $0x78] sm:$0xff]
        %v769 = vld [vmem:[%s752 + $0x80] sm:$0xff]
        %v770 = vld [vmem:[%s752 + $0x88] sm:$0xff]
        %v771 = vld [vmem:[%s752 + $0x90] sm:$0xff]
        %v772 = vld [vmem:[%s752 + $0x98] sm:$0xff]
        %v773 = vld [vmem:[%s752 + $0xa0] sm:$0xff]
        %v774 = vld [vmem:[%s752 + $0xa8] sm:$0xff]
        %v775 = vld [vmem:[%s752 + $0xb0] sm:$0xff]
        %v776 = vld [vmem:[%s752 + $0xb8] sm:$0xff]
        %v777 = vld [vmem:[%s752 + $0xc0] sm:$0xff]
        %v778 = vld [vmem:[%s752 + $0xc8] sm:$0xff]
        %v779 = vld [vmem:[%s752 + $0xd0] sm:$0xff]
        %v780 = vld [vmem:[%s752 + $0xd8] sm:$0xff]
        %v781 = vld [vmem:[%s752 + $0xe0] sm:$0xff]
        %v782 = vld [vmem:[%s752 + $0xe8] sm:$0xff]
        %v783 = vld [vmem:[%s752 + $0xf0] sm:$0xff]
        %v784 = vld [vmem:[%s752 + $0xf8] sm:$0xff]
        %v785 = vld [vmem:[%s752 + $0x100] sm:$0xff]
        %v786 = vld [vmem:[%s752 + $0x108] sm:$0xff]
        %v787 = vld [vmem:[%s752 + $0x110] sm:$0xff]
        %v788 = vld [vmem:[%s752 + $0x118] sm:$0xff]
        %s789 = scalar_lea.vmem %s1, 16
        %v790 = vld [vmem:[%s789] sm:$0xff]
        %v792 = vsel %vm284, %v753, 0
        %v795 = vsel %vm284, %v754, 0
        %v798 = vsel %vm284, %v755, 0
        %v801 = vsel %vm284, %v756, 0
        %v804 = vsel %vm284, %v757, 0
        %v807 = vsel %vm284, %v758, 0
        %v810 = vsel %vm284, %v759, 0
        %v813 = vsel %vm284, %v760, 0
        %v816 = vsel %vm284, %v761, 0
        %v819 = vsel %vm284, %v762, 0
        %v822 = vsel %vm284, %v763, 0
        %v825 = vsel %vm284, %v764, 0
        %v828 = vsel %vm284, %v765, 0
        %v831 = vsel %vm284, %v766, 0
        %v834 = vsel %vm284, %v767, 0
        %v837 = vsel %vm284, %v768, 0
        %v840 = vsel %vm284, %v769, 0
        %v843 = vsel %vm284, %v770, 0
        %v846 = vsel %vm284, %v771, 0
        %v849 = vsel %vm284, %v772, 0
        %v852 = vsel %vm284, %v773, 0
        %v855 = vsel %vm284, %v774, 0
        %v858 = vsel %vm284, %v775, 0
        %v861 = vsel %vm284, %v776, 0
        %v864 = vsel %vm284, %v777, 0
        %v867 = vsel %vm284, %v778, 0
        %v870 = vsel %vm284, %v779, 0
        %v873 = vsel %vm284, %v780, 0
        %v876 = vsel %vm284, %v781, 0
        %v879 = vsel %vm284, %v782, 0
        %v882 = vsel %vm284, %v783, 0
        %v885 = vsel %vm284, %v784, 0
        %v888 = vsel %vm284, %v785, 0
        %v891 = vsel %vm284, %v786, 0
        %v894 = vsel %vm284, %v787, 0
        %v897 = vsel %vm284, %v788, 0
        %899 = vmatpush.msra.mxu0 0.0
        %900 = vmatpush.msra.mxu0 0.0
        %901 = vmatpush.msra.mxu0 0.0
        %902 = vmatpush.msra.mxu0 0.0
        %903 = vmatpush.msra.mxu0 0.0
        %904 = vmatpush.msra.mxu0 0.0
        %905 = vmatpush.msra.mxu0 0.0
        %906 = vmatpush.msra.mxu0 0.0
        %907 = vmatpush.msra.mxu0 0.0
        %908 = vmatpush.msra.mxu0 0.0
        %909 = vmatpush.msra.mxu0 0.0
        %910 = vmatpush.msra.mxu0 0.0
        %911 = vmatpush.msra.mxu0 0.0
        %912 = vmatpush.msra.mxu0 0.0
        %913 = vmatpush.msra.mxu0 0.0
        %914 = vmatpush.msra.mxu0 %v790
        %915 = vmatmul.f32.gmra.mxu0 %v792
        %v916 = vpop.f32.mrf.mxu0
        %v917 = vadd.f32 0.0, %v916
        %918 = vmatmul.f32.gmra.mxu0 %v795
        %v919 = vpop.f32.mrf.mxu0
        %v920 = vadd.f32 0.0, %v919
        %921 = vmatmul.f32.gmra.mxu0 %v798
        %v922 = vpop.f32.mrf.mxu0
        %v923 = vadd.f32 0.0, %v922
        %924 = vmatmul.f32.gmra.mxu0 %v801
        %v925 = vpop.f32.mrf.mxu0
        %v926 = vadd.f32 0.0, %v925
        %927 = vmatmul.f32.gmra.mxu0 %v804
        %v928 = vpop.f32.mrf.mxu0
        %v929 = vadd.f32 0.0, %v928
        %930 = vmatmul.f32.gmra.mxu0 %v807
        %v931 = vpop.f32.mrf.mxu0
        %v932 = vadd.f32 0.0, %v931
        %933 = vmatmul.f32.gmra.mxu0 %v810
        %v934 = vpop.f32.mrf.mxu0
        %v935 = vadd.f32 0.0, %v934
        %936 = vmatmul.f32.gmra.mxu0 %v813
        %v937 = vpop.f32.mrf.mxu0
        %v938 = vadd.f32 0.0, %v937
        %939 = vmatmul.f32.gmra.mxu0 %v816
        %v940 = vpop.f32.mrf.mxu0
        %v941 = vadd.f32 0.0, %v940
        %942 = vmatmul.f32.gmra.mxu0 %v819
        %v943 = vpop.f32.mrf.mxu0
        %v944 = vadd.f32 0.0, %v943
        %945 = vmatmul.f32.gmra.mxu0 %v822
        %v946 = vpop.f32.mrf.mxu0
        %v947 = vadd.f32 0.0, %v946
        %948 = vmatmul.f32.gmra.mxu0 %v825
        %v949 = vpop.f32.mrf.mxu0
        %v950 = vadd.f32 0.0, %v949
        %951 = vmatmul.f32.gmra.mxu0 %v828
        %v952 = vpop.f32.mrf.mxu0
        %v953 = vadd.f32 0.0, %v952
        %954 = vmatmul.f32.gmra.mxu0 %v831
        %v955 = vpop.f32.mrf.mxu0
        %v956 = vadd.f32 0.0, %v955
        %957 = vmatmul.f32.gmra.mxu0 %v834
        %v958 = vpop.f32.mrf.mxu0
        %v959 = vadd.f32 0.0, %v958
        %960 = vmatmul.f32.gmra.mxu0 %v837
        %v961 = vpop.f32.mrf.mxu0
        %v962 = vadd.f32 0.0, %v961
        %963 = vmatmul.f32.gmra.mxu0 %v840
        %v964 = vpop.f32.mrf.mxu0
        %v965 = vadd.f32 0.0, %v964
        %966 = vmatmul.f32.gmra.mxu0 %v843
        %v967 = vpop.f32.mrf.mxu0
        %v968 = vadd.f32 0.0, %v967
        %969 = vmatmul.f32.gmra.mxu0 %v846
        %v970 = vpop.f32.mrf.mxu0
        %v971 = vadd.f32 0.0, %v970
        %972 = vmatmul.f32.gmra.mxu0 %v849
        %v973 = vpop.f32.mrf.mxu0
        %v974 = vadd.f32 0.0, %v973
        %975 = vmatmul.f32.gmra.mxu0 %v852
        %v976 = vpop.f32.mrf.mxu0
        %v977 = vadd.f32 0.0, %v976
        %978 = vmatmul.f32.gmra.mxu0 %v855
        %v979 = vpop.f32.mrf.mxu0
        %v980 = vadd.f32 0.0, %v979
        %981 = vmatmul.f32.gmra.mxu0 %v858
        %v982 = vpop.f32.mrf.mxu0
        %v983 = vadd.f32 0.0, %v982
        %984 = vmatmul.f32.gmra.mxu0 %v861
        %v985 = vpop.f32.mrf.mxu0
        %v986 = vadd.f32 0.0, %v985
        %987 = vmatmul.f32.gmra.mxu0 %v864
        %v988 = vpop.f32.mrf.mxu0
        %v989 = vadd.f32 0.0, %v988
        %990 = vmatmul.f32.gmra.mxu0 %v867
        %v991 = vpop.f32.mrf.mxu0
        %v992 = vadd.f32 0.0, %v991
        %993 = vmatmul.f32.gmra.mxu0 %v870
        %v994 = vpop.f32.mrf.mxu0
        %v995 = vadd.f32 0.0, %v994
        %996 = vmatmul.f32.gmra.mxu0 %v873
        %v997 = vpop.f32.mrf.mxu0
        %v998 = vadd.f32 0.0, %v997
        %999 = vmatmul.f32.gmra.mxu0 %v876
        %v1000 = vpop.f32.mrf.mxu0
        %v1001 = vadd.f32 0.0, %v1000
        %1002 = vmatmul.f32.gmra.mxu0 %v879
        %v1003 = vpop.f32.mrf.mxu0
        %v1004 = vadd.f32 0.0, %v1003
        %1005 = vmatmul.f32.gmra.mxu0 %v882
        %v1006 = vpop.f32.mrf.mxu0
        %v1007 = vadd.f32 0.0, %v1006
        %1008 = vmatmul.f32.gmra.mxu0 %v885
        %v1009 = vpop.f32.mrf.mxu0
        %v1010 = vadd.f32 0.0, %v1009
        %1011 = vmatmul.f32.gmra.mxu0 %v888
        %v1012 = vpop.f32.mrf.mxu0
        %v1013 = vadd.f32 0.0, %v1012
        %1014 = vmatmul.f32.gmra.mxu0 %v891
        %v1015 = vpop.f32.mrf.mxu0
        %v1016 = vadd.f32 0.0, %v1015
        %1017 = vmatmul.f32.gmra.mxu0 %v894
        %v1018 = vpop.f32.mrf.mxu0
        %v1019 = vadd.f32 0.0, %v1018
        %1020 = vmatmul.f32.gmra.mxu0 %v897
        %v1021 = vpop.f32.mrf.mxu0
        %v1022 = vadd.f32 0.0, %v1021
        %1023 = vdwg.mxu0
        %v1024 = vadd.f32 %v644, %v917
        %v1025 = vadd.f32 %v647, %v920
        %v1026 = vadd.f32 %v650, %v923
        %v1027 = vadd.f32 %v653, %v926
        %v1028 = vadd.f32 %v656, %v929
        %v1029 = vadd.f32 %v659, %v932
        %v1030 = vadd.f32 %v662, %v935
        %v1031 = vadd.f32 %v665, %v938
        %v1032 = vadd.f32 %v668, %v941
        %v1033 = vadd.f32 %v671, %v944
        %v1034 = vadd.f32 %v674, %v947
        %v1035 = vadd.f32 %v677, %v950
        %v1036 = vadd.f32 %v680, %v953
        %v1037 = vadd.f32 %v683, %v956
        %v1038 = vadd.f32 %v686, %v959
        %v1039 = vadd.f32 %v689, %v962
        %v1040 = vadd.f32 %v692, %v965
        %v1041 = vadd.f32 %v695, %v968
        %v1042 = vadd.f32 %v698, %v971
        %v1043 = vadd.f32 %v701, %v974
        %v1044 = vadd.f32 %v704, %v977
        %v1045 = vadd.f32 %v707, %v980
        %v1046 = vadd.f32 %v710, %v983
        %v1047 = vadd.f32 %v713, %v986
        %v1048 = vadd.f32 %v716, %v989
        %v1049 = vadd.f32 %v719, %v992
        %v1050 = vadd.f32 %v722, %v995
        %v1051 = vadd.f32 %v725, %v998
        %v1052 = vadd.f32 %v728, %v1001
        %v1053 = vadd.f32 %v731, %v1004
        %v1054 = vadd.f32 %v734, %v1007
        %v1055 = vadd.f32 %v737, %v1010
        %v1056 = vadd.f32 %v740, %v1013
        %v1057 = vadd.f32 %v743, %v1016
        %v1058 = vadd.f32 %v746, %v1019
        %v1059 = vadd.f32 %v749, %v1022
        %s1060 = sadd.s32 %s205, 18
        %s1061 = scalar_lea.vmem %s0, %s1060
        %v1062 = vld [vmem:[%s1061] sm:$0xff]
        %v1063 = vld [vmem:[%s1061 + $0x8] sm:$0xff]
        %v1064 = vld [vmem:[%s1061 + $0x10] sm:$0xff]
        %v1065 = vld [vmem:[%s1061 + $0x18] sm:$0xff]
        %v1066 = vld [vmem:[%s1061 + $0x20] sm:$0xff]
        %v1067 = vld [vmem:[%s1061 + $0x28] sm:$0xff]
        %v1068 = vld [vmem:[%s1061 + $0x30] sm:$0xff]
        %v1069 = vld [vmem:[%s1061 + $0x38] sm:$0xff]
        %v1070 = vld [vmem:[%s1061 + $0x40] sm:$0xff]
        %v1071 = vld [vmem:[%s1061 + $0x48] sm:$0xff]
        %v1072 = vld [vmem:[%s1061 + $0x50] sm:$0xff]
        %v1073 = vld [vmem:[%s1061 + $0x58] sm:$0xff]
        %v1074 = vld [vmem:[%s1061 + $0x60] sm:$0xff]
        %v1075 = vld [vmem:[%s1061 + $0x68] sm:$0xff]
        %v1076 = vld [vmem:[%s1061 + $0x70] sm:$0xff]
        %v1077 = vld [vmem:[%s1061 + $0x78] sm:$0xff]
        %v1078 = vld [vmem:[%s1061 + $0x80] sm:$0xff]
        %v1079 = vld [vmem:[%s1061 + $0x88] sm:$0xff]
        %v1080 = vld [vmem:[%s1061 + $0x90] sm:$0xff]
        %v1081 = vld [vmem:[%s1061 + $0x98] sm:$0xff]
        %v1082 = vld [vmem:[%s1061 + $0xa0] sm:$0xff]
        %v1083 = vld [vmem:[%s1061 + $0xa8] sm:$0xff]
        %v1084 = vld [vmem:[%s1061 + $0xb0] sm:$0xff]
        %v1085 = vld [vmem:[%s1061 + $0xb8] sm:$0xff]
        %v1086 = vld [vmem:[%s1061 + $0xc0] sm:$0xff]
        %v1087 = vld [vmem:[%s1061 + $0xc8] sm:$0xff]
        %v1088 = vld [vmem:[%s1061 + $0xd0] sm:$0xff]
        %v1089 = vld [vmem:[%s1061 + $0xd8] sm:$0xff]
        %v1090 = vld [vmem:[%s1061 + $0xe0] sm:$0xff]
        %v1091 = vld [vmem:[%s1061 + $0xe8] sm:$0xff]
        %v1092 = vld [vmem:[%s1061 + $0xf0] sm:$0xff]
        %v1093 = vld [vmem:[%s1061 + $0xf8] sm:$0xff]
        %v1094 = vld [vmem:[%s1061 + $0x100] sm:$0xff]
        %v1095 = vld [vmem:[%s1061 + $0x108] sm:$0xff]
        %v1096 = vld [vmem:[%s1061 + $0x110] sm:$0xff]
        %v1097 = vld [vmem:[%s1061 + $0x118] sm:$0xff]
        %s1098 = scalar_lea.vmem %s1, 24
        %v1099 = vld [vmem:[%s1098] sm:$0xff]
        %v1101 = vsel %vm284, %v1062, 0
        %v1104 = vsel %vm284, %v1063, 0
        %v1107 = vsel %vm284, %v1064, 0
        %v1110 = vsel %vm284, %v1065, 0
        %v1113 = vsel %vm284, %v1066, 0
        %v1116 = vsel %vm284, %v1067, 0
        %v1119 = vsel %vm284, %v1068, 0
        %v1122 = vsel %vm284, %v1069, 0
        %v1125 = vsel %vm284, %v1070, 0
        %v1128 = vsel %vm284, %v1071, 0
        %v1131 = vsel %vm284, %v1072, 0
        %v1134 = vsel %vm284, %v1073, 0
        %v1137 = vsel %vm284, %v1074, 0
        %v1140 = vsel %vm284, %v1075, 0
        %v1143 = vsel %vm284, %v1076, 0
        %v1146 = vsel %vm284, %v1077, 0
        %v1149 = vsel %vm284, %v1078, 0
        %v1152 = vsel %vm284, %v1079, 0
        %v1155 = vsel %vm284, %v1080, 0
        %v1158 = vsel %vm284, %v1081, 0
        %v1161 = vsel %vm284, %v1082, 0
        %v1164 = vsel %vm284, %v1083, 0
        %v1167 = vsel %vm284, %v1084, 0
        %v1170 = vsel %vm284, %v1085, 0
        %v1173 = vsel %vm284, %v1086, 0
        %v1176 = vsel %vm284, %v1087, 0
        %v1179 = vsel %vm284, %v1088, 0
        %v1182 = vsel %vm284, %v1089, 0
        %v1185 = vsel %vm284, %v1090, 0
        %v1188 = vsel %vm284, %v1091, 0
        %v1191 = vsel %vm284, %v1092, 0
        %v1194 = vsel %vm284, %v1093, 0
        %v1197 = vsel %vm284, %v1094, 0
        %v1200 = vsel %vm284, %v1095, 0
        %v1203 = vsel %vm284, %v1096, 0
        %v1206 = vsel %vm284, %v1097, 0
        %1208 = vmatpush.msra.mxu0 0.0
        %1209 = vmatpush.msra.mxu0 0.0
        %1210 = vmatpush.msra.mxu0 0.0
        %1211 = vmatpush.msra.mxu0 0.0
        %1212 = vmatpush.msra.mxu0 0.0
        %1213 = vmatpush.msra.mxu0 0.0
        %1214 = vmatpush.msra.mxu0 0.0
        %1215 = vmatpush.msra.mxu0 0.0
        %1216 = vmatpush.msra.mxu0 0.0
        %1217 = vmatpush.msra.mxu0 0.0
        %1218 = vmatpush.msra.mxu0 0.0
        %1219 = vmatpush.msra.mxu0 0.0
        %1220 = vmatpush.msra.mxu0 0.0
        %1221 = vmatpush.msra.mxu0 0.0
        %1222 = vmatpush.msra.mxu0 0.0
        %1223 = vmatpush.msra.mxu0 %v1099
        %1224 = vmatmul.f32.gmra.mxu0 %v1101
        %v1225 = vpop.f32.mrf.mxu0
        %v1226 = vadd.f32 0.0, %v1225
        %1227 = vmatmul.f32.gmra.mxu0 %v1104
        %v1228 = vpop.f32.mrf.mxu0
        %v1229 = vadd.f32 0.0, %v1228
        %1230 = vmatmul.f32.gmra.mxu0 %v1107
        %v1231 = vpop.f32.mrf.mxu0
        %v1232 = vadd.f32 0.0, %v1231
        %1233 = vmatmul.f32.gmra.mxu0 %v1110
        %v1234 = vpop.f32.mrf.mxu0
        %v1235 = vadd.f32 0.0, %v1234
        %1236 = vmatmul.f32.gmra.mxu0 %v1113
        %v1237 = vpop.f32.mrf.mxu0
        %v1238 = vadd.f32 0.0, %v1237
        %1239 = vmatmul.f32.gmra.mxu0 %v1116
        %v1240 = vpop.f32.mrf.mxu0
        %v1241 = vadd.f32 0.0, %v1240
        %1242 = vmatmul.f32.gmra.mxu0 %v1119
        %v1243 = vpop.f32.mrf.mxu0
        %v1244 = vadd.f32 0.0, %v1243
        %1245 = vmatmul.f32.gmra.mxu0 %v1122
        %v1246 = vpop.f32.mrf.mxu0
        %v1247 = vadd.f32 0.0, %v1246
        %1248 = vmatmul.f32.gmra.mxu0 %v1125
        %v1249 = vpop.f32.mrf.mxu0
        %v1250 = vadd.f32 0.0, %v1249
        %1251 = vmatmul.f32.gmra.mxu0 %v1128
        %v1252 = vpop.f32.mrf.mxu0
        %v1253 = vadd.f32 0.0, %v1252
        %1254 = vmatmul.f32.gmra.mxu0 %v1131
        %v1255 = vpop.f32.mrf.mxu0
        %v1256 = vadd.f32 0.0, %v1255
        %1257 = vmatmul.f32.gmra.mxu0 %v1134
        %v1258 = vpop.f32.mrf.mxu0
        %v1259 = vadd.f32 0.0, %v1258
        %1260 = vmatmul.f32.gmra.mxu0 %v1137
        %v1261 = vpop.f32.mrf.mxu0
        %v1262 = vadd.f32 0.0, %v1261
        %1263 = vmatmul.f32.gmra.mxu0 %v1140
        %v1264 = vpop.f32.mrf.mxu0
        %v1265 = vadd.f32 0.0, %v1264
        %1266 = vmatmul.f32.gmra.mxu0 %v1143
        %v1267 = vpop.f32.mrf.mxu0
        %v1268 = vadd.f32 0.0, %v1267
        %1269 = vmatmul.f32.gmra.mxu0 %v1146
        %v1270 = vpop.f32.mrf.mxu0
        %v1271 = vadd.f32 0.0, %v1270
        %1272 = vmatmul.f32.gmra.mxu0 %v1149
        %v1273 = vpop.f32.mrf.mxu0
        %v1274 = vadd.f32 0.0, %v1273
        %1275 = vmatmul.f32.gmra.mxu0 %v1152
        %v1276 = vpop.f32.mrf.mxu0
        %v1277 = vadd.f32 0.0, %v1276
        %1278 = vmatmul.f32.gmra.mxu0 %v1155
        %v1279 = vpop.f32.mrf.mxu0
        %v1280 = vadd.f32 0.0, %v1279
        %1281 = vmatmul.f32.gmra.mxu0 %v1158
        %v1282 = vpop.f32.mrf.mxu0
        %v1283 = vadd.f32 0.0, %v1282
        %1284 = vmatmul.f32.gmra.mxu0 %v1161
        %v1285 = vpop.f32.mrf.mxu0
        %v1286 = vadd.f32 0.0, %v1285
        %1287 = vmatmul.f32.gmra.mxu0 %v1164
        %v1288 = vpop.f32.mrf.mxu0
        %v1289 = vadd.f32 0.0, %v1288
        %1290 = vmatmul.f32.gmra.mxu0 %v1167
        %v1291 = vpop.f32.mrf.mxu0
        %v1292 = vadd.f32 0.0, %v1291
        %1293 = vmatmul.f32.gmra.mxu0 %v1170
        %v1294 = vpop.f32.mrf.mxu0
        %v1295 = vadd.f32 0.0, %v1294
        %1296 = vmatmul.f32.gmra.mxu0 %v1173
        %v1297 = vpop.f32.mrf.mxu0
        %v1298 = vadd.f32 0.0, %v1297
        %1299 = vmatmul.f32.gmra.mxu0 %v1176
        %v1300 = vpop.f32.mrf.mxu0
        %v1301 = vadd.f32 0.0, %v1300
        %1302 = vmatmul.f32.gmra.mxu0 %v1179
        %v1303 = vpop.f32.mrf.mxu0
        %v1304 = vadd.f32 0.0, %v1303
        %1305 = vmatmul.f32.gmra.mxu0 %v1182
        %v1306 = vpop.f32.mrf.mxu0
        %v1307 = vadd.f32 0.0, %v1306
        %1308 = vmatmul.f32.gmra.mxu0 %v1185
        %v1309 = vpop.f32.mrf.mxu0
        %v1310 = vadd.f32 0.0, %v1309
        %1311 = vmatmul.f32.gmra.mxu0 %v1188
        %v1312 = vpop.f32.mrf.mxu0
        %v1313 = vadd.f32 0.0, %v1312
        %1314 = vmatmul.f32.gmra.mxu0 %v1191
        %v1315 = vpop.f32.mrf.mxu0
        %v1316 = vadd.f32 0.0, %v1315
        %1317 = vmatmul.f32.gmra.mxu0 %v1194
        %v1318 = vpop.f32.mrf.mxu0
        %v1319 = vadd.f32 0.0, %v1318
        %1320 = vmatmul.f32.gmra.mxu0 %v1197
        %v1321 = vpop.f32.mrf.mxu0
        %v1322 = vadd.f32 0.0, %v1321
        %1323 = vmatmul.f32.gmra.mxu0 %v1200
        %v1324 = vpop.f32.mrf.mxu0
        %v1325 = vadd.f32 0.0, %v1324
        %1326 = vmatmul.f32.gmra.mxu0 %v1203
        %v1327 = vpop.f32.mrf.mxu0
        %v1328 = vadd.f32 0.0, %v1327
        %1329 = vmatmul.f32.gmra.mxu0 %v1206
        %v1330 = vpop.f32.mrf.mxu0
        %v1331 = vadd.f32 0.0, %v1330
        %1332 = vdwg.mxu0
        %v1333 = vadd.f32 %v1024, %v1226
        %v1334 = vadd.f32 %v1025, %v1229
        %v1335 = vadd.f32 %v1026, %v1232
        %v1336 = vadd.f32 %v1027, %v1235
        %v1337 = vadd.f32 %v1028, %v1238
        %v1338 = vadd.f32 %v1029, %v1241
        %v1339 = vadd.f32 %v1030, %v1244
        %v1340 = vadd.f32 %v1031, %v1247
        %v1341 = vadd.f32 %v1032, %v1250
        %v1342 = vadd.f32 %v1033, %v1253
        %v1343 = vadd.f32 %v1034, %v1256
        %v1344 = vadd.f32 %v1035, %v1259
        %v1345 = vadd.f32 %v1036, %v1262
        %v1346 = vadd.f32 %v1037, %v1265
        %v1347 = vadd.f32 %v1038, %v1268
        %v1348 = vadd.f32 %v1039, %v1271
        %v1349 = vadd.f32 %v1040, %v1274
        %v1350 = vadd.f32 %v1041, %v1277
        %v1351 = vadd.f32 %v1042, %v1280
        %v1352 = vadd.f32 %v1043, %v1283
        %v1353 = vadd.f32 %v1044, %v1286
        %v1354 = vadd.f32 %v1045, %v1289
        %v1355 = vadd.f32 %v1046, %v1292
        %v1356 = vadd.f32 %v1047, %v1295
        %v1357 = vadd.f32 %v1048, %v1298
        %v1358 = vadd.f32 %v1049, %v1301
        %v1359 = vadd.f32 %v1050, %v1304
        %v1360 = vadd.f32 %v1051, %v1307
        %v1361 = vadd.f32 %v1052, %v1310
        %v1362 = vadd.f32 %v1053, %v1313
        %v1363 = vadd.f32 %v1054, %v1316
        %v1364 = vadd.f32 %v1055, %v1319
        %v1365 = vadd.f32 %v1056, %v1322
        %v1366 = vadd.f32 %v1057, %v1325
        %v1367 = vadd.f32 %v1058, %v1328
        %v1368 = vadd.f32 %v1059, %v1331
        %s1369 = sadd.s32 %s205, 19
        %s1370 = scalar_lea.vmem %s0, %s1369
        %v1371 = vld [vmem:[%s1370] sm:$0xff]
        %v1372 = vld [vmem:[%s1370 + $0x8] sm:$0xff]
        %v1373 = vld [vmem:[%s1370 + $0x10] sm:$0xff]
        %v1374 = vld [vmem:[%s1370 + $0x18] sm:$0xff]
        %v1375 = vld [vmem:[%s1370 + $0x20] sm:$0xff]
        %v1376 = vld [vmem:[%s1370 + $0x28] sm:$0xff]
        %v1377 = vld [vmem:[%s1370 + $0x30] sm:$0xff]
        %v1378 = vld [vmem:[%s1370 + $0x38] sm:$0xff]
        %v1379 = vld [vmem:[%s1370 + $0x40] sm:$0xff]
        %v1380 = vld [vmem:[%s1370 + $0x48] sm:$0xff]
        %v1381 = vld [vmem:[%s1370 + $0x50] sm:$0xff]
        %v1382 = vld [vmem:[%s1370 + $0x58] sm:$0xff]
        %v1383 = vld [vmem:[%s1370 + $0x60] sm:$0xff]
        %v1384 = vld [vmem:[%s1370 + $0x68] sm:$0xff]
        %v1385 = vld [vmem:[%s1370 + $0x70] sm:$0xff]
        %v1386 = vld [vmem:[%s1370 + $0x78] sm:$0xff]
        %v1387 = vld [vmem:[%s1370 + $0x80] sm:$0xff]
        %v1388 = vld [vmem:[%s1370 + $0x88] sm:$0xff]
        %v1389 = vld [vmem:[%s1370 + $0x90] sm:$0xff]
        %v1390 = vld [vmem:[%s1370 + $0x98] sm:$0xff]
        %v1391 = vld [vmem:[%s1370 + $0xa0] sm:$0xff]
        %v1392 = vld [vmem:[%s1370 + $0xa8] sm:$0xff]
        %v1393 = vld [vmem:[%s1370 + $0xb0] sm:$0xff]
        %v1394 = vld [vmem:[%s1370 + $0xb8] sm:$0xff]
        %v1395 = vld [vmem:[%s1370 + $0xc0] sm:$0xff]
        %v1396 = vld [vmem:[%s1370 + $0xc8] sm:$0xff]
        %v1397 = vld [vmem:[%s1370 + $0xd0] sm:$0xff]
        %v1398 = vld [vmem:[%s1370 + $0xd8] sm:$0xff]
        %v1399 = vld [vmem:[%s1370 + $0xe0] sm:$0xff]
        %v1400 = vld [vmem:[%s1370 + $0xe8] sm:$0xff]
        %v1401 = vld [vmem:[%s1370 + $0xf0] sm:$0xff]
        %v1402 = vld [vmem:[%s1370 + $0xf8] sm:$0xff]
        %v1403 = vld [vmem:[%s1370 + $0x100] sm:$0xff]
        %v1404 = vld [vmem:[%s1370 + $0x108] sm:$0xff]
        %v1405 = vld [vmem:[%s1370 + $0x110] sm:$0xff]
        %v1406 = vld [vmem:[%s1370 + $0x118] sm:$0xff]
        %s1407 = scalar_lea.vmem %s1, 32
        %v1408 = vld [vmem:[%s1407] sm:$0xff]
        %v1410 = vsel %vm284, %v1371, 0
        %v1413 = vsel %vm284, %v1372, 0
        %v1416 = vsel %vm284, %v1373, 0
        %v1419 = vsel %vm284, %v1374, 0
        %v1422 = vsel %vm284, %v1375, 0
        %v1425 = vsel %vm284, %v1376, 0
        %v1428 = vsel %vm284, %v1377, 0
        %v1431 = vsel %vm284, %v1378, 0
        %v1434 = vsel %vm284, %v1379, 0
        %v1437 = vsel %vm284, %v1380, 0
        %v1440 = vsel %vm284, %v1381, 0
        %v1443 = vsel %vm284, %v1382, 0
        %v1446 = vsel %vm284, %v1383, 0
        %v1449 = vsel %vm284, %v1384, 0
        %v1452 = vsel %vm284, %v1385, 0
        %v1455 = vsel %vm284, %v1386, 0
        %v1458 = vsel %vm284, %v1387, 0
        %v1461 = vsel %vm284, %v1388, 0
        %v1464 = vsel %vm284, %v1389, 0
        %v1467 = vsel %vm284, %v1390, 0
        %v1470 = vsel %vm284, %v1391, 0
        %v1473 = vsel %vm284, %v1392, 0
        %v1476 = vsel %vm284, %v1393, 0
        %v1479 = vsel %vm284, %v1394, 0
        %v1482 = vsel %vm284, %v1395, 0
        %v1485 = vsel %vm284, %v1396, 0
        %v1488 = vsel %vm284, %v1397, 0
        %v1491 = vsel %vm284, %v1398, 0
        %v1494 = vsel %vm284, %v1399, 0
        %v1497 = vsel %vm284, %v1400, 0
        %v1500 = vsel %vm284, %v1401, 0
        %v1503 = vsel %vm284, %v1402, 0
        %v1506 = vsel %vm284, %v1403, 0
        %v1509 = vsel %vm284, %v1404, 0
        %v1512 = vsel %vm284, %v1405, 0
        %v1515 = vsel %vm284, %v1406, 0
        %1517 = vmatpush.msra.mxu0 0.0
        %1518 = vmatpush.msra.mxu0 0.0
        %1519 = vmatpush.msra.mxu0 0.0
        %1520 = vmatpush.msra.mxu0 0.0
        %1521 = vmatpush.msra.mxu0 0.0
        %1522 = vmatpush.msra.mxu0 0.0
        %1523 = vmatpush.msra.mxu0 0.0
        %1524 = vmatpush.msra.mxu0 0.0
        %1525 = vmatpush.msra.mxu0 0.0
        %1526 = vmatpush.msra.mxu0 0.0
        %1527 = vmatpush.msra.mxu0 0.0
        %1528 = vmatpush.msra.mxu0 0.0
        %1529 = vmatpush.msra.mxu0 0.0
        %1530 = vmatpush.msra.mxu0 0.0
        %1531 = vmatpush.msra.mxu0 0.0
        %1532 = vmatpush.msra.mxu0 %v1408
        %1533 = vmatmul.f32.gmra.mxu0 %v1410
        %v1534 = vpop.f32.mrf.mxu0
        %v1535 = vadd.f32 0.0, %v1534
        %1536 = vmatmul.f32.gmra.mxu0 %v1413
        %v1537 = vpop.f32.mrf.mxu0
        %v1538 = vadd.f32 0.0, %v1537
        %1539 = vmatmul.f32.gmra.mxu0 %v1416
        %v1540 = vpop.f32.mrf.mxu0
        %v1541 = vadd.f32 0.0, %v1540
        %1542 = vmatmul.f32.gmra.mxu0 %v1419
        %v1543 = vpop.f32.mrf.mxu0
        %v1544 = vadd.f32 0.0, %v1543
        %1545 = vmatmul.f32.gmra.mxu0 %v1422
        %v1546 = vpop.f32.mrf.mxu0
        %v1547 = vadd.f32 0.0, %v1546
        %1548 = vmatmul.f32.gmra.mxu0 %v1425
        %v1549 = vpop.f32.mrf.mxu0
        %v1550 = vadd.f32 0.0, %v1549
        %1551 = vmatmul.f32.gmra.mxu0 %v1428
        %v1552 = vpop.f32.mrf.mxu0
        %v1553 = vadd.f32 0.0, %v1552
        %1554 = vmatmul.f32.gmra.mxu0 %v1431
        %v1555 = vpop.f32.mrf.mxu0
        %v1556 = vadd.f32 0.0, %v1555
        %1557 = vmatmul.f32.gmra.mxu0 %v1434
        %v1558 = vpop.f32.mrf.mxu0
        %v1559 = vadd.f32 0.0, %v1558
        %1560 = vmatmul.f32.gmra.mxu0 %v1437
        %v1561 = vpop.f32.mrf.mxu0
        %v1562 = vadd.f32 0.0, %v1561
        %1563 = vmatmul.f32.gmra.mxu0 %v1440
        %v1564 = vpop.f32.mrf.mxu0
        %v1565 = vadd.f32 0.0, %v1564
        %1566 = vmatmul.f32.gmra.mxu0 %v1443
        %v1567 = vpop.f32.mrf.mxu0
        %v1568 = vadd.f32 0.0, %v1567
        %1569 = vmatmul.f32.gmra.mxu0 %v1446
        %v1570 = vpop.f32.mrf.mxu0
        %v1571 = vadd.f32 0.0, %v1570
        %1572 = vmatmul.f32.gmra.mxu0 %v1449
        %v1573 = vpop.f32.mrf.mxu0
        %v1574 = vadd.f32 0.0, %v1573
        %1575 = vmatmul.f32.gmra.mxu0 %v1452
        %v1576 = vpop.f32.mrf.mxu0
        %v1577 = vadd.f32 0.0, %v1576
        %1578 = vmatmul.f32.gmra.mxu0 %v1455
        %v1579 = vpop.f32.mrf.mxu0
        %v1580 = vadd.f32 0.0, %v1579
        %1581 = vmatmul.f32.gmra.mxu0 %v1458
        %v1582 = vpop.f32.mrf.mxu0
        %v1583 = vadd.f32 0.0, %v1582
        %1584 = vmatmul.f32.gmra.mxu0 %v1461
        %v1585 = vpop.f32.mrf.mxu0
        %v1586 = vadd.f32 0.0, %v1585
        %1587 = vmatmul.f32.gmra.mxu0 %v1464
        %v1588 = vpop.f32.mrf.mxu0
        %v1589 = vadd.f32 0.0, %v1588
        %1590 = vmatmul.f32.gmra.mxu0 %v1467
        %v1591 = vpop.f32.mrf.mxu0
        %v1592 = vadd.f32 0.0, %v1591
        %1593 = vmatmul.f32.gmra.mxu0 %v1470
        %v1594 = vpop.f32.mrf.mxu0
        %v1595 = vadd.f32 0.0, %v1594
        %1596 = vmatmul.f32.gmra.mxu0 %v1473
        %v1597 = vpop.f32.mrf.mxu0
        %v1598 = vadd.f32 0.0, %v1597
        %1599 = vmatmul.f32.gmra.mxu0 %v1476
        %v1600 = vpop.f32.mrf.mxu0
        %v1601 = vadd.f32 0.0, %v1600
        %1602 = vmatmul.f32.gmra.mxu0 %v1479
        %v1603 = vpop.f32.mrf.mxu0
        %v1604 = vadd.f32 0.0, %v1603
        %1605 = vmatmul.f32.gmra.mxu0 %v1482
        %v1606 = vpop.f32.mrf.mxu0
        %v1607 = vadd.f32 0.0, %v1606
        %1608 = vmatmul.f32.gmra.mxu0 %v1485
        %v1609 = vpop.f32.mrf.mxu0
        %v1610 = vadd.f32 0.0, %v1609
        %1611 = vmatmul.f32.gmra.mxu0 %v1488
        %v1612 = vpop.f32.mrf.mxu0
        %v1613 = vadd.f32 0.0, %v1612
        %1614 = vmatmul.f32.gmra.mxu0 %v1491
        %v1615 = vpop.f32.mrf.mxu0
        %v1616 = vadd.f32 0.0, %v1615
        %1617 = vmatmul.f32.gmra.mxu0 %v1494
        %v1618 = vpop.f32.mrf.mxu0
        %v1619 = vadd.f32 0.0, %v1618
        %1620 = vmatmul.f32.gmra.mxu0 %v1497
        %v1621 = vpop.f32.mrf.mxu0
        %v1622 = vadd.f32 0.0, %v1621
        %1623 = vmatmul.f32.gmra.mxu0 %v1500
        %v1624 = vpop.f32.mrf.mxu0
        %v1625 = vadd.f32 0.0, %v1624
        %1626 = vmatmul.f32.gmra.mxu0 %v1503
        %v1627 = vpop.f32.mrf.mxu0
        %v1628 = vadd.f32 0.0, %v1627
        %1629 = vmatmul.f32.gmra.mxu0 %v1506
        %v1630 = vpop.f32.mrf.mxu0
        %v1631 = vadd.f32 0.0, %v1630
        %1632 = vmatmul.f32.gmra.mxu0 %v1509
        %v1633 = vpop.f32.mrf.mxu0
        %v1634 = vadd.f32 0.0, %v1633
        %1635 = vmatmul.f32.gmra.mxu0 %v1512
        %v1636 = vpop.f32.mrf.mxu0
        %v1637 = vadd.f32 0.0, %v1636
        %1638 = vmatmul.f32.gmra.mxu0 %v1515
        %v1639 = vpop.f32.mrf.mxu0
        %v1640 = vadd.f32 0.0, %v1639
        %1641 = vdwg.mxu0
        %v1642 = vadd.f32 %v1333, %v1535
        %v1643 = vadd.f32 %v1334, %v1538
        %v1644 = vadd.f32 %v1335, %v1541
        %v1645 = vadd.f32 %v1336, %v1544
        %v1646 = vadd.f32 %v1337, %v1547
        %v1647 = vadd.f32 %v1338, %v1550
        %v1648 = vadd.f32 %v1339, %v1553
        %v1649 = vadd.f32 %v1340, %v1556
        %v1650 = vadd.f32 %v1341, %v1559
        %v1651 = vadd.f32 %v1342, %v1562
        %v1652 = vadd.f32 %v1343, %v1565
        %v1653 = vadd.f32 %v1344, %v1568
        %v1654 = vadd.f32 %v1345, %v1571
        %v1655 = vadd.f32 %v1346, %v1574
        %v1656 = vadd.f32 %v1347, %v1577
        %v1657 = vadd.f32 %v1348, %v1580
        %v1658 = vadd.f32 %v1349, %v1583
        %v1659 = vadd.f32 %v1350, %v1586
        %v1660 = vadd.f32 %v1351, %v1589
        %v1661 = vadd.f32 %v1352, %v1592
        %v1662 = vadd.f32 %v1353, %v1595
        %v1663 = vadd.f32 %v1354, %v1598
        %v1664 = vadd.f32 %v1355, %v1601
        %v1665 = vadd.f32 %v1356, %v1604
        %v1666 = vadd.f32 %v1357, %v1607
        %v1667 = vadd.f32 %v1358, %v1610
        %v1668 = vadd.f32 %v1359, %v1613
        %v1669 = vadd.f32 %v1360, %v1616
        %v1670 = vadd.f32 %v1361, %v1619
        %v1671 = vadd.f32 %v1362, %v1622
        %v1672 = vadd.f32 %v1363, %v1625
        %v1673 = vadd.f32 %v1364, %v1628
        %v1674 = vadd.f32 %v1365, %v1631
        %v1675 = vadd.f32 %v1366, %v1634
        %v1676 = vadd.f32 %v1367, %v1637
        %v1677 = vadd.f32 %v1368, %v1640
        %s1678 = sadd.s32 %s205, 20
        %s1679 = scalar_lea.vmem %s0, %s1678
        %v1680 = vld [vmem:[%s1679] sm:$0xff]
        %v1681 = vld [vmem:[%s1679 + $0x8] sm:$0xff]
        %v1682 = vld [vmem:[%s1679 + $0x10] sm:$0xff]
        %v1683 = vld [vmem:[%s1679 + $0x18] sm:$0xff]
        %v1684 = vld [vmem:[%s1679 + $0x20] sm:$0xff]
        %v1685 = vld [vmem:[%s1679 + $0x28] sm:$0xff]
        %v1686 = vld [vmem:[%s1679 + $0x30] sm:$0xff]
        %v1687 = vld [vmem:[%s1679 + $0x38] sm:$0xff]
        %v1688 = vld [vmem:[%s1679 + $0x40] sm:$0xff]
        %v1689 = vld [vmem:[%s1679 + $0x48] sm:$0xff]
        %v1690 = vld [vmem:[%s1679 + $0x50] sm:$0xff]
        %v1691 = vld [vmem:[%s1679 + $0x58] sm:$0xff]
        %v1692 = vld [vmem:[%s1679 + $0x60] sm:$0xff]
        %v1693 = vld [vmem:[%s1679 + $0x68] sm:$0xff]
        %v1694 = vld [vmem:[%s1679 + $0x70] sm:$0xff]
        %v1695 = vld [vmem:[%s1679 + $0x78] sm:$0xff]
        %v1696 = vld [vmem:[%s1679 + $0x80] sm:$0xff]
        %v1697 = vld [vmem:[%s1679 + $0x88] sm:$0xff]
        %v1698 = vld [vmem:[%s1679 + $0x90] sm:$0xff]
        %v1699 = vld [vmem:[%s1679 + $0x98] sm:$0xff]
        %v1700 = vld [vmem:[%s1679 + $0xa0] sm:$0xff]
        %v1701 = vld [vmem:[%s1679 + $0xa8] sm:$0xff]
        %v1702 = vld [vmem:[%s1679 + $0xb0] sm:$0xff]
        %v1703 = vld [vmem:[%s1679 + $0xb8] sm:$0xff]
        %v1704 = vld [vmem:[%s1679 + $0xc0] sm:$0xff]
        %v1705 = vld [vmem:[%s1679 + $0xc8] sm:$0xff]
        %v1706 = vld [vmem:[%s1679 + $0xd0] sm:$0xff]
        %v1707 = vld [vmem:[%s1679 + $0xd8] sm:$0xff]
        %v1708 = vld [vmem:[%s1679 + $0xe0] sm:$0xff]
        %v1709 = vld [vmem:[%s1679 + $0xe8] sm:$0xff]
        %v1710 = vld [vmem:[%s1679 + $0xf0] sm:$0xff]
        %v1711 = vld [vmem:[%s1679 + $0xf8] sm:$0xff]
        %v1712 = vld [vmem:[%s1679 + $0x100] sm:$0xff]
        %v1713 = vld [vmem:[%s1679 + $0x108] sm:$0xff]
        %v1714 = vld [vmem:[%s1679 + $0x110] sm:$0xff]
        %v1715 = vld [vmem:[%s1679 + $0x118] sm:$0xff]
        %s1716 = scalar_lea.vmem %s1, 40
        %v1717 = vld [vmem:[%s1716] sm:$0xff]
        %v1719 = vsel %vm284, %v1680, 0
        %v1722 = vsel %vm284, %v1681, 0
        %v1725 = vsel %vm284, %v1682, 0
        %v1728 = vsel %vm284, %v1683, 0
        %v1731 = vsel %vm284, %v1684, 0
        %v1734 = vsel %vm284, %v1685, 0
        %v1737 = vsel %vm284, %v1686, 0
        %v1740 = vsel %vm284, %v1687, 0
        %v1743 = vsel %vm284, %v1688, 0
        %v1746 = vsel %vm284, %v1689, 0
        %v1749 = vsel %vm284, %v1690, 0
        %v1752 = vsel %vm284, %v1691, 0
        %v1755 = vsel %vm284, %v1692, 0
        %v1758 = vsel %vm284, %v1693, 0
        %v1761 = vsel %vm284, %v1694, 0
        %v1764 = vsel %vm284, %v1695, 0
        %v1767 = vsel %vm284, %v1696, 0
        %v1770 = vsel %vm284, %v1697, 0
        %v1773 = vsel %vm284, %v1698, 0
        %v1776 = vsel %vm284, %v1699, 0
        %v1779 = vsel %vm284, %v1700, 0
        %v1782 = vsel %vm284, %v1701, 0
        %v1785 = vsel %vm284, %v1702, 0
        %v1788 = vsel %vm284, %v1703, 0
        %v1791 = vsel %vm284, %v1704, 0
        %v1794 = vsel %vm284, %v1705, 0
        %v1797 = vsel %vm284, %v1706, 0
        %v1800 = vsel %vm284, %v1707, 0
        %v1803 = vsel %vm284, %v1708, 0
        %v1806 = vsel %vm284, %v1709, 0
        %v1809 = vsel %vm284, %v1710, 0
        %v1812 = vsel %vm284, %v1711, 0
        %v1815 = vsel %vm284, %v1712, 0
        %v1818 = vsel %vm284, %v1713, 0
        %v1821 = vsel %vm284, %v1714, 0
        %v1824 = vsel %vm284, %v1715, 0
        %1826 = vmatpush.msra.mxu0 0.0
        %1827 = vmatpush.msra.mxu0 0.0
        %1828 = vmatpush.msra.mxu0 0.0
        %1829 = vmatpush.msra.mxu0 0.0
        %1830 = vmatpush.msra.mxu0 0.0
        %1831 = vmatpush.msra.mxu0 0.0
        %1832 = vmatpush.msra.mxu0 0.0
        %1833 = vmatpush.msra.mxu0 0.0
        %1834 = vmatpush.msra.mxu0 0.0
        %1835 = vmatpush.msra.mxu0 0.0
        %1836 = vmatpush.msra.mxu0 0.0
        %1837 = vmatpush.msra.mxu0 0.0
        %1838 = vmatpush.msra.mxu0 0.0
        %1839 = vmatpush.msra.mxu0 0.0
        %1840 = vmatpush.msra.mxu0 0.0
        %1841 = vmatpush.msra.mxu0 %v1717
        %1842 = vmatmul.f32.gmra.mxu0 %v1719
        %v1843 = vpop.f32.mrf.mxu0
        %v1844 = vadd.f32 0.0, %v1843
        %1845 = vmatmul.f32.gmra.mxu0 %v1722
        %v1846 = vpop.f32.mrf.mxu0
        %v1847 = vadd.f32 0.0, %v1846
        %1848 = vmatmul.f32.gmra.mxu0 %v1725
        %v1849 = vpop.f32.mrf.mxu0
        %v1850 = vadd.f32 0.0, %v1849
        %1851 = vmatmul.f32.gmra.mxu0 %v1728
        %v1852 = vpop.f32.mrf.mxu0
        %v1853 = vadd.f32 0.0, %v1852
        %1854 = vmatmul.f32.gmra.mxu0 %v1731
        %v1855 = vpop.f32.mrf.mxu0
        %v1856 = vadd.f32 0.0, %v1855
        %1857 = vmatmul.f32.gmra.mxu0 %v1734
        %v1858 = vpop.f32.mrf.mxu0
        %v1859 = vadd.f32 0.0, %v1858
        %1860 = vmatmul.f32.gmra.mxu0 %v1737
        %v1861 = vpop.f32.mrf.mxu0
        %v1862 = vadd.f32 0.0, %v1861
        %1863 = vmatmul.f32.gmra.mxu0 %v1740
        %v1864 = vpop.f32.mrf.mxu0
        %v1865 = vadd.f32 0.0, %v1864
        %1866 = vmatmul.f32.gmra.mxu0 %v1743
        %v1867 = vpop.f32.mrf.mxu0
        %v1868 = vadd.f32 0.0, %v1867
        %1869 = vmatmul.f32.gmra.mxu0 %v1746
        %v1870 = vpop.f32.mrf.mxu0
        %v1871 = vadd.f32 0.0, %v1870
        %1872 = vmatmul.f32.gmra.mxu0 %v1749
        %v1873 = vpop.f32.mrf.mxu0
        %v1874 = vadd.f32 0.0, %v1873
        %1875 = vmatmul.f32.gmra.mxu0 %v1752
        %v1876 = vpop.f32.mrf.mxu0
        %v1877 = vadd.f32 0.0, %v1876
        %1878 = vmatmul.f32.gmra.mxu0 %v1755
        %v1879 = vpop.f32.mrf.mxu0
        %v1880 = vadd.f32 0.0, %v1879
        %1881 = vmatmul.f32.gmra.mxu0 %v1758
        %v1882 = vpop.f32.mrf.mxu0
        %v1883 = vadd.f32 0.0, %v1882
        %1884 = vmatmul.f32.gmra.mxu0 %v1761
        %v1885 = vpop.f32.mrf.mxu0
        %v1886 = vadd.f32 0.0, %v1885
        %1887 = vmatmul.f32.gmra.mxu0 %v1764
        %v1888 = vpop.f32.mrf.mxu0
        %v1889 = vadd.f32 0.0, %v1888
        %1890 = vmatmul.f32.gmra.mxu0 %v1767
        %v1891 = vpop.f32.mrf.mxu0
        %v1892 = vadd.f32 0.0, %v1891
        %1893 = vmatmul.f32.gmra.mxu0 %v1770
        %v1894 = vpop.f32.mrf.mxu0
        %v1895 = vadd.f32 0.0, %v1894
        %1896 = vmatmul.f32.gmra.mxu0 %v1773
        %v1897 = vpop.f32.mrf.mxu0
        %v1898 = vadd.f32 0.0, %v1897
        %1899 = vmatmul.f32.gmra.mxu0 %v1776
        %v1900 = vpop.f32.mrf.mxu0
        %v1901 = vadd.f32 0.0, %v1900
        %1902 = vmatmul.f32.gmra.mxu0 %v1779
        %v1903 = vpop.f32.mrf.mxu0
        %v1904 = vadd.f32 0.0, %v1903
        %1905 = vmatmul.f32.gmra.mxu0 %v1782
        %v1906 = vpop.f32.mrf.mxu0
        %v1907 = vadd.f32 0.0, %v1906
        %1908 = vmatmul.f32.gmra.mxu0 %v1785
        %v1909 = vpop.f32.mrf.mxu0
        %v1910 = vadd.f32 0.0, %v1909
        %1911 = vmatmul.f32.gmra.mxu0 %v1788
        %v1912 = vpop.f32.mrf.mxu0
        %v1913 = vadd.f32 0.0, %v1912
        %1914 = vmatmul.f32.gmra.mxu0 %v1791
        %v1915 = vpop.f32.mrf.mxu0
        %v1916 = vadd.f32 0.0, %v1915
        %1917 = vmatmul.f32.gmra.mxu0 %v1794
        %v1918 = vpop.f32.mrf.mxu0
        %v1919 = vadd.f32 0.0, %v1918
        %1920 = vmatmul.f32.gmra.mxu0 %v1797
        %v1921 = vpop.f32.mrf.mxu0
        %v1922 = vadd.f32 0.0, %v1921
        %1923 = vmatmul.f32.gmra.mxu0 %v1800
        %v1924 = vpop.f32.mrf.mxu0
        %v1925 = vadd.f32 0.0, %v1924
        %1926 = vmatmul.f32.gmra.mxu0 %v1803
        %v1927 = vpop.f32.mrf.mxu0
        %v1928 = vadd.f32 0.0, %v1927
        %1929 = vmatmul.f32.gmra.mxu0 %v1806
        %v1930 = vpop.f32.mrf.mxu0
        %v1931 = vadd.f32 0.0, %v1930
        %1932 = vmatmul.f32.gmra.mxu0 %v1809
        %v1933 = vpop.f32.mrf.mxu0
        %v1934 = vadd.f32 0.0, %v1933
        %1935 = vmatmul.f32.gmra.mxu0 %v1812
        %v1936 = vpop.f32.mrf.mxu0
        %v1937 = vadd.f32 0.0, %v1936
        %1938 = vmatmul.f32.gmra.mxu0 %v1815
        %v1939 = vpop.f32.mrf.mxu0
        %v1940 = vadd.f32 0.0, %v1939
        %1941 = vmatmul.f32.gmra.mxu0 %v1818
        %v1942 = vpop.f32.mrf.mxu0
        %v1943 = vadd.f32 0.0, %v1942
        %1944 = vmatmul.f32.gmra.mxu0 %v1821
        %v1945 = vpop.f32.mrf.mxu0
        %v1946 = vadd.f32 0.0, %v1945
        %1947 = vmatmul.f32.gmra.mxu0 %v1824
        %v1948 = vpop.f32.mrf.mxu0
        %v1949 = vadd.f32 0.0, %v1948
        %1950 = vdwg.mxu0
        %v1951 = vadd.f32 %v1642, %v1844
        %v1952 = vadd.f32 %v1643, %v1847
        %v1953 = vadd.f32 %v1644, %v1850
        %v1954 = vadd.f32 %v1645, %v1853
        %v1955 = vadd.f32 %v1646, %v1856
        %v1956 = vadd.f32 %v1647, %v1859
        %v1957 = vadd.f32 %v1648, %v1862
        %v1958 = vadd.f32 %v1649, %v1865
        %v1959 = vadd.f32 %v1650, %v1868
        %v1960 = vadd.f32 %v1651, %v1871
        %v1961 = vadd.f32 %v1652, %v1874
        %v1962 = vadd.f32 %v1653, %v1877
        %v1963 = vadd.f32 %v1654, %v1880
        %v1964 = vadd.f32 %v1655, %v1883
        %v1965 = vadd.f32 %v1656, %v1886
        %v1966 = vadd.f32 %v1657, %v1889
        %v1967 = vadd.f32 %v1658, %v1892
        %v1968 = vadd.f32 %v1659, %v1895
        %v1969 = vadd.f32 %v1660, %v1898
        %v1970 = vadd.f32 %v1661, %v1901
        %v1971 = vadd.f32 %v1662, %v1904
        %v1972 = vadd.f32 %v1663, %v1907
        %v1973 = vadd.f32 %v1664, %v1910
        %v1974 = vadd.f32 %v1665, %v1913
        %v1975 = vadd.f32 %v1666, %v1916
        %v1976 = vadd.f32 %v1667, %v1919
        %v1977 = vadd.f32 %v1668, %v1922
        %v1978 = vadd.f32 %v1669, %v1925
        %v1979 = vadd.f32 %v1670, %v1928
        %v1980 = vadd.f32 %v1671, %v1931
        %v1981 = vadd.f32 %v1672, %v1934
        %v1982 = vadd.f32 %v1673, %v1937
        %v1983 = vadd.f32 %v1674, %v1940
        %v1984 = vadd.f32 %v1675, %v1943
        %v1985 = vadd.f32 %v1676, %v1946
        %v1986 = vadd.f32 %v1677, %v1949
        %s1987 = sadd.s32 %s205, 36
        %s1988 = scalar_lea.vmem %s0, %s1987
        %v1989 = vld [vmem:[%s1988] sm:$0xff]
        %v1990 = vld [vmem:[%s1988 + $0x8] sm:$0xff]
        %v1991 = vld [vmem:[%s1988 + $0x10] sm:$0xff]
        %v1992 = vld [vmem:[%s1988 + $0x18] sm:$0xff]
        %v1993 = vld [vmem:[%s1988 + $0x20] sm:$0xff]
        %v1994 = vld [vmem:[%s1988 + $0x28] sm:$0xff]
        %v1995 = vld [vmem:[%s1988 + $0x30] sm:$0xff]
        %v1996 = vld [vmem:[%s1988 + $0x38] sm:$0xff]
        %v1997 = vld [vmem:[%s1988 + $0x40] sm:$0xff]
        %v1998 = vld [vmem:[%s1988 + $0x48] sm:$0xff]
        %v1999 = vld [vmem:[%s1988 + $0x50] sm:$0xff]
        %v2000 = vld [vmem:[%s1988 + $0x58] sm:$0xff]
        %v2001 = vld [vmem:[%s1988 + $0x60] sm:$0xff]
        %v2002 = vld [vmem:[%s1988 + $0x68] sm:$0xff]
        %v2003 = vld [vmem:[%s1988 + $0x70] sm:$0xff]
        %v2004 = vld [vmem:[%s1988 + $0x78] sm:$0xff]
        %v2005 = vld [vmem:[%s1988 + $0x80] sm:$0xff]
        %v2006 = vld [vmem:[%s1988 + $0x88] sm:$0xff]
        %v2007 = vld [vmem:[%s1988 + $0x90] sm:$0xff]
        %v2008 = vld [vmem:[%s1988 + $0x98] sm:$0xff]
        %v2009 = vld [vmem:[%s1988 + $0xa0] sm:$0xff]
        %v2010 = vld [vmem:[%s1988 + $0xa8] sm:$0xff]
        %v2011 = vld [vmem:[%s1988 + $0xb0] sm:$0xff]
        %v2012 = vld [vmem:[%s1988 + $0xb8] sm:$0xff]
        %v2013 = vld [vmem:[%s1988 + $0xc0] sm:$0xff]
        %v2014 = vld [vmem:[%s1988 + $0xc8] sm:$0xff]
        %v2015 = vld [vmem:[%s1988 + $0xd0] sm:$0xff]
        %v2016 = vld [vmem:[%s1988 + $0xd8] sm:$0xff]
        %v2017 = vld [vmem:[%s1988 + $0xe0] sm:$0xff]
        %v2018 = vld [vmem:[%s1988 + $0xe8] sm:$0xff]
        %v2019 = vld [vmem:[%s1988 + $0xf0] sm:$0xff]
        %v2020 = vld [vmem:[%s1988 + $0xf8] sm:$0xff]
        %v2021 = vld [vmem:[%s1988 + $0x100] sm:$0xff]
        %v2022 = vld [vmem:[%s1988 + $0x108] sm:$0xff]
        %v2023 = vld [vmem:[%s1988 + $0x110] sm:$0xff]
        %v2024 = vld [vmem:[%s1988 + $0x118] sm:$0xff]
        %s2025 = scalar_lea.vmem %s1, 48
        %v2026 = vld [vmem:[%s2025] sm:$0xff]
        %v2028 = vsel %vm284, %v1989, 0
        %v2031 = vsel %vm284, %v1990, 0
        %v2034 = vsel %vm284, %v1991, 0
        %v2037 = vsel %vm284, %v1992, 0
        %v2040 = vsel %vm284, %v1993, 0
        %v2043 = vsel %vm284, %v1994, 0
        %v2046 = vsel %vm284, %v1995, 0
        %v2049 = vsel %vm284, %v1996, 0
        %v2052 = vsel %vm284, %v1997, 0
        %v2055 = vsel %vm284, %v1998, 0
        %v2058 = vsel %vm284, %v1999, 0
        %v2061 = vsel %vm284, %v2000, 0
        %v2064 = vsel %vm284, %v2001, 0
        %v2067 = vsel %vm284, %v2002, 0
        %v2070 = vsel %vm284, %v2003, 0
        %v2073 = vsel %vm284, %v2004, 0
        %v2076 = vsel %vm284, %v2005, 0
        %v2079 = vsel %vm284, %v2006, 0
        %v2082 = vsel %vm284, %v2007, 0
        %v2085 = vsel %vm284, %v2008, 0
        %v2088 = vsel %vm284, %v2009, 0
        %v2091 = vsel %vm284, %v2010, 0
        %v2094 = vsel %vm284, %v2011, 0
        %v2097 = vsel %vm284, %v2012, 0
        %v2100 = vsel %vm284, %v2013, 0
        %v2103 = vsel %vm284, %v2014, 0
        %v2106 = vsel %vm284, %v2015, 0
        %v2109 = vsel %vm284, %v2016, 0
        %v2112 = vsel %vm284, %v2017, 0
        %v2115 = vsel %vm284, %v2018, 0
        %v2118 = vsel %vm284, %v2019, 0
        %v2121 = vsel %vm284, %v2020, 0
        %v2124 = vsel %vm284, %v2021, 0
        %v2127 = vsel %vm284, %v2022, 0
        %v2130 = vsel %vm284, %v2023, 0
        %v2133 = vsel %vm284, %v2024, 0
        %2135 = vmatpush.msra.mxu0 0.0
        %2136 = vmatpush.msra.mxu0 0.0
        %2137 = vmatpush.msra.mxu0 0.0
        %2138 = vmatpush.msra.mxu0 0.0
        %2139 = vmatpush.msra.mxu0 0.0
        %2140 = vmatpush.msra.mxu0 0.0
        %2141 = vmatpush.msra.mxu0 0.0
        %2142 = vmatpush.msra.mxu0 0.0
        %2143 = vmatpush.msra.mxu0 0.0
        %2144 = vmatpush.msra.mxu0 0.0
        %2145 = vmatpush.msra.mxu0 0.0
        %2146 = vmatpush.msra.mxu0 0.0
        %2147 = vmatpush.msra.mxu0 0.0
        %2148 = vmatpush.msra.mxu0 0.0
        %2149 = vmatpush.msra.mxu0 0.0
        %2150 = vmatpush.msra.mxu0 %v2026
        %2151 = vmatmul.f32.gmra.mxu0 %v2028
        %v2152 = vpop.f32.mrf.mxu0
        %v2153 = vadd.f32 0.0, %v2152
        %2154 = vmatmul.f32.gmra.mxu0 %v2031
        %v2155 = vpop.f32.mrf.mxu0
        %v2156 = vadd.f32 0.0, %v2155
        %2157 = vmatmul.f32.gmra.mxu0 %v2034
        %v2158 = vpop.f32.mrf.mxu0
        %v2159 = vadd.f32 0.0, %v2158
        %2160 = vmatmul.f32.gmra.mxu0 %v2037
        %v2161 = vpop.f32.mrf.mxu0
        %v2162 = vadd.f32 0.0, %v2161
        %2163 = vmatmul.f32.gmra.mxu0 %v2040
        %v2164 = vpop.f32.mrf.mxu0
        %v2165 = vadd.f32 0.0, %v2164
        %2166 = vmatmul.f32.gmra.mxu0 %v2043
        %v2167 = vpop.f32.mrf.mxu0
        %v2168 = vadd.f32 0.0, %v2167
        %2169 = vmatmul.f32.gmra.mxu0 %v2046
        %v2170 = vpop.f32.mrf.mxu0
        %v2171 = vadd.f32 0.0, %v2170
        %2172 = vmatmul.f32.gmra.mxu0 %v2049
        %v2173 = vpop.f32.mrf.mxu0
        %v2174 = vadd.f32 0.0, %v2173
        %2175 = vmatmul.f32.gmra.mxu0 %v2052
        %v2176 = vpop.f32.mrf.mxu0
        %v2177 = vadd.f32 0.0, %v2176
        %2178 = vmatmul.f32.gmra.mxu0 %v2055
        %v2179 = vpop.f32.mrf.mxu0
        %v2180 = vadd.f32 0.0, %v2179
        %2181 = vmatmul.f32.gmra.mxu0 %v2058
        %v2182 = vpop.f32.mrf.mxu0
        %v2183 = vadd.f32 0.0, %v2182
        %2184 = vmatmul.f32.gmra.mxu0 %v2061
        %v2185 = vpop.f32.mrf.mxu0
        %v2186 = vadd.f32 0.0, %v2185
        %2187 = vmatmul.f32.gmra.mxu0 %v2064
        %v2188 = vpop.f32.mrf.mxu0
        %v2189 = vadd.f32 0.0, %v2188
        %2190 = vmatmul.f32.gmra.mxu0 %v2067
        %v2191 = vpop.f32.mrf.mxu0
        %v2192 = vadd.f32 0.0, %v2191
        %2193 = vmatmul.f32.gmra.mxu0 %v2070
        %v2194 = vpop.f32.mrf.mxu0
        %v2195 = vadd.f32 0.0, %v2194
        %2196 = vmatmul.f32.gmra.mxu0 %v2073
        %v2197 = vpop.f32.mrf.mxu0
        %v2198 = vadd.f32 0.0, %v2197
        %2199 = vmatmul.f32.gmra.mxu0 %v2076
        %v2200 = vpop.f32.mrf.mxu0
        %v2201 = vadd.f32 0.0, %v2200
        %2202 = vmatmul.f32.gmra.mxu0 %v2079
        %v2203 = vpop.f32.mrf.mxu0
        %v2204 = vadd.f32 0.0, %v2203
        %2205 = vmatmul.f32.gmra.mxu0 %v2082
        %v2206 = vpop.f32.mrf.mxu0
        %v2207 = vadd.f32 0.0, %v2206
        %2208 = vmatmul.f32.gmra.mxu0 %v2085
        %v2209 = vpop.f32.mrf.mxu0
        %v2210 = vadd.f32 0.0, %v2209
        %2211 = vmatmul.f32.gmra.mxu0 %v2088
        %v2212 = vpop.f32.mrf.mxu0
        %v2213 = vadd.f32 0.0, %v2212
        %2214 = vmatmul.f32.gmra.mxu0 %v2091
        %v2215 = vpop.f32.mrf.mxu0
        %v2216 = vadd.f32 0.0, %v2215
        %2217 = vmatmul.f32.gmra.mxu0 %v2094
        %v2218 = vpop.f32.mrf.mxu0
        %v2219 = vadd.f32 0.0, %v2218
        %2220 = vmatmul.f32.gmra.mxu0 %v2097
        %v2221 = vpop.f32.mrf.mxu0
        %v2222 = vadd.f32 0.0, %v2221
        %2223 = vmatmul.f32.gmra.mxu0 %v2100
        %v2224 = vpop.f32.mrf.mxu0
        %v2225 = vadd.f32 0.0, %v2224
        %2226 = vmatmul.f32.gmra.mxu0 %v2103
        %v2227 = vpop.f32.mrf.mxu0
        %v2228 = vadd.f32 0.0, %v2227
        %2229 = vmatmul.f32.gmra.mxu0 %v2106
        %v2230 = vpop.f32.mrf.mxu0
        %v2231 = vadd.f32 0.0, %v2230
        %2232 = vmatmul.f32.gmra.mxu0 %v2109
        %v2233 = vpop.f32.mrf.mxu0
        %v2234 = vadd.f32 0.0, %v2233
        %2235 = vmatmul.f32.gmra.mxu0 %v2112
        %v2236 = vpop.f32.mrf.mxu0
        %v2237 = vadd.f32 0.0, %v2236
        %2238 = vmatmul.f32.gmra.mxu0 %v2115
        %v2239 = vpop.f32.mrf.mxu0
        %v2240 = vadd.f32 0.0, %v2239
        %2241 = vmatmul.f32.gmra.mxu0 %v2118
        %v2242 = vpop.f32.mrf.mxu0
        %v2243 = vadd.f32 0.0, %v2242
        %2244 = vmatmul.f32.gmra.mxu0 %v2121
        %v2245 = vpop.f32.mrf.mxu0
        %v2246 = vadd.f32 0.0, %v2245
        %2247 = vmatmul.f32.gmra.mxu0 %v2124
        %v2248 = vpop.f32.mrf.mxu0
        %v2249 = vadd.f32 0.0, %v2248
        %2250 = vmatmul.f32.gmra.mxu0 %v2127
        %v2251 = vpop.f32.mrf.mxu0
        %v2252 = vadd.f32 0.0, %v2251
        %2253 = vmatmul.f32.gmra.mxu0 %v2130
        %v2254 = vpop.f32.mrf.mxu0
        %v2255 = vadd.f32 0.0, %v2254
        %2256 = vmatmul.f32.gmra.mxu0 %v2133
        %v2257 = vpop.f32.mrf.mxu0
        %v2258 = vadd.f32 0.0, %v2257
        %2259 = vdwg.mxu0
        %v2260 = vadd.f32 %v1951, %v2153
        %v2261 = vadd.f32 %v1952, %v2156
        %v2262 = vadd.f32 %v1953, %v2159
        %v2263 = vadd.f32 %v1954, %v2162
        %v2264 = vadd.f32 %v1955, %v2165
        %v2265 = vadd.f32 %v1956, %v2168
        %v2266 = vadd.f32 %v1957, %v2171
        %v2267 = vadd.f32 %v1958, %v2174
        %v2268 = vadd.f32 %v1959, %v2177
        %v2269 = vadd.f32 %v1960, %v2180
        %v2270 = vadd.f32 %v1961, %v2183
        %v2271 = vadd.f32 %v1962, %v2186
        %v2272 = vadd.f32 %v1963, %v2189
        %v2273 = vadd.f32 %v1964, %v2192
        %v2274 = vadd.f32 %v1965, %v2195
        %v2275 = vadd.f32 %v1966, %v2198
        %v2276 = vadd.f32 %v1967, %v2201
        %v2277 = vadd.f32 %v1968, %v2204
        %v2278 = vadd.f32 %v1969, %v2207
        %v2279 = vadd.f32 %v1970, %v2210
        %v2280 = vadd.f32 %v1971, %v2213
        %v2281 = vadd.f32 %v1972, %v2216
        %v2282 = vadd.f32 %v1973, %v2219
        %v2283 = vadd.f32 %v1974, %v2222
        %v2284 = vadd.f32 %v1975, %v2225
        %v2285 = vadd.f32 %v1976, %v2228
        %v2286 = vadd.f32 %v1977, %v2231
        %v2287 = vadd.f32 %v1978, %v2234
        %v2288 = vadd.f32 %v1979, %v2237
        %v2289 = vadd.f32 %v1980, %v2240
        %v2290 = vadd.f32 %v1981, %v2243
        %v2291 = vadd.f32 %v1982, %v2246
        %v2292 = vadd.f32 %v1983, %v2249
        %v2293 = vadd.f32 %v1984, %v2252
        %v2294 = vadd.f32 %v1985, %v2255
        %v2295 = vadd.f32 %v1986, %v2258
        %s2296 = sadd.s32 %s205, 37
        %s2297 = scalar_lea.vmem %s0, %s2296
        %v2298 = vld [vmem:[%s2297] sm:$0xff]
        %v2299 = vld [vmem:[%s2297 + $0x8] sm:$0xff]
        %v2300 = vld [vmem:[%s2297 + $0x10] sm:$0xff]
        %v2301 = vld [vmem:[%s2297 + $0x18] sm:$0xff]
        %v2302 = vld [vmem:[%s2297 + $0x20] sm:$0xff]
        %v2303 = vld [vmem:[%s2297 + $0x28] sm:$0xff]
        %v2304 = vld [vmem:[%s2297 + $0x30] sm:$0xff]
        %v2305 = vld [vmem:[%s2297 + $0x38] sm:$0xff]
        %v2306 = vld [vmem:[%s2297 + $0x40] sm:$0xff]
        %v2307 = vld [vmem:[%s2297 + $0x48] sm:$0xff]
        %v2308 = vld [vmem:[%s2297 + $0x50] sm:$0xff]
        %v2309 = vld [vmem:[%s2297 + $0x58] sm:$0xff]
        %v2310 = vld [vmem:[%s2297 + $0x60] sm:$0xff]
        %v2311 = vld [vmem:[%s2297 + $0x68] sm:$0xff]
        %v2312 = vld [vmem:[%s2297 + $0x70] sm:$0xff]
        %v2313 = vld [vmem:[%s2297 + $0x78] sm:$0xff]
        %v2314 = vld [vmem:[%s2297 + $0x80] sm:$0xff]
        %v2315 = vld [vmem:[%s2297 + $0x88] sm:$0xff]
        %v2316 = vld [vmem:[%s2297 + $0x90] sm:$0xff]
        %v2317 = vld [vmem:[%s2297 + $0x98] sm:$0xff]
        %v2318 = vld [vmem:[%s2297 + $0xa0] sm:$0xff]
        %v2319 = vld [vmem:[%s2297 + $0xa8] sm:$0xff]
        %v2320 = vld [vmem:[%s2297 + $0xb0] sm:$0xff]
        %v2321 = vld [vmem:[%s2297 + $0xb8] sm:$0xff]
        %v2322 = vld [vmem:[%s2297 + $0xc0] sm:$0xff]
        %v2323 = vld [vmem:[%s2297 + $0xc8] sm:$0xff]
        %v2324 = vld [vmem:[%s2297 + $0xd0] sm:$0xff]
        %v2325 = vld [vmem:[%s2297 + $0xd8] sm:$0xff]
        %v2326 = vld [vmem:[%s2297 + $0xe0] sm:$0xff]
        %v2327 = vld [vmem:[%s2297 + $0xe8] sm:$0xff]
        %v2328 = vld [vmem:[%s2297 + $0xf0] sm:$0xff]
        %v2329 = vld [vmem:[%s2297 + $0xf8] sm:$0xff]
        %v2330 = vld [vmem:[%s2297 + $0x100] sm:$0xff]
        %v2331 = vld [vmem:[%s2297 + $0x108] sm:$0xff]
        %v2332 = vld [vmem:[%s2297 + $0x110] sm:$0xff]
        %v2333 = vld [vmem:[%s2297 + $0x118] sm:$0xff]
        %s2334 = scalar_lea.vmem %s1, 56
        %v2335 = vld [vmem:[%s2334] sm:$0xff]
        %v2337 = vsel %vm284, %v2298, 0
        %v2340 = vsel %vm284, %v2299, 0
        %v2343 = vsel %vm284, %v2300, 0
        %v2346 = vsel %vm284, %v2301, 0
        %v2349 = vsel %vm284, %v2302, 0
        %v2352 = vsel %vm284, %v2303, 0
        %v2355 = vsel %vm284, %v2304, 0
        %v2358 = vsel %vm284, %v2305, 0
        %v2361 = vsel %vm284, %v2306, 0
        %v2364 = vsel %vm284, %v2307, 0
        %v2367 = vsel %vm284, %v2308, 0
        %v2370 = vsel %vm284, %v2309, 0
        %v2373 = vsel %vm284, %v2310, 0
        %v2376 = vsel %vm284, %v2311, 0
        %v2379 = vsel %vm284, %v2312, 0
        %v2382 = vsel %vm284, %v2313, 0
        %v2385 = vsel %vm284, %v2314, 0
        %v2388 = vsel %vm284, %v2315, 0
        %v2391 = vsel %vm284, %v2316, 0
        %v2394 = vsel %vm284, %v2317, 0
        %v2397 = vsel %vm284, %v2318, 0
        %v2400 = vsel %vm284, %v2319, 0
        %v2403 = vsel %vm284, %v2320, 0
        %v2406 = vsel %vm284, %v2321, 0
        %v2409 = vsel %vm284, %v2322, 0
        %v2412 = vsel %vm284, %v2323, 0
        %v2415 = vsel %vm284, %v2324, 0
        %v2418 = vsel %vm284, %v2325, 0
        %v2421 = vsel %vm284, %v2326, 0
        %v2424 = vsel %vm284, %v2327, 0
        %v2427 = vsel %vm284, %v2328, 0
        %v2430 = vsel %vm284, %v2329, 0
        %v2433 = vsel %vm284, %v2330, 0
        %v2436 = vsel %vm284, %v2331, 0
        %v2439 = vsel %vm284, %v2332, 0
        %v2442 = vsel %vm284, %v2333, 0
        %2444 = vmatpush.msra.mxu0 0.0
        %2445 = vmatpush.msra.mxu0 0.0
        %2446 = vmatpush.msra.mxu0 0.0
        %2447 = vmatpush.msra.mxu0 0.0
        %2448 = vmatpush.msra.mxu0 0.0
        %2449 = vmatpush.msra.mxu0 0.0
        %2450 = vmatpush.msra.mxu0 0.0
        %2451 = vmatpush.msra.mxu0 0.0
        %2452 = vmatpush.msra.mxu0 0.0
        %2453 = vmatpush.msra.mxu0 0.0
        %2454 = vmatpush.msra.mxu0 0.0
        %2455 = vmatpush.msra.mxu0 0.0
        %2456 = vmatpush.msra.mxu0 0.0
        %2457 = vmatpush.msra.mxu0 0.0
        %2458 = vmatpush.msra.mxu0 0.0
        %2459 = vmatpush.msra.mxu0 %v2335
        %2460 = vmatmul.f32.gmra.mxu0 %v2337
        %v2461 = vpop.f32.mrf.mxu0
        %v2462 = vadd.f32 0.0, %v2461
        %2463 = vmatmul.f32.gmra.mxu0 %v2340
        %v2464 = vpop.f32.mrf.mxu0
        %v2465 = vadd.f32 0.0, %v2464
        %2466 = vmatmul.f32.gmra.mxu0 %v2343
        %v2467 = vpop.f32.mrf.mxu0
        %v2468 = vadd.f32 0.0, %v2467
        %2469 = vmatmul.f32.gmra.mxu0 %v2346
        %v2470 = vpop.f32.mrf.mxu0
        %v2471 = vadd.f32 0.0, %v2470
        %2472 = vmatmul.f32.gmra.mxu0 %v2349
        %v2473 = vpop.f32.mrf.mxu0
        %v2474 = vadd.f32 0.0, %v2473
        %2475 = vmatmul.f32.gmra.mxu0 %v2352
        %v2476 = vpop.f32.mrf.mxu0
        %v2477 = vadd.f32 0.0, %v2476
        %2478 = vmatmul.f32.gmra.mxu0 %v2355
        %v2479 = vpop.f32.mrf.mxu0
        %v2480 = vadd.f32 0.0, %v2479
        %2481 = vmatmul.f32.gmra.mxu0 %v2358
        %v2482 = vpop.f32.mrf.mxu0
        %v2483 = vadd.f32 0.0, %v2482
        %2484 = vmatmul.f32.gmra.mxu0 %v2361
        %v2485 = vpop.f32.mrf.mxu0
        %v2486 = vadd.f32 0.0, %v2485
        %2487 = vmatmul.f32.gmra.mxu0 %v2364
        %v2488 = vpop.f32.mrf.mxu0
        %v2489 = vadd.f32 0.0, %v2488
        %2490 = vmatmul.f32.gmra.mxu0 %v2367
        %v2491 = vpop.f32.mrf.mxu0
        %v2492 = vadd.f32 0.0, %v2491
        %2493 = vmatmul.f32.gmra.mxu0 %v2370
        %v2494 = vpop.f32.mrf.mxu0
        %v2495 = vadd.f32 0.0, %v2494
        %2496 = vmatmul.f32.gmra.mxu0 %v2373
        %v2497 = vpop.f32.mrf.mxu0
        %v2498 = vadd.f32 0.0, %v2497
        %2499 = vmatmul.f32.gmra.mxu0 %v2376
        %v2500 = vpop.f32.mrf.mxu0
        %v2501 = vadd.f32 0.0, %v2500
        %2502 = vmatmul.f32.gmra.mxu0 %v2379
        %v2503 = vpop.f32.mrf.mxu0
        %v2504 = vadd.f32 0.0, %v2503
        %2505 = vmatmul.f32.gmra.mxu0 %v2382
        %v2506 = vpop.f32.mrf.mxu0
        %v2507 = vadd.f32 0.0, %v2506
        %2508 = vmatmul.f32.gmra.mxu0 %v2385
        %v2509 = vpop.f32.mrf.mxu0
        %v2510 = vadd.f32 0.0, %v2509
        %2511 = vmatmul.f32.gmra.mxu0 %v2388
        %v2512 = vpop.f32.mrf.mxu0
        %v2513 = vadd.f32 0.0, %v2512
        %2514 = vmatmul.f32.gmra.mxu0 %v2391
        %v2515 = vpop.f32.mrf.mxu0
        %v2516 = vadd.f32 0.0, %v2515
        %2517 = vmatmul.f32.gmra.mxu0 %v2394
        %v2518 = vpop.f32.mrf.mxu0
        %v2519 = vadd.f32 0.0, %v2518
        %2520 = vmatmul.f32.gmra.mxu0 %v2397
        %v2521 = vpop.f32.mrf.mxu0
        %v2522 = vadd.f32 0.0, %v2521
        %2523 = vmatmul.f32.gmra.mxu0 %v2400
        %v2524 = vpop.f32.mrf.mxu0
        %v2525 = vadd.f32 0.0, %v2524
        %2526 = vmatmul.f32.gmra.mxu0 %v2403
        %v2527 = vpop.f32.mrf.mxu0
        %v2528 = vadd.f32 0.0, %v2527
        %2529 = vmatmul.f32.gmra.mxu0 %v2406
        %v2530 = vpop.f32.mrf.mxu0
        %v2531 = vadd.f32 0.0, %v2530
        %2532 = vmatmul.f32.gmra.mxu0 %v2409
        %v2533 = vpop.f32.mrf.mxu0
        %v2534 = vadd.f32 0.0, %v2533
        %2535 = vmatmul.f32.gmra.mxu0 %v2412
        %v2536 = vpop.f32.mrf.mxu0
        %v2537 = vadd.f32 0.0, %v2536
        %2538 = vmatmul.f32.gmra.mxu0 %v2415
        %v2539 = vpop.f32.mrf.mxu0
        %v2540 = vadd.f32 0.0, %v2539
        %2541 = vmatmul.f32.gmra.mxu0 %v2418
        %v2542 = vpop.f32.mrf.mxu0
        %v2543 = vadd.f32 0.0, %v2542
        %2544 = vmatmul.f32.gmra.mxu0 %v2421
        %v2545 = vpop.f32.mrf.mxu0
        %v2546 = vadd.f32 0.0, %v2545
        %2547 = vmatmul.f32.gmra.mxu0 %v2424
        %v2548 = vpop.f32.mrf.mxu0
        %v2549 = vadd.f32 0.0, %v2548
        %2550 = vmatmul.f32.gmra.mxu0 %v2427
        %v2551 = vpop.f32.mrf.mxu0
        %v2552 = vadd.f32 0.0, %v2551
        %2553 = vmatmul.f32.gmra.mxu0 %v2430
        %v2554 = vpop.f32.mrf.mxu0
        %v2555 = vadd.f32 0.0, %v2554
        %2556 = vmatmul.f32.gmra.mxu0 %v2433
        %v2557 = vpop.f32.mrf.mxu0
        %v2558 = vadd.f32 0.0, %v2557
        %2559 = vmatmul.f32.gmra.mxu0 %v2436
        %v2560 = vpop.f32.mrf.mxu0
        %v2561 = vadd.f32 0.0, %v2560
        %2562 = vmatmul.f32.gmra.mxu0 %v2439
        %v2563 = vpop.f32.mrf.mxu0
        %v2564 = vadd.f32 0.0, %v2563
        %2565 = vmatmul.f32.gmra.mxu0 %v2442
        %v2566 = vpop.f32.mrf.mxu0
        %v2567 = vadd.f32 0.0, %v2566
        %2568 = vdwg.mxu0
        %v2569 = vadd.f32 %v2260, %v2462
        %v2570 = vadd.f32 %v2261, %v2465
        %v2571 = vadd.f32 %v2262, %v2468
        %v2572 = vadd.f32 %v2263, %v2471
        %v2573 = vadd.f32 %v2264, %v2474
        %v2574 = vadd.f32 %v2265, %v2477
        %v2575 = vadd.f32 %v2266, %v2480
        %v2576 = vadd.f32 %v2267, %v2483
        %v2577 = vadd.f32 %v2268, %v2486
        %v2578 = vadd.f32 %v2269, %v2489
        %v2579 = vadd.f32 %v2270, %v2492
        %v2580 = vadd.f32 %v2271, %v2495
        %v2581 = vadd.f32 %v2272, %v2498
        %v2582 = vadd.f32 %v2273, %v2501
        %v2583 = vadd.f32 %v2274, %v2504
        %v2584 = vadd.f32 %v2275, %v2507
        %v2585 = vadd.f32 %v2276, %v2510
        %v2586 = vadd.f32 %v2277, %v2513
        %v2587 = vadd.f32 %v2278, %v2516
        %v2588 = vadd.f32 %v2279, %v2519
        %v2589 = vadd.f32 %v2280, %v2522
        %v2590 = vadd.f32 %v2281, %v2525
        %v2591 = vadd.f32 %v2282, %v2528
        %v2592 = vadd.f32 %v2283, %v2531
        %v2593 = vadd.f32 %v2284, %v2534
        %v2594 = vadd.f32 %v2285, %v2537
        %v2595 = vadd.f32 %v2286, %v2540
        %v2596 = vadd.f32 %v2287, %v2543
        %v2597 = vadd.f32 %v2288, %v2546
        %v2598 = vadd.f32 %v2289, %v2549
        %v2599 = vadd.f32 %v2290, %v2552
        %v2600 = vadd.f32 %v2291, %v2555
        %v2601 = vadd.f32 %v2292, %v2558
        %v2602 = vadd.f32 %v2293, %v2561
        %v2603 = vadd.f32 %v2294, %v2564
        %v2604 = vadd.f32 %v2295, %v2567
        %s2605 = sadd.s32 %s205, 38
        %s2606 = scalar_lea.vmem %s0, %s2605
        %v2607 = vld [vmem:[%s2606] sm:$0xff]
        %v2608 = vld [vmem:[%s2606 + $0x8] sm:$0xff]
        %v2609 = vld [vmem:[%s2606 + $0x10] sm:$0xff]
        %v2610 = vld [vmem:[%s2606 + $0x18] sm:$0xff]
        %v2611 = vld [vmem:[%s2606 + $0x20] sm:$0xff]
        %v2612 = vld [vmem:[%s2606 + $0x28] sm:$0xff]
        %v2613 = vld [vmem:[%s2606 + $0x30] sm:$0xff]
        %v2614 = vld [vmem:[%s2606 + $0x38] sm:$0xff]
        %v2615 = vld [vmem:[%s2606 + $0x40] sm:$0xff]
        %v2616 = vld [vmem:[%s2606 + $0x48] sm:$0xff]
        %v2617 = vld [vmem:[%s2606 + $0x50] sm:$0xff]
        %v2618 = vld [vmem:[%s2606 + $0x58] sm:$0xff]
        %v2619 = vld [vmem:[%s2606 + $0x60] sm:$0xff]
        %v2620 = vld [vmem:[%s2606 + $0x68] sm:$0xff]
        %v2621 = vld [vmem:[%s2606 + $0x70] sm:$0xff]
        %v2622 = vld [vmem:[%s2606 + $0x78] sm:$0xff]
        %v2623 = vld [vmem:[%s2606 + $0x80] sm:$0xff]
        %v2624 = vld [vmem:[%s2606 + $0x88] sm:$0xff]
        %v2625 = vld [vmem:[%s2606 + $0x90] sm:$0xff]
        %v2626 = vld [vmem:[%s2606 + $0x98] sm:$0xff]
        %v2627 = vld [vmem:[%s2606 + $0xa0] sm:$0xff]
        %v2628 = vld [vmem:[%s2606 + $0xa8] sm:$0xff]
        %v2629 = vld [vmem:[%s2606 + $0xb0] sm:$0xff]
        %v2630 = vld [vmem:[%s2606 + $0xb8] sm:$0xff]
        %v2631 = vld [vmem:[%s2606 + $0xc0] sm:$0xff]
        %v2632 = vld [vmem:[%s2606 + $0xc8] sm:$0xff]
        %v2633 = vld [vmem:[%s2606 + $0xd0] sm:$0xff]
        %v2634 = vld [vmem:[%s2606 + $0xd8] sm:$0xff]
        %v2635 = vld [vmem:[%s2606 + $0xe0] sm:$0xff]
        %v2636 = vld [vmem:[%s2606 + $0xe8] sm:$0xff]
        %v2637 = vld [vmem:[%s2606 + $0xf0] sm:$0xff]
        %v2638 = vld [vmem:[%s2606 + $0xf8] sm:$0xff]
        %v2639 = vld [vmem:[%s2606 + $0x100] sm:$0xff]
        %v2640 = vld [vmem:[%s2606 + $0x108] sm:$0xff]
        %v2641 = vld [vmem:[%s2606 + $0x110] sm:$0xff]
        %v2642 = vld [vmem:[%s2606 + $0x118] sm:$0xff]
        %s2643 = scalar_lea.vmem %s1, 64
        %v2644 = vld [vmem:[%s2643] sm:$0xff]
        %v2646 = vsel %vm284, %v2607, 0
        %v2649 = vsel %vm284, %v2608, 0
        %v2652 = vsel %vm284, %v2609, 0
        %v2655 = vsel %vm284, %v2610, 0
        %v2658 = vsel %vm284, %v2611, 0
        %v2661 = vsel %vm284, %v2612, 0
        %v2664 = vsel %vm284, %v2613, 0
        %v2667 = vsel %vm284, %v2614, 0
        %v2670 = vsel %vm284, %v2615, 0
        %v2673 = vsel %vm284, %v2616, 0
        %v2676 = vsel %vm284, %v2617, 0
        %v2679 = vsel %vm284, %v2618, 0
        %v2682 = vsel %vm284, %v2619, 0
        %v2685 = vsel %vm284, %v2620, 0
        %v2688 = vsel %vm284, %v2621, 0
        %v2691 = vsel %vm284, %v2622, 0
        %v2694 = vsel %vm284, %v2623, 0
        %v2697 = vsel %vm284, %v2624, 0
        %v2700 = vsel %vm284, %v2625, 0
        %v2703 = vsel %vm284, %v2626, 0
        %v2706 = vsel %vm284, %v2627, 0
        %v2709 = vsel %vm284, %v2628, 0
        %v2712 = vsel %vm284, %v2629, 0
        %v2715 = vsel %vm284, %v2630, 0
        %v2718 = vsel %vm284, %v2631, 0
        %v2721 = vsel %vm284, %v2632, 0
        %v2724 = vsel %vm284, %v2633, 0
        %v2727 = vsel %vm284, %v2634, 0
        %v2730 = vsel %vm284, %v2635, 0
        %v2733 = vsel %vm284, %v2636, 0
        %v2736 = vsel %vm284, %v2637, 0
        %v2739 = vsel %vm284, %v2638, 0
        %v2742 = vsel %vm284, %v2639, 0
        %v2745 = vsel %vm284, %v2640, 0
        %v2748 = vsel %vm284, %v2641, 0
        %v2751 = vsel %vm284, %v2642, 0
        %2753 = vmatpush.msra.mxu0 0.0
        %2754 = vmatpush.msra.mxu0 0.0
        %2755 = vmatpush.msra.mxu0 0.0
        %2756 = vmatpush.msra.mxu0 0.0
        %2757 = vmatpush.msra.mxu0 0.0
        %2758 = vmatpush.msra.mxu0 0.0
        %2759 = vmatpush.msra.mxu0 0.0
        %2760 = vmatpush.msra.mxu0 0.0
        %2761 = vmatpush.msra.mxu0 0.0
        %2762 = vmatpush.msra.mxu0 0.0
        %2763 = vmatpush.msra.mxu0 0.0
        %2764 = vmatpush.msra.mxu0 0.0
        %2765 = vmatpush.msra.mxu0 0.0
        %2766 = vmatpush.msra.mxu0 0.0
        %2767 = vmatpush.msra.mxu0 0.0
        %2768 = vmatpush.msra.mxu0 %v2644
        %2769 = vmatmul.f32.gmra.mxu0 %v2646
        %v2770 = vpop.f32.mrf.mxu0
        %v2771 = vadd.f32 0.0, %v2770
        %2772 = vmatmul.f32.gmra.mxu0 %v2649
        %v2773 = vpop.f32.mrf.mxu0
        %v2774 = vadd.f32 0.0, %v2773
        %2775 = vmatmul.f32.gmra.mxu0 %v2652
        %v2776 = vpop.f32.mrf.mxu0
        %v2777 = vadd.f32 0.0, %v2776
        %2778 = vmatmul.f32.gmra.mxu0 %v2655
        %v2779 = vpop.f32.mrf.mxu0
        %v2780 = vadd.f32 0.0, %v2779
        %2781 = vmatmul.f32.gmra.mxu0 %v2658
        %v2782 = vpop.f32.mrf.mxu0
        %v2783 = vadd.f32 0.0, %v2782
        %2784 = vmatmul.f32.gmra.mxu0 %v2661
        %v2785 = vpop.f32.mrf.mxu0
        %v2786 = vadd.f32 0.0, %v2785
        %2787 = vmatmul.f32.gmra.mxu0 %v2664
        %v2788 = vpop.f32.mrf.mxu0
        %v2789 = vadd.f32 0.0, %v2788
        %2790 = vmatmul.f32.gmra.mxu0 %v2667
        %v2791 = vpop.f32.mrf.mxu0
        %v2792 = vadd.f32 0.0, %v2791
        %2793 = vmatmul.f32.gmra.mxu0 %v2670
        %v2794 = vpop.f32.mrf.mxu0
        %v2795 = vadd.f32 0.0, %v2794
        %2796 = vmatmul.f32.gmra.mxu0 %v2673
        %v2797 = vpop.f32.mrf.mxu0
        %v2798 = vadd.f32 0.0, %v2797
        %2799 = vmatmul.f32.gmra.mxu0 %v2676
        %v2800 = vpop.f32.mrf.mxu0
        %v2801 = vadd.f32 0.0, %v2800
        %2802 = vmatmul.f32.gmra.mxu0 %v2679
        %v2803 = vpop.f32.mrf.mxu0
        %v2804 = vadd.f32 0.0, %v2803
        %2805 = vmatmul.f32.gmra.mxu0 %v2682
        %v2806 = vpop.f32.mrf.mxu0
        %v2807 = vadd.f32 0.0, %v2806
        %2808 = vmatmul.f32.gmra.mxu0 %v2685
        %v2809 = vpop.f32.mrf.mxu0
        %v2810 = vadd.f32 0.0, %v2809
        %2811 = vmatmul.f32.gmra.mxu0 %v2688
        %v2812 = vpop.f32.mrf.mxu0
        %v2813 = vadd.f32 0.0, %v2812
        %2814 = vmatmul.f32.gmra.mxu0 %v2691
        %v2815 = vpop.f32.mrf.mxu0
        %v2816 = vadd.f32 0.0, %v2815
        %2817 = vmatmul.f32.gmra.mxu0 %v2694
        %v2818 = vpop.f32.mrf.mxu0
        %v2819 = vadd.f32 0.0, %v2818
        %2820 = vmatmul.f32.gmra.mxu0 %v2697
        %v2821 = vpop.f32.mrf.mxu0
        %v2822 = vadd.f32 0.0, %v2821
        %2823 = vmatmul.f32.gmra.mxu0 %v2700
        %v2824 = vpop.f32.mrf.mxu0
        %v2825 = vadd.f32 0.0, %v2824
        %2826 = vmatmul.f32.gmra.mxu0 %v2703
        %v2827 = vpop.f32.mrf.mxu0
        %v2828 = vadd.f32 0.0, %v2827
        %2829 = vmatmul.f32.gmra.mxu0 %v2706
        %v2830 = vpop.f32.mrf.mxu0
        %v2831 = vadd.f32 0.0, %v2830
        %2832 = vmatmul.f32.gmra.mxu0 %v2709
        %v2833 = vpop.f32.mrf.mxu0
        %v2834 = vadd.f32 0.0, %v2833
        %2835 = vmatmul.f32.gmra.mxu0 %v2712
        %v2836 = vpop.f32.mrf.mxu0
        %v2837 = vadd.f32 0.0, %v2836
        %2838 = vmatmul.f32.gmra.mxu0 %v2715
        %v2839 = vpop.f32.mrf.mxu0
        %v2840 = vadd.f32 0.0, %v2839
        %2841 = vmatmul.f32.gmra.mxu0 %v2718
        %v2842 = vpop.f32.mrf.mxu0
        %v2843 = vadd.f32 0.0, %v2842
        %2844 = vmatmul.f32.gmra.mxu0 %v2721
        %v2845 = vpop.f32.mrf.mxu0
        %v2846 = vadd.f32 0.0, %v2845
        %2847 = vmatmul.f32.gmra.mxu0 %v2724
        %v2848 = vpop.f32.mrf.mxu0
        %v2849 = vadd.f32 0.0, %v2848
        %2850 = vmatmul.f32.gmra.mxu0 %v2727
        %v2851 = vpop.f32.mrf.mxu0
        %v2852 = vadd.f32 0.0, %v2851
        %2853 = vmatmul.f32.gmra.mxu0 %v2730
        %v2854 = vpop.f32.mrf.mxu0
        %v2855 = vadd.f32 0.0, %v2854
        %2856 = vmatmul.f32.gmra.mxu0 %v2733
        %v2857 = vpop.f32.mrf.mxu0
        %v2858 = vadd.f32 0.0, %v2857
        %2859 = vmatmul.f32.gmra.mxu0 %v2736
        %v2860 = vpop.f32.mrf.mxu0
        %v2861 = vadd.f32 0.0, %v2860
        %2862 = vmatmul.f32.gmra.mxu0 %v2739
        %v2863 = vpop.f32.mrf.mxu0
        %v2864 = vadd.f32 0.0, %v2863
        %2865 = vmatmul.f32.gmra.mxu0 %v2742
        %v2866 = vpop.f32.mrf.mxu0
        %v2867 = vadd.f32 0.0, %v2866
        %2868 = vmatmul.f32.gmra.mxu0 %v2745
        %v2869 = vpop.f32.mrf.mxu0
        %v2870 = vadd.f32 0.0, %v2869
        %2871 = vmatmul.f32.gmra.mxu0 %v2748
        %v2872 = vpop.f32.mrf.mxu0
        %v2873 = vadd.f32 0.0, %v2872
        %2874 = vmatmul.f32.gmra.mxu0 %v2751
        %v2875 = vpop.f32.mrf.mxu0
        %v2876 = vadd.f32 0.0, %v2875
        %2877 = vdwg.mxu0
        %v2878 = vadd.f32 %v2569, %v2771
        %v2879 = vadd.f32 %v2570, %v2774
        %v2880 = vadd.f32 %v2571, %v2777
        %v2881 = vadd.f32 %v2572, %v2780
        %v2882 = vadd.f32 %v2573, %v2783
        %v2883 = vadd.f32 %v2574, %v2786
        %v2884 = vadd.f32 %v2575, %v2789
        %v2885 = vadd.f32 %v2576, %v2792
        %v2886 = vadd.f32 %v2577, %v2795
        %v2887 = vadd.f32 %v2578, %v2798
        %v2888 = vadd.f32 %v2579, %v2801
        %v2889 = vadd.f32 %v2580, %v2804
        %v2890 = vadd.f32 %v2581, %v2807
        %v2891 = vadd.f32 %v2582, %v2810
        %v2892 = vadd.f32 %v2583, %v2813
        %v2893 = vadd.f32 %v2584, %v2816
        %v2894 = vadd.f32 %v2585, %v2819
        %v2895 = vadd.f32 %v2586, %v2822
        %v2896 = vadd.f32 %v2587, %v2825
        %v2897 = vadd.f32 %v2588, %v2828
        %v2898 = vadd.f32 %v2589, %v2831
        %v2899 = vadd.f32 %v2590, %v2834
        %v2900 = vadd.f32 %v2591, %v2837
        %v2901 = vadd.f32 %v2592, %v2840
        %v2902 = vadd.f32 %v2593, %v2843
        %v2903 = vadd.f32 %v2594, %v2846
        %v2904 = vadd.f32 %v2595, %v2849
        %v2905 = vadd.f32 %v2596, %v2852
        %v2906 = vadd.f32 %v2597, %v2855
        %v2907 = vadd.f32 %v2598, %v2858
        %v2908 = vadd.f32 %v2599, %v2861
        %v2909 = vadd.f32 %v2600, %v2864
        %v2910 = vadd.f32 %v2601, %v2867
        %v2911 = vadd.f32 %v2602, %v2870
        %v2912 = vadd.f32 %v2603, %v2873
        %v2913 = vadd.f32 %v2604, %v2876
        %s2914 = sadd.s32 %s21, %s22
        %s2915 = smul.u32 %s2914, 288
        %s2916 = scalar_lea.vmem [#allocation2], %s2915
        %2917 = vst [vmem:[%s2916] sm:$0xff] %v2878
        %2918 = vst [vmem:[%s2916 + $0x8] sm:$0xff] %v2879
        %2919 = vst [vmem:[%s2916 + $0x10] sm:$0xff] %v2880
        %2920 = vst [vmem:[%s2916 + $0x18] sm:$0xff] %v2881
        %2921 = vst [vmem:[%s2916 + $0x20] sm:$0xff] %v2882
        %2922 = vst [vmem:[%s2916 + $0x28] sm:$0xff] %v2883
        %2923 = vst [vmem:[%s2916 + $0x30] sm:$0xff] %v2884
        %2924 = vst [vmem:[%s2916 + $0x38] sm:$0xff] %v2885
        %2925 = vst [vmem:[%s2916 + $0x40] sm:$0xff] %v2886
        %2926 = vst [vmem:[%s2916 + $0x48] sm:$0xff] %v2887
        %2927 = vst [vmem:[%s2916 + $0x50] sm:$0xff] %v2888
        %2928 = vst [vmem:[%s2916 + $0x58] sm:$0xff] %v2889
        %2929 = vst [vmem:[%s2916 + $0x60] sm:$0xff] %v2890
        %2930 = vst [vmem:[%s2916 + $0x68] sm:$0xff] %v2891
        %2931 = vst [vmem:[%s2916 + $0x70] sm:$0xff] %v2892
        %2932 = vst [vmem:[%s2916 + $0x78] sm:$0xff] %v2893
        %2933 = vst [vmem:[%s2916 + $0x80] sm:$0xff] %v2894
        %2934 = vst [vmem:[%s2916 + $0x88] sm:$0xff] %v2895
        %2935 = vst [vmem:[%s2916 + $0x90] sm:$0xff] %v2896
        %2936 = vst [vmem:[%s2916 + $0x98] sm:$0xff] %v2897
        %2937 = vst [vmem:[%s2916 + $0xa0] sm:$0xff] %v2898
        %2938 = vst [vmem:[%s2916 + $0xa8] sm:$0xff] %v2899
        %2939 = vst [vmem:[%s2916 + $0xb0] sm:$0xff] %v2900
        %2940 = vst [vmem:[%s2916 + $0xb8] sm:$0xff] %v2901
        %2941 = vst [vmem:[%s2916 + $0xc0] sm:$0xff] %v2902
        %2942 = vst [vmem:[%s2916 + $0xc8] sm:$0xff] %v2903
        %2943 = vst [vmem:[%s2916 + $0xd0] sm:$0xff] %v2904
        %2944 = vst [vmem:[%s2916 + $0xd8] sm:$0xff] %v2905
        %2945 = vst [vmem:[%s2916 + $0xe0] sm:$0xff] %v2906
        %2946 = vst [vmem:[%s2916 + $0xe8] sm:$0xff] %v2907
        %2947 = vst [vmem:[%s2916 + $0xf0] sm:$0xff] %v2908
        %2948 = vst [vmem:[%s2916 + $0xf8] sm:$0xff] %v2909
        %2949 = vst [vmem:[%s2916 + $0x100] sm:$0xff] %v2910
        %2950 = vst [vmem:[%s2916 + $0x108] sm:$0xff] %v2911
        %2951 = vst [vmem:[%s2916 + $0x110] sm:$0xff] %v2912
        %2952 = vst [vmem:[%s2916 + $0x118] sm:$0xff] %v2913
        %p2953 = scmp.eq.s32.totalorder %s21, 1
        %p2954 = scmp.eq.s32.totalorder %s22, 0
        %p2955 = pnand %p2953, %p2954
        %p2956 = pneg %p2955
        // Predicated region
        $region41: #{tpu_custom_call.1} parent=39 // pred_check
          _
        $region42: #{tpu_custom_call.1} parent=39 // pred_check_branch
          %2958 = sbr.rel (%p2955) target = $region44
        $region43: #{tpu_custom_call.1} parent=39 // pred_region
          %v2959 = vld [vmem:[#allocation2] sm:$0xff]
          %v2960 = vld [vmem:[#allocation2 + $0x8] sm:$0xff]
          %v2961 = vld [vmem:[#allocation2 + $0x10] sm:$0xff]
          %v2962 = vld [vmem:[#allocation2 + $0x18] sm:$0xff]
          %v2963 = vld [vmem:[#allocation2 + $0x20] sm:$0xff]
          %v2964 = vld [vmem:[#allocation2 + $0x28] sm:$0xff]
          %v2965 = vld [vmem:[#allocation2 + $0x30] sm:$0xff]
          %v2966 = vld [vmem:[#allocation2 + $0x38] sm:$0xff]
          %v2967 = vld [vmem:[#allocation2 + $0x40] sm:$0xff]
          %v2968 = vld [vmem:[#allocation2 + $0x48] sm:$0xff]
          %v2969 = vld [vmem:[#allocation2 + $0x50] sm:$0xff]
          %v2970 = vld [vmem:[#allocation2 + $0x58] sm:$0xff]
          %v2971 = vld [vmem:[#allocation2 + $0x60] sm:$0xff]
          %v2972 = vld [vmem:[#allocation2 + $0x68] sm:$0xff]
          %v2973 = vld [vmem:[#allocation2 + $0x70] sm:$0xff]
          %v2974 = vld [vmem:[#allocation2 + $0x78] sm:$0xff]
          %v2975 = vld [vmem:[#allocation2 + $0x80] sm:$0xff]
          %v2976 = vld [vmem:[#allocation2 + $0x88] sm:$0xff]
          %v2977 = vld [vmem:[#allocation2 + $0x90] sm:$0xff]
          %v2978 = vld [vmem:[#allocation2 + $0x98] sm:$0xff]
          %v2979 = vld [vmem:[#allocation2 + $0xa0] sm:$0xff]
          %v2980 = vld [vmem:[#allocation2 + $0xa8] sm:$0xff]
          %v2981 = vld [vmem:[#allocation2 + $0xb0] sm:$0xff]
          %v2982 = vld [vmem:[#allocation2 + $0xb8] sm:$0xff]
          %v2983 = vld [vmem:[#allocation2 + $0xc0] sm:$0xff]
          %v2984 = vld [vmem:[#allocation2 + $0xc8] sm:$0xff]
          %v2985 = vld [vmem:[#allocation2 + $0xd0] sm:$0xff]
          %v2986 = vld [vmem:[#allocation2 + $0xd8] sm:$0xff]
          %v2987 = vld [vmem:[#allocation2 + $0xe0] sm:$0xff]
          %v2988 = vld [vmem:[#allocation2 + $0xe8] sm:$0xff]
          %v2989 = vld [vmem:[#allocation2 + $0xf0] sm:$0xff]
          %v2990 = vld [vmem:[#allocation2 + $0xf8] sm:$0xff]
          %v2991 = vld [vmem:[#allocation2 + $0x100] sm:$0xff]
          %v2992 = vld [vmem:[#allocation2 + $0x108] sm:$0xff]
          %v2993 = vld [vmem:[#allocation2 + $0x110] sm:$0xff]
          %v2994 = vld [vmem:[#allocation2 + $0x118] sm:$0xff]
          %v2995 = vld [vmem:[#allocation2 + $0x120] sm:$0xff]
          %v2996 = vld [vmem:[#allocation2 + $0x128] sm:$0xff]
          %v2997 = vld [vmem:[#allocation2 + $0x130] sm:$0xff]
          %v2998 = vld [vmem:[#allocation2 + $0x138] sm:$0xff]
          %v2999 = vld [vmem:[#allocation2 + $0x140] sm:$0xff]
          %v3000 = vld [vmem:[#allocation2 + $0x148] sm:$0xff]
          %v3001 = vld [vmem:[#allocation2 + $0x150] sm:$0xff]
          %v3002 = vld [vmem:[#allocation2 + $0x158] sm:$0xff]
          %v3003 = vld [vmem:[#allocation2 + $0x160] sm:$0xff]
          %v3004 = vld [vmem:[#allocation2 + $0x168] sm:$0xff]
          %v3005 = vld [vmem:[#allocation2 + $0x170] sm:$0xff]
          %v3006 = vld [vmem:[#allocation2 + $0x178] sm:$0xff]
          %v3007 = vld [vmem:[#allocation2 + $0x180] sm:$0xff]
          %v3008 = vld [vmem:[#allocation2 + $0x188] sm:$0xff]
          %v3009 = vld [vmem:[#allocation2 + $0x190] sm:$0xff]
          %v3010 = vld [vmem:[#allocation2 + $0x198] sm:$0xff]
          %v3011 = vld [vmem:[#allocation2 + $0x1a0] sm:$0xff]
          %v3012 = vld [vmem:[#allocation2 + $0x1a8] sm:$0xff]
          %v3013 = vld [vmem:[#allocation2 + $0x1b0] sm:$0xff]
          %v3014 = vld [vmem:[#allocation2 + $0x1b8] sm:$0xff]
          %v3015 = vld [vmem:[#allocation2 + $0x1c0] sm:$0xff]
          %v3016 = vld [vmem:[#allocation2 + $0x1c8] sm:$0xff]
          %v3017 = vld [vmem:[#allocation2 + $0x1d0] sm:$0xff]
          %v3018 = vld [vmem:[#allocation2 + $0x1d8] sm:$0xff]
          %v3019 = vld [vmem:[#allocation2 + $0x1e0] sm:$0xff]
          %v3020 = vld [vmem:[#allocation2 + $0x1e8] sm:$0xff]
          %v3021 = vld [vmem:[#allocation2 + $0x1f0] sm:$0xff]
          %v3022 = vld [vmem:[#allocation2 + $0x1f8] sm:$0xff]
          %v3023 = vld [vmem:[#allocation2 + $0x200] sm:$0xff]
          %v3024 = vld [vmem:[#allocation2 + $0x208] sm:$0xff]
          %v3025 = vld [vmem:[#allocation2 + $0x210] sm:$0xff]
          %v3026 = vld [vmem:[#allocation2 + $0x218] sm:$0xff]
          %v3027 = vld [vmem:[#allocation2 + $0x220] sm:$0xff]
          %v3028 = vld [vmem:[#allocation2 + $0x228] sm:$0xff]
          %v3029 = vld [vmem:[#allocation2 + $0x230] sm:$0xff]
          %v3030 = vld [vmem:[#allocation2 + $0x238] sm:$0xff]
          %v3031 = vld [vmem:[%s4] sm:$0xff]
          %v3032 = vld [vmem:[%s4 + $0x8] sm:$0xff]
          %v3033 = vld [vmem:[%s4 + $0x10] sm:$0xff]
          %v3034 = vld [vmem:[%s4 + $0x18] sm:$0xff]
          %v3035 = vld [vmem:[%s4 + $0x20] sm:$0xff]
          %v3036 = vld [vmem:[%s4 + $0x28] sm:$0xff]
          %v3037 = vld [vmem:[%s4 + $0x30] sm:$0xff]
          %v3038 = vld [vmem:[%s4 + $0x38] sm:$0xff]
          %v3039 = vld [vmem:[%s4 + $0x40] sm:$0xff]
          %v3040 = vld [vmem:[%s4 + $0x48] sm:$0xff]
          %v3041 = vld [vmem:[%s4 + $0x50] sm:$0xff]
          %v3042 = vld [vmem:[%s4 + $0x58] sm:$0xff]
          %v3043 = vld [vmem:[%s4 + $0x60] sm:$0xff]
          %v3044 = vld [vmem:[%s4 + $0x68] sm:$0xff]
          %v3045 = vld [vmem:[%s4 + $0x70] sm:$0xff]
          %v3046 = vld [vmem:[%s4 + $0x78] sm:$0xff]
          %v3047 = vld [vmem:[%s4 + $0x80] sm:$0xff]
          %v3048 = vld [vmem:[%s4 + $0x88] sm:$0xff]
          %v3049 = vld [vmem:[%s4 + $0x90] sm:$0xff]
          %v3050 = vld [vmem:[%s4 + $0x98] sm:$0xff]
          %v3051 = vld [vmem:[%s4 + $0xa0] sm:$0xff]
          %v3052 = vld [vmem:[%s4 + $0xa8] sm:$0xff]
          %v3053 = vld [vmem:[%s4 + $0xb0] sm:$0xff]
          %v3054 = vld [vmem:[%s4 + $0xb8] sm:$0xff]
          %v3055 = vld [vmem:[%s4 + $0xc0] sm:$0xff]
          %v3056 = vld [vmem:[%s4 + $0xc8] sm:$0xff]
          %v3057 = vld [vmem:[%s4 + $0xd0] sm:$0xff]
          %v3058 = vld [vmem:[%s4 + $0xd8] sm:$0xff]
          %v3059 = vld [vmem:[%s4 + $0xe0] sm:$0xff]
          %v3060 = vld [vmem:[%s4 + $0xe8] sm:$0xff]
          %v3061 = vld [vmem:[%s4 + $0xf0] sm:$0xff]
          %v3062 = vld [vmem:[%s4 + $0xf8] sm:$0xff]
          %v3063 = vld [vmem:[%s4 + $0x100] sm:$0xff]
          %v3064 = vld [vmem:[%s4 + $0x108] sm:$0xff]
          %v3065 = vld [vmem:[%s4 + $0x110] sm:$0xff]
          %v3066 = vld [vmem:[%s4 + $0x118] sm:$0xff]
          %v3067 = vld [vmem:[%s4 + $0x120] sm:$0xff]
          %v3068 = vld [vmem:[%s4 + $0x128] sm:$0xff]
          %v3069 = vld [vmem:[%s4 + $0x130] sm:$0xff]
          %v3070 = vld [vmem:[%s4 + $0x138] sm:$0xff]
          %v3071 = vld [vmem:[%s4 + $0x140] sm:$0xff]
          %v3072 = vld [vmem:[%s4 + $0x148] sm:$0xff]
          %v3073 = vld [vmem:[%s4 + $0x150] sm:$0xff]
          %v3074 = vld [vmem:[%s4 + $0x158] sm:$0xff]
          %v3075 = vld [vmem:[%s4 + $0x160] sm:$0xff]
          %v3076 = vld [vmem:[%s4 + $0x168] sm:$0xff]
          %v3077 = vld [vmem:[%s4 + $0x170] sm:$0xff]
          %v3078 = vld [vmem:[%s4 + $0x178] sm:$0xff]
          %v3079 = vld [vmem:[%s4 + $0x180] sm:$0xff]
          %v3080 = vld [vmem:[%s4 + $0x188] sm:$0xff]
          %v3081 = vld [vmem:[%s4 + $0x190] sm:$0xff]
          %v3082 = vld [vmem:[%s4 + $0x198] sm:$0xff]
          %v3083 = vld [vmem:[%s4 + $0x1a0] sm:$0xff]
          %v3084 = vld [vmem:[%s4 + $0x1a8] sm:$0xff]
          %v3085 = vld [vmem:[%s4 + $0x1b0] sm:$0xff]
          %v3086 = vld [vmem:[%s4 + $0x1b8] sm:$0xff]
          %v3087 = vld [vmem:[%s4 + $0x1c0] sm:$0xff]
          %v3088 = vld [vmem:[%s4 + $0x1c8] sm:$0xff]
          %v3089 = vld [vmem:[%s4 + $0x1d0] sm:$0xff]
          %v3090 = vld [vmem:[%s4 + $0x1d8] sm:$0xff]
          %v3091 = vld [vmem:[%s4 + $0x1e0] sm:$0xff]
          %v3092 = vld [vmem:[%s4 + $0x1e8] sm:$0xff]
          %v3093 = vld [vmem:[%s4 + $0x1f0] sm:$0xff]
          %v3094 = vld [vmem:[%s4 + $0x1f8] sm:$0xff]
          %v3095 = vld [vmem:[%s4 + $0x200] sm:$0xff]
          %v3096 = vld [vmem:[%s4 + $0x208] sm:$0xff]
          %v3097 = vld [vmem:[%s4 + $0x210] sm:$0xff]
          %v3098 = vld [vmem:[%s4 + $0x218] sm:$0xff]
          %v3099 = vld [vmem:[%s4 + $0x220] sm:$0xff]
          %v3100 = vld [vmem:[%s4 + $0x228] sm:$0xff]
          %v3101 = vld [vmem:[%s4 + $0x230] sm:$0xff]
          %v3102 = vld [vmem:[%s4 + $0x238] sm:$0xff]
          %3104 = vset.pattern.permute.xlu0 0
          %3105 = vperm.xlu0 %3104, %v3031
          %v3106 = vpop.permute.xlu0 %3105
          %3109 = vset.pattern.permute.xlu0 0
          %3110 = vperm.xlu0 %3109, %v3032
          %v3111 = vpop.permute.xlu0 %3110
          %3114 = vset.pattern.permute.xlu0 0
          %3115 = vperm.xlu0 %3114, %v3033
          %v3116 = vpop.permute.xlu0 %3115
          %3119 = vset.pattern.permute.xlu0 0
          %3120 = vperm.xlu0 %3119, %v3034
          %v3121 = vpop.permute.xlu0 %3120
          %3124 = vset.pattern.permute.xlu0 0
          %3125 = vperm.xlu0 %3124, %v3035
          %v3126 = vpop.permute.xlu0 %3125
          %3129 = vset.pattern.permute.xlu0 0
          %3130 = vperm.xlu0 %3129, %v3036
          %v3131 = vpop.permute.xlu0 %3130
          %3134 = vset.pattern.permute.xlu0 0
          %3135 = vperm.xlu0 %3134, %v3037
          %v3136 = vpop.permute.xlu0 %3135
          %3139 = vset.pattern.permute.xlu0 0
          %3140 = vperm.xlu0 %3139, %v3038
          %v3141 = vpop.permute.xlu0 %3140
          %3144 = vset.pattern.permute.xlu0 0
          %3145 = vperm.xlu0 %3144, %v3039
          %v3146 = vpop.permute.xlu0 %3145
          %3149 = vset.pattern.permute.xlu0 0
          %3150 = vperm.xlu0 %3149, %v3040
          %v3151 = vpop.permute.xlu0 %3150
          %3154 = vset.pattern.permute.xlu0 0
          %3155 = vperm.xlu0 %3154, %v3041
          %v3156 = vpop.permute.xlu0 %3155
          %3159 = vset.pattern.permute.xlu0 0
          %3160 = vperm.xlu0 %3159, %v3042
          %v3161 = vpop.permute.xlu0 %3160
          %3164 = vset.pattern.permute.xlu0 0
          %3165 = vperm.xlu0 %3164, %v3043
          %v3166 = vpop.permute.xlu0 %3165
          %3169 = vset.pattern.permute.xlu0 0
          %3170 = vperm.xlu0 %3169, %v3044
          %v3171 = vpop.permute.xlu0 %3170
          %3174 = vset.pattern.permute.xlu0 0
          %3175 = vperm.xlu0 %3174, %v3045
          %v3176 = vpop.permute.xlu0 %3175
          %3179 = vset.pattern.permute.xlu0 0
          %3180 = vperm.xlu0 %3179, %v3046
          %v3181 = vpop.permute.xlu0 %3180
          %3184 = vset.pattern.permute.xlu0 0
          %3185 = vperm.xlu0 %3184, %v3047
          %v3186 = vpop.permute.xlu0 %3185
          %3189 = vset.pattern.permute.xlu0 0
          %3190 = vperm.xlu0 %3189, %v3048
          %v3191 = vpop.permute.xlu0 %3190
          %3194 = vset.pattern.permute.xlu0 0
          %3195 = vperm.xlu0 %3194, %v3049
          %v3196 = vpop.permute.xlu0 %3195
          %3199 = vset.pattern.permute.xlu0 0
          %3200 = vperm.xlu0 %3199, %v3050
          %v3201 = vpop.permute.xlu0 %3200
          %3204 = vset.pattern.permute.xlu0 0
          %3205 = vperm.xlu0 %3204, %v3051
          %v3206 = vpop.permute.xlu0 %3205
          %3209 = vset.pattern.permute.xlu0 0
          %3210 = vperm.xlu0 %3209, %v3052
          %v3211 = vpop.permute.xlu0 %3210
          %3214 = vset.pattern.permute.xlu0 0
          %3215 = vperm.xlu0 %3214, %v3053
          %v3216 = vpop.permute.xlu0 %3215
          %3219 = vset.pattern.permute.xlu0 0
          %3220 = vperm.xlu0 %3219, %v3054
          %v3221 = vpop.permute.xlu0 %3220
          %3224 = vset.pattern.permute.xlu0 0
          %3225 = vperm.xlu0 %3224, %v3055
          %v3226 = vpop.permute.xlu0 %3225
          %3229 = vset.pattern.permute.xlu0 0
          %3230 = vperm.xlu0 %3229, %v3056
          %v3231 = vpop.permute.xlu0 %3230
          %3234 = vset.pattern.permute.xlu0 0
          %3235 = vperm.xlu0 %3234, %v3057
          %v3236 = vpop.permute.xlu0 %3235
          %3239 = vset.pattern.permute.xlu0 0
          %3240 = vperm.xlu0 %3239, %v3058
          %v3241 = vpop.permute.xlu0 %3240
          %3244 = vset.pattern.permute.xlu0 0
          %3245 = vperm.xlu0 %3244, %v3059
          %v3246 = vpop.permute.xlu0 %3245
          %3249 = vset.pattern.permute.xlu0 0
          %3250 = vperm.xlu0 %3249, %v3060
          %v3251 = vpop.permute.xlu0 %3250
          %3254 = vset.pattern.permute.xlu0 0
          %3255 = vperm.xlu0 %3254, %v3061
          %v3256 = vpop.permute.xlu0 %3255
          %3259 = vset.pattern.permute.xlu0 0
          %3260 = vperm.xlu0 %3259, %v3062
          %v3261 = vpop.permute.xlu0 %3260
          %3264 = vset.pattern.permute.xlu0 0
          %3265 = vperm.xlu0 %3264, %v3063
          %v3266 = vpop.permute.xlu0 %3265
          %3269 = vset.pattern.permute.xlu0 0
          %3270 = vperm.xlu0 %3269, %v3064
          %v3271 = vpop.permute.xlu0 %3270
          %3274 = vset.pattern.permute.xlu0 0
          %3275 = vperm.xlu0 %3274, %v3065
          %v3276 = vpop.permute.xlu0 %3275
          %3279 = vset.pattern.permute.xlu0 0
          %3280 = vperm.xlu0 %3279, %v3066
          %v3281 = vpop.permute.xlu0 %3280
          %3284 = vset.pattern.permute.xlu0 0
          %3285 = vperm.xlu0 %3284, %v3067
          %v3286 = vpop.permute.xlu0 %3285
          %3289 = vset.pattern.permute.xlu0 0
          %3290 = vperm.xlu0 %3289, %v3068
          %v3291 = vpop.permute.xlu0 %3290
          %3294 = vset.pattern.permute.xlu0 0
          %3295 = vperm.xlu0 %3294, %v3069
          %v3296 = vpop.permute.xlu0 %3295
          %3299 = vset.pattern.permute.xlu0 0
          %3300 = vperm.xlu0 %3299, %v3070
          %v3301 = vpop.permute.xlu0 %3300
          %3304 = vset.pattern.permute.xlu0 0
          %3305 = vperm.xlu0 %3304, %v3071
          %v3306 = vpop.permute.xlu0 %3305
          %3309 = vset.pattern.permute.xlu0 0
          %3310 = vperm.xlu0 %3309, %v3072
          %v3311 = vpop.permute.xlu0 %3310
          %3314 = vset.pattern.permute.xlu0 0
          %3315 = vperm.xlu0 %3314, %v3073
          %v3316 = vpop.permute.xlu0 %3315
          %3319 = vset.pattern.permute.xlu0 0
          %3320 = vperm.xlu0 %3319, %v3074
          %v3321 = vpop.permute.xlu0 %3320
          %3324 = vset.pattern.permute.xlu0 0
          %3325 = vperm.xlu0 %3324, %v3075
          %v3326 = vpop.permute.xlu0 %3325
          %3329 = vset.pattern.permute.xlu0 0
          %3330 = vperm.xlu0 %3329, %v3076
          %v3331 = vpop.permute.xlu0 %3330
          %3334 = vset.pattern.permute.xlu0 0
          %3335 = vperm.xlu0 %3334, %v3077
          %v3336 = vpop.permute.xlu0 %3335
          %3339 = vset.pattern.permute.xlu0 0
          %3340 = vperm.xlu0 %3339, %v3078
          %v3341 = vpop.permute.xlu0 %3340
          %3344 = vset.pattern.permute.xlu0 0
          %3345 = vperm.xlu0 %3344, %v3079
          %v3346 = vpop.permute.xlu0 %3345
          %3349 = vset.pattern.permute.xlu0 0
          %3350 = vperm.xlu0 %3349, %v3080
          %v3351 = vpop.permute.xlu0 %3350
          %3354 = vset.pattern.permute.xlu0 0
          %3355 = vperm.xlu0 %3354, %v3081
          %v3356 = vpop.permute.xlu0 %3355
          %3359 = vset.pattern.permute.xlu0 0
          %3360 = vperm.xlu0 %3359, %v3082
          %v3361 = vpop.permute.xlu0 %3360
          %3364 = vset.pattern.permute.xlu0 0
          %3365 = vperm.xlu0 %3364, %v3083
          %v3366 = vpop.permute.xlu0 %3365
          %3369 = vset.pattern.permute.xlu0 0
          %3370 = vperm.xlu0 %3369, %v3084
          %v3371 = vpop.permute.xlu0 %3370
          %3374 = vset.pattern.permute.xlu0 0
          %3375 = vperm.xlu0 %3374, %v3085
          %v3376 = vpop.permute.xlu0 %3375
          %3379 = vset.pattern.permute.xlu0 0
          %3380 = vperm.xlu0 %3379, %v3086
          %v3381 = vpop.permute.xlu0 %3380
          %3384 = vset.pattern.permute.xlu0 0
          %3385 = vperm.xlu0 %3384, %v3087
          %v3386 = vpop.permute.xlu0 %3385
          %3389 = vset.pattern.permute.xlu0 0
          %3390 = vperm.xlu0 %3389, %v3088
          %v3391 = vpop.permute.xlu0 %3390
          %3394 = vset.pattern.permute.xlu0 0
          %3395 = vperm.xlu0 %3394, %v3089
          %v3396 = vpop.permute.xlu0 %3395
          %3399 = vset.pattern.permute.xlu0 0
          %3400 = vperm.xlu0 %3399, %v3090
          %v3401 = vpop.permute.xlu0 %3400
          %3404 = vset.pattern.permute.xlu0 0
          %3405 = vperm.xlu0 %3404, %v3091
          %v3406 = vpop.permute.xlu0 %3405
          %3409 = vset.pattern.permute.xlu0 0
          %3410 = vperm.xlu0 %3409, %v3092
          %v3411 = vpop.permute.xlu0 %3410
          %3414 = vset.pattern.permute.xlu0 0
          %3415 = vperm.xlu0 %3414, %v3093
          %v3416 = vpop.permute.xlu0 %3415
          %3419 = vset.pattern.permute.xlu0 0
          %3420 = vperm.xlu0 %3419, %v3094
          %v3421 = vpop.permute.xlu0 %3420
          %3424 = vset.pattern.permute.xlu0 0
          %3425 = vperm.xlu0 %3424, %v3095
          %v3426 = vpop.permute.xlu0 %3425
          %3429 = vset.pattern.permute.xlu0 0
          %3430 = vperm.xlu0 %3429, %v3096
          %v3431 = vpop.permute.xlu0 %3430
          %3434 = vset.pattern.permute.xlu0 0
          %3435 = vperm.xlu0 %3434, %v3097
          %v3436 = vpop.permute.xlu0 %3435
          %3439 = vset.pattern.permute.xlu0 0
          %3440 = vperm.xlu0 %3439, %v3098
          %v3441 = vpop.permute.xlu0 %3440
          %3444 = vset.pattern.permute.xlu0 0
          %3445 = vperm.xlu0 %3444, %v3099
          %v3446 = vpop.permute.xlu0 %3445
          %3449 = vset.pattern.permute.xlu0 0
          %3450 = vperm.xlu0 %3449, %v3100
          %v3451 = vpop.permute.xlu0 %3450
          %3454 = vset.pattern.permute.xlu0 0
          %3455 = vperm.xlu0 %3454, %v3101
          %v3456 = vpop.permute.xlu0 %3455
          %3459 = vset.pattern.permute.xlu0 0
          %3460 = vperm.xlu0 %3459, %v3102
          %v3461 = vpop.permute.xlu0 %3460
          %v3463 = vmul.f32 %v2959, %v3106
          %v3464 = vmul.f32 %v2960, %v3111
          %v3465 = vmul.f32 %v2961, %v3116
          %v3466 = vmul.f32 %v2962, %v3121
          %v3467 = vmul.f32 %v2963, %v3126
          %v3468 = vmul.f32 %v2964, %v3131
          %v3469 = vmul.f32 %v2965, %v3136
          %v3470 = vmul.f32 %v2966, %v3141
          %v3471 = vmul.f32 %v2967, %v3146
          %v3472 = vmul.f32 %v2968, %v3151
          %v3473 = vmul.f32 %v2969, %v3156
          %v3474 = vmul.f32 %v2970, %v3161
          %v3475 = vmul.f32 %v2971, %v3166
          %v3476 = vmul.f32 %v2972, %v3171
          %v3477 = vmul.f32 %v2973, %v3176
          %v3478 = vmul.f32 %v2974, %v3181
          %v3479 = vmul.f32 %v2975, %v3186
          %v3480 = vmul.f32 %v2976, %v3191
          %v3481 = vmul.f32 %v2977, %v3196
          %v3482 = vmul.f32 %v2978, %v3201
          %v3483 = vmul.f32 %v2979, %v3206
          %v3484 = vmul.f32 %v2980, %v3211
          %v3485 = vmul.f32 %v2981, %v3216
          %v3486 = vmul.f32 %v2982, %v3221
          %v3487 = vmul.f32 %v2983, %v3226
          %v3488 = vmul.f32 %v2984, %v3231
          %v3489 = vmul.f32 %v2985, %v3236
          %v3490 = vmul.f32 %v2986, %v3241
          %v3491 = vmul.f32 %v2987, %v3246
          %v3492 = vmul.f32 %v2988, %v3251
          %v3493 = vmul.f32 %v2989, %v3256
          %v3494 = vmul.f32 %v2990, %v3261
          %v3495 = vmul.f32 %v2991, %v3266
          %v3496 = vmul.f32 %v2992, %v3271
          %v3497 = vmul.f32 %v2993, %v3276
          %v3498 = vmul.f32 %v2994, %v3281
          %v3499 = vmul.f32 %v2995, %v3286
          %v3500 = vmul.f32 %v2996, %v3291
          %v3501 = vmul.f32 %v2997, %v3296
          %v3502 = vmul.f32 %v2998, %v3301
          %v3503 = vmul.f32 %v2999, %v3306
          %v3504 = vmul.f32 %v3000, %v3311
          %v3505 = vmul.f32 %v3001, %v3316
          %v3506 = vmul.f32 %v3002, %v3321
          %v3507 = vmul.f32 %v3003, %v3326
          %v3508 = vmul.f32 %v3004, %v3331
          %v3509 = vmul.f32 %v3005, %v3336
          %v3510 = vmul.f32 %v3006, %v3341
          %v3511 = vmul.f32 %v3007, %v3346
          %v3512 = vmul.f32 %v3008, %v3351
          %v3513 = vmul.f32 %v3009, %v3356
          %v3514 = vmul.f32 %v3010, %v3361
          %v3515 = vmul.f32 %v3011, %v3366
          %v3516 = vmul.f32 %v3012, %v3371
          %v3517 = vmul.f32 %v3013, %v3376
          %v3518 = vmul.f32 %v3014, %v3381
          %v3519 = vmul.f32 %v3015, %v3386
          %v3520 = vmul.f32 %v3016, %v3391
          %v3521 = vmul.f32 %v3017, %v3396
          %v3522 = vmul.f32 %v3018, %v3401
          %v3523 = vmul.f32 %v3019, %v3406
          %v3524 = vmul.f32 %v3020, %v3411
          %v3525 = vmul.f32 %v3021, %v3416
          %v3526 = vmul.f32 %v3022, %v3421
          %v3527 = vmul.f32 %v3023, %v3426
          %v3528 = vmul.f32 %v3024, %v3431
          %v3529 = vmul.f32 %v3025, %v3436
          %v3530 = vmul.f32 %v3026, %v3441
          %v3531 = vmul.f32 %v3027, %v3446
          %v3532 = vmul.f32 %v3028, %v3451
          %v3533 = vmul.f32 %v3029, %v3456
          %v3534 = vmul.f32 %v3030, %v3461
          %v3535 = vadd.f32 %v3463, %v3464
          %v3536 = vadd.f32 %v3535, %v3465
          %v3537 = vadd.f32 %v3536, %v3466
          %v3538 = vadd.f32 %v3537, %v3467
          %v3539 = vadd.f32 %v3538, %v3468
          %v3540 = vadd.f32 %v3539, %v3469
          %v3541 = vadd.f32 %v3540, %v3470
          %v3542 = vadd.f32 %v3541, %v3471
          %v3543 = vadd.f32 %v3542, %v3472
          %v3544 = vadd.f32 %v3543, %v3473
          %v3545 = vadd.f32 %v3544, %v3474
          %v3546 = vadd.f32 %v3545, %v3475
          %v3547 = vadd.f32 %v3546, %v3476
          %v3548 = vadd.f32 %v3547, %v3477
          %v3549 = vadd.f32 %v3548, %v3478
          %v3550 = vadd.f32 %v3549, %v3479
          %v3551 = vadd.f32 %v3550, %v3480
          %v3552 = vadd.f32 %v3551, %v3481
          %v3553 = vadd.f32 %v3552, %v3482
          %v3554 = vadd.f32 %v3553, %v3483
          %v3555 = vadd.f32 %v3554, %v3484
          %v3556 = vadd.f32 %v3555, %v3485
          %v3557 = vadd.f32 %v3556, %v3486
          %v3558 = vadd.f32 %v3557, %v3487
          %v3559 = vadd.f32 %v3558, %v3488
          %v3560 = vadd.f32 %v3559, %v3489
          %v3561 = vadd.f32 %v3560, %v3490
          %v3562 = vadd.f32 %v3561, %v3491
          %v3563 = vadd.f32 %v3562, %v3492
          %v3564 = vadd.f32 %v3563, %v3493
          %v3565 = vadd.f32 %v3564, %v3494
          %v3566 = vadd.f32 %v3565, %v3495
          %v3567 = vadd.f32 %v3566, %v3496
          %v3568 = vadd.f32 %v3567, %v3497
          %v3569 = vadd.f32 %v3568, %v3498
          %v3570 = vadd.f32 %v3569, %v3499
          %v3571 = vadd.f32 %v3570, %v3500
          %v3572 = vadd.f32 %v3571, %v3501
          %v3573 = vadd.f32 %v3572, %v3502
          %v3574 = vadd.f32 %v3573, %v3503
          %v3575 = vadd.f32 %v3574, %v3504
          %v3576 = vadd.f32 %v3575, %v3505
          %v3577 = vadd.f32 %v3576, %v3506
          %v3578 = vadd.f32 %v3577, %v3507
          %v3579 = vadd.f32 %v3578, %v3508
          %v3580 = vadd.f32 %v3579, %v3509
          %v3581 = vadd.f32 %v3580, %v3510
          %v3582 = vadd.f32 %v3581, %v3511
          %v3583 = vadd.f32 %v3582, %v3512
          %v3584 = vadd.f32 %v3583, %v3513
          %v3585 = vadd.f32 %v3584, %v3514
          %v3586 = vadd.f32 %v3585, %v3515
          %v3587 = vadd.f32 %v3586, %v3516
          %v3588 = vadd.f32 %v3587, %v3517
          %v3589 = vadd.f32 %v3588, %v3518
          %v3590 = vadd.f32 %v3589, %v3519
          %v3591 = vadd.f32 %v3590, %v3520
          %v3592 = vadd.f32 %v3591, %v3521
          %v3593 = vadd.f32 %v3592, %v3522
          %v3594 = vadd.f32 %v3593, %v3523
          %v3595 = vadd.f32 %v3594, %v3524
          %v3596 = vadd.f32 %v3595, %v3525
          %v3597 = vadd.f32 %v3596, %v3526
          %v3598 = vadd.f32 %v3597, %v3527
          %v3599 = vadd.f32 %v3598, %v3528
          %v3600 = vadd.f32 %v3599, %v3529
          %v3601 = vadd.f32 %v3600, %v3530
          %v3602 = vadd.f32 %v3601, %v3531
          %v3603 = vadd.f32 %v3602, %v3532
          %v3604 = vadd.f32 %v3603, %v3533
          %v3605 = vadd.f32 %v3604, %v3534
          %v3606 = vrot.slane %v3605, 4
          %v3607 = vadd.f32 %v3605, %v3606
          %v3608 = vrot.slane %v3607, 2
          %v3609 = vadd.f32 %v3607, %v3608
          %v3610 = vrot.slane %v3609, 1
          %v3611 = vadd.f32 %v3609, %v3610
          %v3612 = vmul.f32 %v3611, 0.001953125
          %v3613 = vsub.f32 %v2959, %v3612
          %v3614 = vsub.f32 %v2960, %v3612
          %v3615 = vsub.f32 %v2961, %v3612
          %v3616 = vsub.f32 %v2962, %v3612
          %v3617 = vsub.f32 %v2963, %v3612
          %v3618 = vsub.f32 %v2964, %v3612
          %v3619 = vsub.f32 %v2965, %v3612
          %v3620 = vsub.f32 %v2966, %v3612
          %v3621 = vsub.f32 %v2967, %v3612
          %v3622 = vsub.f32 %v2968, %v3612
          %v3623 = vsub.f32 %v2969, %v3612
          %v3624 = vsub.f32 %v2970, %v3612
          %v3625 = vsub.f32 %v2971, %v3612
          %v3626 = vsub.f32 %v2972, %v3612
          %v3627 = vsub.f32 %v2973, %v3612
          %v3628 = vsub.f32 %v2974, %v3612
          %v3629 = vsub.f32 %v2975, %v3612
          %v3630 = vsub.f32 %v2976, %v3612
          %v3631 = vsub.f32 %v2977, %v3612
          %v3632 = vsub.f32 %v2978, %v3612
          %v3633 = vsub.f32 %v2979, %v3612
          %v3634 = vsub.f32 %v2980, %v3612
          %v3635 = vsub.f32 %v2981, %v3612
          %v3636 = vsub.f32 %v2982, %v3612
          %v3637 = vsub.f32 %v2983, %v3612
          %v3638 = vsub.f32 %v2984, %v3612
          %v3639 = vsub.f32 %v2985, %v3612
          %v3640 = vsub.f32 %v2986, %v3612
          %v3641 = vsub.f32 %v2987, %v3612
          %v3642 = vsub.f32 %v2988, %v3612
          %v3643 = vsub.f32 %v2989, %v3612
          %v3644 = vsub.f32 %v2990, %v3612
          %v3645 = vsub.f32 %v2991, %v3612
          %v3646 = vsub.f32 %v2992, %v3612
          %v3647 = vsub.f32 %v2993, %v3612
          %v3648 = vsub.f32 %v2994, %v3612
          %v3649 = vsub.f32 %v2995, %v3612
          %v3650 = vsub.f32 %v2996, %v3612
          %v3651 = vsub.f32 %v2997, %v3612
          %v3652 = vsub.f32 %v2998, %v3612
          %v3653 = vsub.f32 %v2999, %v3612
          %v3654 = vsub.f32 %v3000, %v3612
          %v3655 = vsub.f32 %v3001, %v3612
          %v3656 = vsub.f32 %v3002, %v3612
          %v3657 = vsub.f32 %v3003, %v3612
          %v3658 = vsub.f32 %v3004, %v3612
          %v3659 = vsub.f32 %v3005, %v3612
          %v3660 = vsub.f32 %v3006, %v3612
          %v3661 = vsub.f32 %v3007, %v3612
          %v3662 = vsub.f32 %v3008, %v3612
          %v3663 = vsub.f32 %v3009, %v3612
          %v3664 = vsub.f32 %v3010, %v3612
          %v3665 = vsub.f32 %v3011, %v3612
          %v3666 = vsub.f32 %v3012, %v3612
          %v3667 = vsub.f32 %v3013, %v3612
          %v3668 = vsub.f32 %v3014, %v3612
          %v3669 = vsub.f32 %v3015, %v3612
          %v3670 = vsub.f32 %v3016, %v3612
          %v3671 = vsub.f32 %v3017, %v3612
          %v3672 = vsub.f32 %v3018, %v3612
          %v3673 = vsub.f32 %v3019, %v3612
          %v3674 = vsub.f32 %v3020, %v3612
          %v3675 = vsub.f32 %v3021, %v3612
          %v3676 = vsub.f32 %v3022, %v3612
          %v3677 = vsub.f32 %v3023, %v3612
          %v3678 = vsub.f32 %v3024, %v3612
          %v3679 = vsub.f32 %v3025, %v3612
          %v3680 = vsub.f32 %v3026, %v3612
          %v3681 = vsub.f32 %v3027, %v3612
          %v3682 = vsub.f32 %v3028, %v3612
          %v3683 = vsub.f32 %v3029, %v3612
          %v3684 = vsub.f32 %v3030, %v3612
          %v3685 = vmul.f32 %v3613, %v3106
          %v3686 = vmul.f32 %v3614, %v3111
          %v3687 = vmul.f32 %v3615, %v3116
          %v3688 = vmul.f32 %v3616, %v3121
          %v3689 = vmul.f32 %v3617, %v3126
          %v3690 = vmul.f32 %v3618, %v3131
          %v3691 = vmul.f32 %v3619, %v3136
          %v3692 = vmul.f32 %v3620, %v3141
          %v3693 = vmul.f32 %v3621, %v3146
          %v3694 = vmul.f32 %v3622, %v3151
          %v3695 = vmul.f32 %v3623, %v3156
          %v3696 = vmul.f32 %v3624, %v3161
          %v3697 = vmul.f32 %v3625, %v3166
          %v3698 = vmul.f32 %v3626, %v3171
          %v3699 = vmul.f32 %v3627, %v3176
          %v3700 = vmul.f32 %v3628, %v3181
          %v3701 = vmul.f32 %v3629, %v3186
          %v3702 = vmul.f32 %v3630, %v3191
          %v3703 = vmul.f32 %v3631, %v3196
          %v3704 = vmul.f32 %v3632, %v3201
          %v3705 = vmul.f32 %v3633, %v3206
          %v3706 = vmul.f32 %v3634, %v3211
          %v3707 = vmul.f32 %v3635, %v3216
          %v3708 = vmul.f32 %v3636, %v3221
          %v3709 = vmul.f32 %v3637, %v3226
          %v3710 = vmul.f32 %v3638, %v3231
          %v3711 = vmul.f32 %v3639, %v3236
          %v3712 = vmul.f32 %v3640, %v3241
          %v3713 = vmul.f32 %v3641, %v3246
          %v3714 = vmul.f32 %v3642, %v3251
          %v3715 = vmul.f32 %v3643, %v3256
          %v3716 = vmul.f32 %v3644, %v3261
          %v3717 = vmul.f32 %v3645, %v3266
          %v3718 = vmul.f32 %v3646, %v3271
          %v3719 = vmul.f32 %v3647, %v3276
          %v3720 = vmul.f32 %v3648, %v3281
          %v3721 = vmul.f32 %v3649, %v3286
          %v3722 = vmul.f32 %v3650, %v3291
          %v3723 = vmul.f32 %v3651, %v3296
          %v3724 = vmul.f32 %v3652, %v3301
          %v3725 = vmul.f32 %v3653, %v3306
          %v3726 = vmul.f32 %v3654, %v3311
          %v3727 = vmul.f32 %v3655, %v3316
          %v3728 = vmul.f32 %v3656, %v3321
          %v3729 = vmul.f32 %v3657, %v3326
          %v3730 = vmul.f32 %v3658, %v3331
          %v3731 = vmul.f32 %v3659, %v3336
          %v3732 = vmul.f32 %v3660, %v3341
          %v3733 = vmul.f32 %v3661, %v3346
          %v3734 = vmul.f32 %v3662, %v3351
          %v3735 = vmul.f32 %v3663, %v3356
          %v3736 = vmul.f32 %v3664, %v3361
          %v3737 = vmul.f32 %v3665, %v3366
          %v3738 = vmul.f32 %v3666, %v3371
          %v3739 = vmul.f32 %v3667, %v3376
          %v3740 = vmul.f32 %v3668, %v3381
          %v3741 = vmul.f32 %v3669, %v3386
          %v3742 = vmul.f32 %v3670, %v3391
          %v3743 = vmul.f32 %v3671, %v3396
          %v3744 = vmul.f32 %v3672, %v3401
          %v3745 = vmul.f32 %v3673, %v3406
          %v3746 = vmul.f32 %v3674, %v3411
          %v3747 = vmul.f32 %v3675, %v3416
          %v3748 = vmul.f32 %v3676, %v3421
          %v3749 = vmul.f32 %v3677, %v3426
          %v3750 = vmul.f32 %v3678, %v3431
          %v3751 = vmul.f32 %v3679, %v3436
          %v3752 = vmul.f32 %v3680, %v3441
          %v3753 = vmul.f32 %v3681, %v3446
          %v3754 = vmul.f32 %v3682, %v3451
          %v3755 = vmul.f32 %v3683, %v3456
          %v3756 = vmul.f32 %v3684, %v3461
          %v3757 = vmul.f32 %v3685, %v3685
          %v3758 = vmul.f32 %v3686, %v3686
          %v3759 = vmul.f32 %v3687, %v3687
          %v3760 = vmul.f32 %v3688, %v3688
          %v3761 = vmul.f32 %v3689, %v3689
          %v3762 = vmul.f32 %v3690, %v3690
          %v3763 = vmul.f32 %v3691, %v3691
          %v3764 = vmul.f32 %v3692, %v3692
          %v3765 = vmul.f32 %v3693, %v3693
          %v3766 = vmul.f32 %v3694, %v3694
          %v3767 = vmul.f32 %v3695, %v3695
          %v3768 = vmul.f32 %v3696, %v3696
          %v3769 = vmul.f32 %v3697, %v3697
          %v3770 = vmul.f32 %v3698, %v3698
          %v3771 = vmul.f32 %v3699, %v3699
          %v3772 = vmul.f32 %v3700, %v3700
          %v3773 = vmul.f32 %v3701, %v3701
          %v3774 = vmul.f32 %v3702, %v3702
          %v3775 = vmul.f32 %v3703, %v3703
          %v3776 = vmul.f32 %v3704, %v3704
          %v3777 = vmul.f32 %v3705, %v3705
          %v3778 = vmul.f32 %v3706, %v3706
          %v3779 = vmul.f32 %v3707, %v3707
          %v3780 = vmul.f32 %v3708, %v3708
          %v3781 = vmul.f32 %v3709, %v3709
          %v3782 = vmul.f32 %v3710, %v3710
          %v3783 = vmul.f32 %v3711, %v3711
          %v3784 = vmul.f32 %v3712, %v3712
          %v3785 = vmul.f32 %v3713, %v3713
          %v3786 = vmul.f32 %v3714, %v3714
          %v3787 = vmul.f32 %v3715, %v3715
          %v3788 = vmul.f32 %v3716, %v3716
          %v3789 = vmul.f32 %v3717, %v3717
          %v3790 = vmul.f32 %v3718, %v3718
          %v3791 = vmul.f32 %v3719, %v3719
          %v3792 = vmul.f32 %v3720, %v3720
          %v3793 = vmul.f32 %v3721, %v3721
          %v3794 = vmul.f32 %v3722, %v3722
          %v3795 = vmul.f32 %v3723, %v3723
          %v3796 = vmul.f32 %v3724, %v3724
          %v3797 = vmul.f32 %v3725, %v3725
          %v3798 = vmul.f32 %v3726, %v3726
          %v3799 = vmul.f32 %v3727, %v3727
          %v3800 = vmul.f32 %v3728, %v3728
          %v3801 = vmul.f32 %v3729, %v3729
          %v3802 = vmul.f32 %v3730, %v3730
          %v3803 = vmul.f32 %v3731, %v3731
          %v3804 = vmul.f32 %v3732, %v3732
          %v3805 = vmul.f32 %v3733, %v3733
          %v3806 = vmul.f32 %v3734, %v3734
          %v3807 = vmul.f32 %v3735, %v3735
          %v3808 = vmul.f32 %v3736, %v3736
          %v3809 = vmul.f32 %v3737, %v3737
          %v3810 = vmul.f32 %v3738, %v3738
          %v3811 = vmul.f32 %v3739, %v3739
          %v3812 = vmul.f32 %v3740, %v3740
          %v3813 = vmul.f32 %v3741, %v3741
          %v3814 = vmul.f32 %v3742, %v3742
          %v3815 = vmul.f32 %v3743, %v3743
          %v3816 = vmul.f32 %v3744, %v3744
          %v3817 = vmul.f32 %v3745, %v3745
          %v3818 = vmul.f32 %v3746, %v3746
          %v3819 = vmul.f32 %v3747, %v3747
          %v3820 = vmul.f32 %v3748, %v3748
          %v3821 = vmul.f32 %v3749, %v3749
          %v3822 = vmul.f32 %v3750, %v3750
          %v3823 = vmul.f32 %v3751, %v3751
          %v3824 = vmul.f32 %v3752, %v3752
          %v3825 = vmul.f32 %v3753, %v3753
          %v3826 = vmul.f32 %v3754, %v3754
          %v3827 = vmul.f32 %v3755, %v3755
          %v3828 = vmul.f32 %v3756, %v3756
          %v3829 = vadd.f32 %v3757, %v3758
          %v3830 = vadd.f32 %v3829, %v3759
          %v3831 = vadd.f32 %v3830, %v3760
          %v3832 = vadd.f32 %v3831, %v3761
          %v3833 = vadd.f32 %v3832, %v3762
          %v3834 = vadd.f32 %v3833, %v3763
          %v3835 = vadd.f32 %v3834, %v3764
          %v3836 = vadd.f32 %v3835, %v3765
          %v3837 = vadd.f32 %v3836, %v3766
          %v3838 = vadd.f32 %v3837, %v3767
          %v3839 = vadd.f32 %v3838, %v3768
          %v3840 = vadd.f32 %v3839, %v3769
          %v3841 = vadd.f32 %v3840, %v3770
          %v3842 = vadd.f32 %v3841, %v3771
          %v3843 = vadd.f32 %v3842, %v3772
          %v3844 = vadd.f32 %v3843, %v3773
          %v3845 = vadd.f32 %v3844, %v3774
          %v3846 = vadd.f32 %v3845, %v3775
          %v3847 = vadd.f32 %v3846, %v3776
          %v3848 = vadd.f32 %v3847, %v3777
          %v3849 = vadd.f32 %v3848, %v3778
          %v3850 = vadd.f32 %v3849, %v3779
          %v3851 = vadd.f32 %v3850, %v3780
          %v3852 = vadd.f32 %v3851, %v3781
          %v3853 = vadd.f32 %v3852, %v3782
          %v3854 = vadd.f32 %v3853, %v3783
          %v3855 = vadd.f32 %v3854, %v3784
          %v3856 = vadd.f32 %v3855, %v3785
          %v3857 = vadd.f32 %v3856, %v3786
          %v3858 = vadd.f32 %v3857, %v3787
          %v3859 = vadd.f32 %v3858, %v3788
          %v3860 = vadd.f32 %v3859, %v3789
          %v3861 = vadd.f32 %v3860, %v3790
          %v3862 = vadd.f32 %v3861, %v3791
          %v3863 = vadd.f32 %v3862, %v3792
          %v3864 = vadd.f32 %v3863, %v3793
          %v3865 = vadd.f32 %v3864, %v3794
          %v3866 = vadd.f32 %v3865, %v3795
          %v3867 = vadd.f32 %v3866, %v3796
          %v3868 = vadd.f32 %v3867, %v3797
          %v3869 = vadd.f32 %v3868, %v3798
          %v3870 = vadd.f32 %v3869, %v3799
          %v3871 = vadd.f32 %v3870, %v3800
          %v3872 = vadd.f32 %v3871, %v3801
          %v3873 = vadd.f32 %v3872, %v3802
          %v3874 = vadd.f32 %v3873, %v3803
          %v3875 = vadd.f32 %v3874, %v3804
          %v3876 = vadd.f32 %v3875, %v3805
          %v3877 = vadd.f32 %v3876, %v3806
          %v3878 = vadd.f32 %v3877, %v3807
          %v3879 = vadd.f32 %v3878, %v3808
          %v3880 = vadd.f32 %v3879, %v3809
          %v3881 = vadd.f32 %v3880, %v3810
          %v3882 = vadd.f32 %v3881, %v3811
          %v3883 = vadd.f32 %v3882, %v3812
          %v3884 = vadd.f32 %v3883, %v3813
          %v3885 = vadd.f32 %v3884, %v3814
          %v3886 = vadd.f32 %v3885, %v3815
          %v3887 = vadd.f32 %v3886, %v3816
          %v3888 = vadd.f32 %v3887, %v3817
          %v3889 = vadd.f32 %v3888, %v3818
          %v3890 = vadd.f32 %v3889, %v3819
          %v3891 = vadd.f32 %v3890, %v3820
          %v3892 = vadd.f32 %v3891, %v3821
          %v3893 = vadd.f32 %v3892, %v3822
          %v3894 = vadd.f32 %v3893, %v3823
          %v3895 = vadd.f32 %v3894, %v3824
          %v3896 = vadd.f32 %v3895, %v3825
          %v3897 = vadd.f32 %v3896, %v3826
          %v3898 = vadd.f32 %v3897, %v3827
          %v3899 = vadd.f32 %v3898, %v3828
          %v3900 = vrot.slane %v3899, 4
          %v3901 = vadd.f32 %v3899, %v3900
          %v3902 = vrot.slane %v3901, 2
          %v3903 = vadd.f32 %v3901, %v3902
          %v3904 = vrot.slane %v3903, 1
          %v3905 = vadd.f32 %v3903, %v3904
          %v3906 = vmul.f32 %v3905, 0.001953125
          %v3907 = vadd.f32 %v3906, 1e-05
          %v3908 = vrsqrt.pop %v3907
          %v3909 = vmul.f32 %v3908, %v3907
          %v3910 = vmul.f32 %v3909, %v3908
          %v3911 = vmul.f32 0.5, %v3910
          %v3912 = vsub.f32 1.5, %v3911
          %v3913 = vmul.f32 %v3908, %v3912
          %vm3914 = vweird.f32 %v3907
          %vm3915 = vweird.f32 %v3908
          %vm3916 = vmor %vm3914, %vm3915
          %v3917 = vsel %vm3916, %v3908, %v3913
          %v3918 = vld [vmem:[%s2] sm:$0x1]
          %v3919 = vmul.f32 %v3918, %v3917
          %v3920 = vld [vmem:[%s3] sm:$0x1]
          %v3921 = vmul.f32 %v3612, %v3919
          %v3922 = vsub.f32 %v3920, %v3921
          %v3924 = vperm.slane %v3919, 0
          %v3926 = vmul.f32 %v2959, %v3924
          %v3927 = vmul.f32 %v2960, %v3924
          %v3928 = vmul.f32 %v2961, %v3924
          %v3929 = vmul.f32 %v2962, %v3924
          %v3930 = vmul.f32 %v2963, %v3924
          %v3931 = vmul.f32 %v2964, %v3924
          %v3932 = vmul.f32 %v2965, %v3924
          %v3933 = vmul.f32 %v2966, %v3924
          %v3934 = vmul.f32 %v2967, %v3924
          %v3935 = vmul.f32 %v2968, %v3924
          %v3936 = vmul.f32 %v2969, %v3924
          %v3937 = vmul.f32 %v2970, %v3924
          %v3938 = vmul.f32 %v2971, %v3924
          %v3939 = vmul.f32 %v2972, %v3924
          %v3940 = vmul.f32 %v2973, %v3924
          %v3941 = vmul.f32 %v2974, %v3924
          %v3942 = vmul.f32 %v2975, %v3924
          %v3943 = vmul.f32 %v2976, %v3924
          %v3944 = vmul.f32 %v2977, %v3924
          %v3945 = vmul.f32 %v2978, %v3924
          %v3946 = vmul.f32 %v2979, %v3924
          %v3947 = vmul.f32 %v2980, %v3924
          %v3948 = vmul.f32 %v2981, %v3924
          %v3949 = vmul.f32 %v2982, %v3924
          %v3950 = vmul.f32 %v2983, %v3924
          %v3951 = vmul.f32 %v2984, %v3924
          %v3952 = vmul.f32 %v2985, %v3924
          %v3953 = vmul.f32 %v2986, %v3924
          %v3954 = vmul.f32 %v2987, %v3924
          %v3955 = vmul.f32 %v2988, %v3924
          %v3956 = vmul.f32 %v2989, %v3924
          %v3957 = vmul.f32 %v2990, %v3924
          %v3958 = vmul.f32 %v2991, %v3924
          %v3959 = vmul.f32 %v2992, %v3924
          %v3960 = vmul.f32 %v2993, %v3924
          %v3961 = vmul.f32 %v2994, %v3924
          %v3962 = vmul.f32 %v2995, %v3924
          %v3963 = vmul.f32 %v2996, %v3924
          %v3964 = vmul.f32 %v2997, %v3924
          %v3965 = vmul.f32 %v2998, %v3924
          %v3966 = vmul.f32 %v2999, %v3924
          %v3967 = vmul.f32 %v3000, %v3924
          %v3968 = vmul.f32 %v3001, %v3924
          %v3969 = vmul.f32 %v3002, %v3924
          %v3970 = vmul.f32 %v3003, %v3924
          %v3971 = vmul.f32 %v3004, %v3924
          %v3972 = vmul.f32 %v3005, %v3924
          %v3973 = vmul.f32 %v3006, %v3924
          %v3974 = vmul.f32 %v3007, %v3924
          %v3975 = vmul.f32 %v3008, %v3924
          %v3976 = vmul.f32 %v3009, %v3924
          %v3977 = vmul.f32 %v3010, %v3924
          %v3978 = vmul.f32 %v3011, %v3924
          %v3979 = vmul.f32 %v3012, %v3924
          %v3980 = vmul.f32 %v3013, %v3924
          %v3981 = vmul.f32 %v3014, %v3924
          %v3982 = vmul.f32 %v3015, %v3924
          %v3983 = vmul.f32 %v3016, %v3924
          %v3984 = vmul.f32 %v3017, %v3924
          %v3985 = vmul.f32 %v3018, %v3924
          %v3986 = vmul.f32 %v3019, %v3924
          %v3987 = vmul.f32 %v3020, %v3924
          %v3988 = vmul.f32 %v3021, %v3924
          %v3989 = vmul.f32 %v3022, %v3924
          %v3990 = vmul.f32 %v3023, %v3924
          %v3991 = vmul.f32 %v3024, %v3924
          %v3992 = vmul.f32 %v3025, %v3924
          %v3993 = vmul.f32 %v3026, %v3924
          %v3994 = vmul.f32 %v3027, %v3924
          %v3995 = vmul.f32 %v3028, %v3924
          %v3996 = vmul.f32 %v3029, %v3924
          %v3997 = vmul.f32 %v3030, %v3924
          %v3999 = vperm.slane %v3922, 0
          %v4001 = vadd.f32 %v3926, %v3999
          %v4002 = vadd.f32 %v3927, %v3999
          %v4003 = vadd.f32 %v3928, %v3999
          %v4004 = vadd.f32 %v3929, %v3999
          %v4005 = vadd.f32 %v3930, %v3999
          %v4006 = vadd.f32 %v3931, %v3999
          %v4007 = vadd.f32 %v3932, %v3999
          %v4008 = vadd.f32 %v3933, %v3999
          %v4009 = vadd.f32 %v3934, %v3999
          %v4010 = vadd.f32 %v3935, %v3999
          %v4011 = vadd.f32 %v3936, %v3999
          %v4012 = vadd.f32 %v3937, %v3999
          %v4013 = vadd.f32 %v3938, %v3999
          %v4014 = vadd.f32 %v3939, %v3999
          %v4015 = vadd.f32 %v3940, %v3999
          %v4016 = vadd.f32 %v3941, %v3999
          %v4017 = vadd.f32 %v3942, %v3999
          %v4018 = vadd.f32 %v3943, %v3999
          %v4019 = vadd.f32 %v3944, %v3999
          %v4020 = vadd.f32 %v3945, %v3999
          %v4021 = vadd.f32 %v3946, %v3999
          %v4022 = vadd.f32 %v3947, %v3999
          %v4023 = vadd.f32 %v3948, %v3999
          %v4024 = vadd.f32 %v3949, %v3999
          %v4025 = vadd.f32 %v3950, %v3999
          %v4026 = vadd.f32 %v3951, %v3999
          %v4027 = vadd.f32 %v3952, %v3999
          %v4028 = vadd.f32 %v3953, %v3999
          %v4029 = vadd.f32 %v3954, %v3999
          %v4030 = vadd.f32 %v3955, %v3999
          %v4031 = vadd.f32 %v3956, %v3999
          %v4032 = vadd.f32 %v3957, %v3999
          %v4033 = vadd.f32 %v3958, %v3999
          %v4034 = vadd.f32 %v3959, %v3999
          %v4035 = vadd.f32 %v3960, %v3999
          %v4036 = vadd.f32 %v3961, %v3999
          %v4037 = vadd.f32 %v3962, %v3999
          %v4038 = vadd.f32 %v3963, %v3999
          %v4039 = vadd.f32 %v3964, %v3999
          %v4040 = vadd.f32 %v3965, %v3999
          %v4041 = vadd.f32 %v3966, %v3999
          %v4042 = vadd.f32 %v3967, %v3999
          %v4043 = vadd.f32 %v3968, %v3999
          %v4044 = vadd.f32 %v3969, %v3999
          %v4045 = vadd.f32 %v3970, %v3999
          %v4046 = vadd.f32 %v3971, %v3999
          %v4047 = vadd.f32 %v3972, %v3999
          %v4048 = vadd.f32 %v3973, %v3999
          %v4049 = vadd.f32 %v3974, %v3999
          %v4050 = vadd.f32 %v3975, %v3999
          %v4051 = vadd.f32 %v3976, %v3999
          %v4052 = vadd.f32 %v3977, %v3999
          %v4053 = vadd.f32 %v3978, %v3999
          %v4054 = vadd.f32 %v3979, %v3999
          %v4055 = vadd.f32 %v3980, %v3999
          %v4056 = vadd.f32 %v3981, %v3999
          %v4057 = vadd.f32 %v3982, %v3999
          %v4058 = vadd.f32 %v3983, %v3999
          %v4059 = vadd.f32 %v3984, %v3999
          %v4060 = vadd.f32 %v3985, %v3999
          %v4061 = vadd.f32 %v3986, %v3999
          %v4062 = vadd.f32 %v3987, %v3999
          %v4063 = vadd.f32 %v3988, %v3999
          %v4064 = vadd.f32 %v3989, %v3999
          %v4065 = vadd.f32 %v3990, %v3999
          %v4066 = vadd.f32 %v3991, %v3999
          %v4067 = vadd.f32 %v3992, %v3999
          %v4068 = vadd.f32 %v3993, %v3999
          %v4069 = vadd.f32 %v3994, %v3999
          %v4070 = vadd.f32 %v3995, %v3999
          %v4071 = vadd.f32 %v3996, %v3999
          %v4072 = vadd.f32 %v3997, %v3999
          %v4073 = vmax.f32 %v4001, 0.0
          %v4074 = vmax.f32 %v4002, 0.0
          %v4075 = vmax.f32 %v4003, 0.0
          %v4076 = vmax.f32 %v4004, 0.0
          %v4077 = vmax.f32 %v4005, 0.0
          %v4078 = vmax.f32 %v4006, 0.0
          %v4079 = vmax.f32 %v4007, 0.0
          %v4080 = vmax.f32 %v4008, 0.0
          %v4081 = vmax.f32 %v4009, 0.0
          %v4082 = vmax.f32 %v4010, 0.0
          %v4083 = vmax.f32 %v4011, 0.0
          %v4084 = vmax.f32 %v4012, 0.0
          %v4085 = vmax.f32 %v4013, 0.0
          %v4086 = vmax.f32 %v4014, 0.0
          %v4087 = vmax.f32 %v4015, 0.0
          %v4088 = vmax.f32 %v4016, 0.0
          %v4089 = vmax.f32 %v4017, 0.0
          %v4090 = vmax.f32 %v4018, 0.0
          %v4091 = vmax.f32 %v4019, 0.0
          %v4092 = vmax.f32 %v4020, 0.0
          %v4093 = vmax.f32 %v4021, 0.0
          %v4094 = vmax.f32 %v4022, 0.0
          %v4095 = vmax.f32 %v4023, 0.0
          %v4096 = vmax.f32 %v4024, 0.0
          %v4097 = vmax.f32 %v4025, 0.0
          %v4098 = vmax.f32 %v4026, 0.0
          %v4099 = vmax.f32 %v4027, 0.0
          %v4100 = vmax.f32 %v4028, 0.0
          %v4101 = vmax.f32 %v4029, 0.0
          %v4102 = vmax.f32 %v4030, 0.0
          %v4103 = vmax.f32 %v4031, 0.0
          %v4104 = vmax.f32 %v4032, 0.0
          %v4105 = vmax.f32 %v4033, 0.0
          %v4106 = vmax.f32 %v4034, 0.0
          %v4107 = vmax.f32 %v4035, 0.0
          %v4108 = vmax.f32 %v4036, 0.0
          %v4109 = vmax.f32 %v4037, 0.0
          %v4110 = vmax.f32 %v4038, 0.0
          %v4111 = vmax.f32 %v4039, 0.0
          %v4112 = vmax.f32 %v4040, 0.0
          %v4113 = vmax.f32 %v4041, 0.0
          %v4114 = vmax.f32 %v4042, 0.0
          %v4115 = vmax.f32 %v4043, 0.0
          %v4116 = vmax.f32 %v4044, 0.0
          %v4117 = vmax.f32 %v4045, 0.0
          %v4118 = vmax.f32 %v4046, 0.0
          %v4119 = vmax.f32 %v4047, 0.0
          %v4120 = vmax.f32 %v4048, 0.0
          %v4121 = vmax.f32 %v4049, 0.0
          %v4122 = vmax.f32 %v4050, 0.0
          %v4123 = vmax.f32 %v4051, 0.0
          %v4124 = vmax.f32 %v4052, 0.0
          %v4125 = vmax.f32 %v4053, 0.0
          %v4126 = vmax.f32 %v4054, 0.0
          %v4127 = vmax.f32 %v4055, 0.0
          %v4128 = vmax.f32 %v4056, 0.0
          %v4129 = vmax.f32 %v4057, 0.0
          %v4130 = vmax.f32 %v4058, 0.0
          %v4131 = vmax.f32 %v4059, 0.0
          %v4132 = vmax.f32 %v4060, 0.0
          %v4133 = vmax.f32 %v4061, 0.0
          %v4134 = vmax.f32 %v4062, 0.0
          %v4135 = vmax.f32 %v4063, 0.0
          %v4136 = vmax.f32 %v4064, 0.0
          %v4137 = vmax.f32 %v4065, 0.0
          %v4138 = vmax.f32 %v4066, 0.0
          %v4139 = vmax.f32 %v4067, 0.0
          %v4140 = vmax.f32 %v4068, 0.0
          %v4141 = vmax.f32 %v4069, 0.0
          %v4142 = vmax.f32 %v4070, 0.0
          %v4143 = vmax.f32 %v4071, 0.0
          %v4144 = vmax.f32 %v4072, 0.0
          %4145 = vst [vmem:[#allocation2] sm:$0xff] %v4073
          %4146 = vst [vmem:[#allocation2 + $0x8] sm:$0xff] %v4074
          %4147 = vst [vmem:[#allocation2 + $0x10] sm:$0xff] %v4075
          %4148 = vst [vmem:[#allocation2 + $0x18] sm:$0xff] %v4076
          %4149 = vst [vmem:[#allocation2 + $0x20] sm:$0xff] %v4077
          %4150 = vst [vmem:[#allocation2 + $0x28] sm:$0xff] %v4078
          %4151 = vst [vmem:[#allocation2 + $0x30] sm:$0xff] %v4079
          %4152 = vst [vmem:[#allocation2 + $0x38] sm:$0xff] %v4080
          %4153 = vst [vmem:[#allocation2 + $0x40] sm:$0xff] %v4081
          %4154 = vst [vmem:[#allocation2 + $0x48] sm:$0xff] %v4082
          %4155 = vst [vmem:[#allocation2 + $0x50] sm:$0xff] %v4083
          %4156 = vst [vmem:[#allocation2 + $0x58] sm:$0xff] %v4084
          %4157 = vst [vmem:[#allocation2 + $0x60] sm:$0xff] %v4085
          %4158 = vst [vmem:[#allocation2 + $0x68] sm:$0xff] %v4086
          %4159 = vst [vmem:[#allocation2 + $0x70] sm:$0xff] %v4087
          %4160 = vst [vmem:[#allocation2 + $0x78] sm:$0xff] %v4088
          %4161 = vst [vmem:[#allocation2 + $0x80] sm:$0xff] %v4089
          %4162 = vst [vmem:[#allocation2 + $0x88] sm:$0xff] %v4090
          %4163 = vst [vmem:[#allocation2 + $0x90] sm:$0xff] %v4091
          %4164 = vst [vmem:[#allocation2 + $0x98] sm:$0xff] %v4092
          %4165 = vst [vmem:[#allocation2 + $0xa0] sm:$0xff] %v4093
          %4166 = vst [vmem:[#allocation2 + $0xa8] sm:$0xff] %v4094
          %4167 = vst [vmem:[#allocation2 + $0xb0] sm:$0xff] %v4095
          %4168 = vst [vmem:[#allocation2 + $0xb8] sm:$0xff] %v4096
          %4169 = vst [vmem:[#allocation2 + $0xc0] sm:$0xff] %v4097
          %4170 = vst [vmem:[#allocation2 + $0xc8] sm:$0xff] %v4098
          %4171 = vst [vmem:[#allocation2 + $0xd0] sm:$0xff] %v4099
          %4172 = vst [vmem:[#allocation2 + $0xd8] sm:$0xff] %v4100
          %4173 = vst [vmem:[#allocation2 + $0xe0] sm:$0xff] %v4101
          %4174 = vst [vmem:[#allocation2 + $0xe8] sm:$0xff] %v4102
          %4175 = vst [vmem:[#allocation2 + $0xf0] sm:$0xff] %v4103
          %4176 = vst [vmem:[#allocation2 + $0xf8] sm:$0xff] %v4104
          %4177 = vst [vmem:[#allocation2 + $0x100] sm:$0xff] %v4105
          %4178 = vst [vmem:[#allocation2 + $0x108] sm:$0xff] %v4106
          %4179 = vst [vmem:[#allocation2 + $0x110] sm:$0xff] %v4107
          %4180 = vst [vmem:[#allocation2 + $0x118] sm:$0xff] %v4108
          %4181 = vst [vmem:[#allocation2 + $0x120] sm:$0xff] %v4109
          %4182 = vst [vmem:[#allocation2 + $0x128] sm:$0xff] %v4110
          %4183 = vst [vmem:[#allocation2 + $0x130] sm:$0xff] %v4111
          %4184 = vst [vmem:[#allocation2 + $0x138] sm:$0xff] %v4112
          %4185 = vst [vmem:[#allocation2 + $0x140] sm:$0xff] %v4113
          %4186 = vst [vmem:[#allocation2 + $0x148] sm:$0xff] %v4114
          %4187 = vst [vmem:[#allocation2 + $0x150] sm:$0xff] %v4115
          %4188 = vst [vmem:[#allocation2 + $0x158] sm:$0xff] %v4116
          %4189 = vst [vmem:[#allocation2 + $0x160] sm:$0xff] %v4117
          %4190 = vst [vmem:[#allocation2 + $0x168] sm:$0xff] %v4118
          %4191 = vst [vmem:[#allocation2 + $0x170] sm:$0xff] %v4119
          %4192 = vst [vmem:[#allocation2 + $0x178] sm:$0xff] %v4120
          %4193 = vst [vmem:[#allocation2 + $0x180] sm:$0xff] %v4121
          %4194 = vst [vmem:[#allocation2 + $0x188] sm:$0xff] %v4122
          %4195 = vst [vmem:[#allocation2 + $0x190] sm:$0xff] %v4123
          %4196 = vst [vmem:[#allocation2 + $0x198] sm:$0xff] %v4124
          %4197 = vst [vmem:[#allocation2 + $0x1a0] sm:$0xff] %v4125
          %4198 = vst [vmem:[#allocation2 + $0x1a8] sm:$0xff] %v4126
          %4199 = vst [vmem:[#allocation2 + $0x1b0] sm:$0xff] %v4127
          %4200 = vst [vmem:[#allocation2 + $0x1b8] sm:$0xff] %v4128
          %4201 = vst [vmem:[#allocation2 + $0x1c0] sm:$0xff] %v4129
          %4202 = vst [vmem:[#allocation2 + $0x1c8] sm:$0xff] %v4130
          %4203 = vst [vmem:[#allocation2 + $0x1d0] sm:$0xff] %v4131
          %4204 = vst [vmem:[#allocation2 + $0x1d8] sm:$0xff] %v4132
          %4205 = vst [vmem:[#allocation2 + $0x1e0] sm:$0xff] %v4133
          %4206 = vst [vmem:[#allocation2 + $0x1e8] sm:$0xff] %v4134
          %4207 = vst [vmem:[#allocation2 + $0x1f0] sm:$0xff] %v4135
          %4208 = vst [vmem:[#allocation2 + $0x1f8] sm:$0xff] %v4136
          %4209 = vst [vmem:[#allocation2 + $0x200] sm:$0xff] %v4137
          %4210 = vst [vmem:[#allocation2 + $0x208] sm:$0xff] %v4138
          %4211 = vst [vmem:[#allocation2 + $0x210] sm:$0xff] %v4139
          %4212 = vst [vmem:[#allocation2 + $0x218] sm:$0xff] %v4140
          %4213 = vst [vmem:[#allocation2 + $0x220] sm:$0xff] %v4141
          %4214 = vst [vmem:[#allocation2 + $0x228] sm:$0xff] %v4142
          %4215 = vst [vmem:[#allocation2 + $0x230] sm:$0xff] %v4143
          %4216 = vst [vmem:[#allocation2 + $0x238] sm:$0xff] %v4144
        $region44: #{tpu_custom_call.1} parent=39 // pred_fallthru
          _
        // Predicated region
        $region45: #{tpu_custom_call.1} parent=39 // pred_check
          %p4217 = pneg %p147
        $region46: #{tpu_custom_call.1} parent=39 // pred_check_branch
          %4219 = sbr.rel (%p4217) target = $region48
        $region47: #{tpu_custom_call.1} parent=39 // pred_region
          %4221 = vsyncadd [#allocation3], 0
          %s4222 = sshll.u32 [#allocation2], 4
          %s4223 = int_to_ptr.vmem [resolvable:$true] %s4222
          %s4224 = sshll.u32 %s5, 4
          %s4225 = int_to_ptr.hbm [resolvable:$true] %s4224
          %4230 = dma.vmem_to_hbm [thread:$0]  %s4223, 9216, %s4225, [#allocation3], 128, 128, 8
        $region48: #{tpu_custom_call.1} parent=39 // pred_fallthru
          _
        // Predicated region
        $region49: #{tpu_custom_call.1} parent=39 // pred_check
          %p4231 = pneg %p147
        $region50: #{tpu_custom_call.1} parent=39 // pred_check_branch
          %4233 = sbr.rel (%p4231) target = $region52
        $region51: #{tpu_custom_call.1} parent=39 // pred_region
          %4235 = dma.done [#allocation3], 9216
        $region52: #{tpu_custom_call.1} parent=39 // pred_fallthru
          _
      $region40: #{tpu_custom_call.1} parent=5 // pred_fallthru
        _
      %p4236 = scmp.le.s32.totalorder 2, %s12
      // Predicated region
      $region53: #{tpu_custom_call.1} parent=5 // pred_check
        %p4237 = pneg %p4236
      $region54: #{tpu_custom_call.1} parent=5 // pred_check_branch
        %4239 = sbr.rel (%p4237) target = $region56
      $region55: #{tpu_custom_call.1} parent=5 // pred_region
        %s4240 = ssub.s32 %s12, 2
      $region56: #{tpu_custom_call.1} parent=5 // pred_fallthru
        _
    $region6: #{tpu_custom_call.1} parent=1 // loop_footer
      %s16 = sadd.s32 1, %s12
    $region7: #{tpu_custom_call.1} parent=1 // loop_footer_branch
      %11 = sbr.rel target = $region3
    $region8: #{tpu_custom_call.1} parent=1 // loop_exit
      _
    %4241 = vsyncpa [#allocation3], 1
    %s4242 = scalar_lea.sflag [#allocation3], 1
    %4243 = vsyncpa %s4242, 1

</llo_original>
